<compile_context>
chip_gen: v5e
topology: v5e:2x2
jax: 0.10.0
libtpu: 0.0.40
codegen_flags: <defaults>
</compile_context>

<pallas_src>
import functools
import math

import jax
import jax.numpy as jnp
import numpy as np
from jax.experimental import pallas as pl
from jax.experimental.pallas import tpu as pltpu


def _round_up(a, b):
  return (a + b - 1) // b * b


def _residual_block_kernel(
    # per-(batch, time-tile) activations (f32)
    x_ref, cond_ref, hprev_ref, hnext_ref, mask_ref,
    # packed per-batch rows (f32): [d, gain_g, gain_f, ebias_g, ebias_f, bres, bskip, 0]
    rows_ref,
    # grid-constant matmul weights (bf16)
    wcp_ref, wc_ref, wop_ref,
    # outputs
    res_ref, skip_ref,
    # scratch
    yext_ref,
    *, dilation: int, needs_mask: bool,
):
  tT, C = x_ref.shape[1], x_ref.shape[2]
  dil = dilation
  off = _round_up(dil, 8)          # main y window starts on an 8-row boundary
  f32 = jnp.float32
  bf16 = jnp.bfloat16

  rows = rows_ref[0]               # [8, C] f32
  d = rows[0:1]
  gain_g, gain_f = rows[1:2], rows[2:3]
  ebias_g, ebias_f = rows[3:4], rows[4:5]
  bres, bskip = rows[5:6], rows[6:7]

  # y = x + diffusion_projection (f32).  Rows past the true sequence end are
  # zeroed so the +dilation tap matches the module's zero conv padding.
  y = x_ref[0] + d
  if needs_mask:
    y = y * mask_ref[0]

  # Extended-y scratch (bf16): written once, all three conv taps read back
  # through static pl.ds windows -- no concatenate copies, no long live ranges.
  yext_ref[pl.ds(off - dil, dil)] = hprev_ref[0, 0].astype(bf16)
  yext_ref[pl.ds(off, tT)] = y.astype(bf16)
  yext_ref[pl.ds(off + tT, dil)] = hnext_ref[0, 0].astype(bf16)

  y_prev = yext_ref[pl.ds(off - dil, tT)]   # y[t - dil]
  y_mid = yext_ref[pl.ds(off, tT)]          # y[t]
  y_next = yext_ref[pl.ds(off + dil, tT)]   # y[t + dil]

  # Dilated conv (3 taps) + conditioner projection, full 2C wide so the MXU
  # runs at N=2C (fills the 256-wide array on v6e/v7x).  Biases are folded
  # into the per-batch FiLM rows, f32 accumulation throughout.
  acc = jnp.dot(y_prev, wc_ref[0], preferred_element_type=f32)
  acc += jnp.dot(y_mid, wc_ref[1], preferred_element_type=f32)
  acc += jnp.dot(y_next, wc_ref[2], preferred_element_type=f32)
  acc += jnp.dot(cond_ref[0].astype(bf16), wcp_ref[...],
                 preferred_element_type=f32)

  # FiLM + gated activation in f32; slice at the lane-aligned C boundary.
  gate = acc[:, :C] * gain_g + ebias_g
  filt = acc[:, C:] * gain_f + ebias_f
  z = (jax.nn.sigmoid(gate) * jnp.tanh(filt)).astype(bf16)

  # Output projection (N=2C), halves stored lane-dense to each output.
  out = jnp.dot(z, wop_ref[...], preferred_element_type=f32)   # [tT, 2C] f32
  inv_sqrt2 = 1.0 / math.sqrt(2.0)
  res_ref[0] = ((x_ref[0] + out[:, :C] + bres) * inv_sqrt2).astype(res_ref.dtype)
  skip_ref[0] = (out[:, C:] + bskip).astype(skip_ref.dtype)


def residual_block_forward(x, conditioner, diffusion_step, spk, params, dilation,
                           *, tile_t=1024, out_dtype=jnp.bfloat16):
  """Channels-last forward.

  x:            [B, T, C]   conditioner: [B, T, E]
  diffusion_step, spk: [B, C]
  Returns (residual_out, skip), each [B, T, C] in `out_dtype`.
  """
  B, T, C = x.shape
  E = conditioner.shape[-1]
  dil = int(dilation)
  assert dil >= 1
  p = params
  f32 = jnp.float32
  bf16 = jnp.bfloat16

  # ---- time tiling: pad T to a tile multiple (no `tT = T` fallback) ----
  tT = _round_up(max(8, min(tile_t, _round_up(T, 8))), 8)
  assert tT >= dil, "tile_t must be >= dilation"
  Tp = _round_up(T, tT)
  nT = Tp // tT
  pad = Tp - T
  needs_mask = pad > 0

  x32 = x.astype(f32)
  cond32 = conditioner.astype(f32)
  if pad:
    x32 = jnp.pad(x32, ((0, 0), (0, pad), (0, 0)))
    cond32 = jnp.pad(cond32, ((0, 0), (0, pad), (0, 0)))

  # ---- tiny per-batch projections, hoisted out of the kernel (f32) ----
  diff32 = diffusion_step.astype(f32)
  spk32 = spk.astype(f32)
  d = diff32 @ p["wdp"] + p["bdp"]                  # [B, C]
  gain = spk32 @ p["wg"] + p["bg"]                  # [B, 2C]
  bias = spk32 @ p["wb"] + p["bb"]                  # [B, 2C]
  # fold the constant conv / conditioner biases into the FiLM bias rows
  ebias = gain * (p["bc"] + p["bcp"]) + bias        # [B, 2C]
  bop = jnp.broadcast_to(p["bop"], (B, 2 * C))
  rows = jnp.stack(
      [d, gain[:, :C], gain[:, C:], ebias[:, :C], ebias[:, C:],
       bop[:, :C], bop[:, C:], jnp.zeros((B, C), f32)], axis=1)   # [B, 8, C]

  # ---- +/- dilation halo rows per tile, precomputed in y-space (zero past
  #      the true sequence ends => no in-kernel boundary branching) ----
  x_t = x32.reshape(B, nT, tT, C)
  d4 = d[:, None, None, :]
  zhalo = jnp.zeros((B, 1, dil, C), f32)
  halo_prev = jnp.concatenate([zhalo, x_t[:, :-1, tT - dil:, :] + d4], axis=1)
  nxt = x_t[:, 1:, :dil, :] + d4
  if needs_mask and nT > 1:
    gidx = ((jnp.arange(1, nT, dtype=jnp.int32) * tT)[None, :, None, None]
            + jnp.arange(dil, dtype=jnp.int32)[None, None, :, None])
    nxt = jnp.where(gidx < T, nxt, 0.0)
  halo_next = jnp.concatenate([nxt, zhalo], axis=1)

  # per-row validity mask (only read in-kernel when T % tT != 0)
  mask = (jnp.arange(Tp, dtype=jnp.int32) < T).astype(f32).reshape(nT, tT, 1)

  # ---- matmul weights in bf16 (accumulation stays f32 in-kernel) ----
  wcp = p["wcp"].astype(bf16)        # [E, 2C]
  wc = p["wc"].astype(bf16)          # [3, C, 2C]
  wop = p["wop"].astype(bf16)        # [C, 2C]

  def const_spec(shape):
    nd = len(shape)
    return pl.BlockSpec(shape, lambda b, t, _nd=nd: (0,) * _nd)

  kernel = functools.partial(_residual_block_kernel, dilation=dil,
                             needs_mask=needs_mask)

  off = _round_up(dil, 8)
  yext_rows = _round_up(off + tT + dil, 16)

  out_bytes = jnp.dtype(out_dtype).itemsize
  cost = pl.CostEstimate(
      flops=int(2 * B * Tp * 2 * C * (4 * C + E)),
      transcendentals=int(2 * B * Tp * C),
      bytes_accessed=int(B * Tp * (C + E) * 4 + 2 * B * Tp * C * out_bytes
                         + (E + 4 * C) * 2 * C * 2),
  )

  res, skip = pl.pallas_call(
      kernel,
      grid=(B, nT),
      in_specs=[
          pl.BlockSpec((1, tT, C), lambda b, t: (b, t, 0)),          # x (f32)
          pl.BlockSpec((1, tT, E), lambda b, t: (b, t, 0)),          # cond (f32)
          pl.BlockSpec((1, 1, dil, C), lambda b, t: (b, t, 0, 0)),   # halo_prev
          pl.BlockSpec((1, 1, dil, C), lambda b, t: (b, t, 0, 0)),   # halo_next
          pl.BlockSpec((1, tT, 1), lambda b, t: (t, 0, 0)),          # validity mask
          pl.BlockSpec((1, 8, C), lambda b, t: (b, 0, 0)),           # per-batch rows
          const_spec((E, 2 * C)),                                    # wcp
          const_spec((3, C, 2 * C)),                                 # wc
          const_spec((C, 2 * C)),                                    # wop
      ],
      out_specs=[
          pl.BlockSpec((1, tT, C), lambda b, t: (b, t, 0)),
          pl.BlockSpec((1, tT, C), lambda b, t: (b, t, 0)),
      ],
      out_shape=[
          jax.ShapeDtypeStruct((B, Tp, C), out_dtype),
          jax.ShapeDtypeStruct((B, Tp, C), out_dtype),
      ],
      scratch_shapes=[pltpu.VMEM((yext_rows, C), bf16)],
      compiler_params=pltpu.CompilerParams(
          dimension_semantics=("parallel", "parallel"),
          vmem_limit_bytes=32 * 1024 * 1024,
      ),
      cost_estimate=cost,
  )(x32, cond32, halo_prev, halo_next, mask, rows, wcp, wc, wop)

  if pad:
    res, skip = res[:, :T], skip[:, :T]
  return res, skip


def residual_block_forward_nct(x_nct, cond_nct, diffusion_step, spk, params,
                               dilation, **kw):
  """Adapter for torch NCT layout ([B, C, T]). Prefer the channels-last entry
  point: these transposes are full extra HBM passes."""
  res, skip = residual_block_forward(
      jnp.transpose(x_nct, (0, 2, 1)), jnp.transpose(cond_nct, (0, 2, 1)),
      diffusion_step, spk, params, dilation, **kw)
  return jnp.transpose(res, (0, 2, 1)), jnp.transpose(skip, (0, 2, 1))


def make_params(key, encoder_hidden, residual_channels):
  """Deterministic synthetic parameters mirroring the PyTorch module shapes.

  All weights are stored "channels-last matmul ready":
    Linear(in, out):  w [in, out], b [1, out]
    Conv1d 1x1 (in -> out): w [in, out], b [1, out]
    Conv1d k=3 dilated (in -> out): w [3, in, out], b [1, out]
  """
  C, E = residual_channels, encoder_hidden
  ks = jax.random.split(key, 10)

  def kaiming(k, fan_in, shape):
    return jax.random.normal(k, shape, jnp.float32) * math.sqrt(2.0 / fan_in)

  def xavier(k, fan_in, fan_out, shape):
    a = math.sqrt(6.0 / (fan_in + fan_out))
    return jax.random.uniform(k, shape, jnp.float32, -a, a)

  params = {
      # diffusion_projection: Linear(C, C)
      "wdp": xavier(ks[0], C, C, (C, C)),
      "bdp": jax.random.uniform(ks[1], (1, C), jnp.float32,
                                -1.0 / math.sqrt(C), 1.0 / math.sqrt(C)),
      # conditioner_projection: Conv1d(E, 2C, 1), kaiming_normal weight
      "wcp": kaiming(ks[2], E, (E, 2 * C)),
      "bcp": jax.random.uniform(ks[3], (1, 2 * C), jnp.float32,
                                -1.0 / math.sqrt(E), 1.0 / math.sqrt(E)),
      # dilated_conv: Conv1d(C, 2C, 3), kaiming_normal (fan_in = C*3)
      "wc": kaiming(ks[4], C * 3, (3, C, 2 * C)),
      "bc": jax.random.uniform(ks[5], (1, 2 * C), jnp.float32,
                               -1.0 / math.sqrt(C * 3), 1.0 / math.sqrt(C * 3)),
      # FiLM: gain Linear(C, 2C) xavier, bias=1 ; bias Linear(C, 2C) xavier, bias=0
      "wg": xavier(ks[6], C, 2 * C, (C, 2 * C)),
      "bg": jnp.ones((1, 2 * C), jnp.float32),
      "wb": xavier(ks[7], C, 2 * C, (C, 2 * C)),
      "bb": jnp.zeros((1, 2 * C), jnp.float32),
      # output_projection: Conv1d(C, 2C, 1), kaiming_normal
      "wop": kaiming(ks[8], C, (C, 2 * C)),
      "bop": jax.random.uniform(ks[9], (1, 2 * C), jnp.float32,
                                -1.0 / math.sqrt(C), 1.0 / math.sqrt(C)),
  }
  return params


def reference_forward(x, cond, diff, spk, p, dilation, *, mm_dtype=jnp.float32):
  """Pure-JAX reference, channels-last ([B, T, C]) -- same math as the module.

  With mm_dtype=bf16 it applies the same rounding as the kernel (activations
  and weights rounded before each matmul; accumulation / elementwise in f32).
  """
  B, T, C = x.shape
  rnd = lambda a: a.astype(mm_dtype).astype(jnp.float32)
  d = diff @ p["wdp"] + p["bdp"]                 # [B, C]
  y = rnd(x + d[:, None, :])
  cproj = rnd(cond) @ rnd(p["wcp"]) + p["bcp"]
  zpad = jnp.zeros((B, dilation, C), jnp.float32)
  y_prev = jnp.concatenate([zpad, y[:, : T - dilation]], axis=1)
  y_next = jnp.concatenate([y[:, dilation:], zpad], axis=1)
  wc = rnd(p["wc"])
  conv = y_prev @ wc[0] + y @ wc[1] + y_next @ wc[2] + p["bc"]
  y2 = conv + cproj
  gain = spk @ p["wg"] + p["bg"]
  bias = spk @ p["wb"] + p["bb"]
  y2 = y2 * gain[:, None, :] + bias[:, None, :]
  gate, filt = y2[..., :C], y2[..., C:]
  z = jax.nn.sigmoid(gate) * jnp.tanh(filt)
  out = rnd(z) @ rnd(p["wop"]) + p["bop"]
  residual, skip = out[..., :C], out[..., C:]
  return (x + residual) / math.sqrt(2.0), skip


if __name__ == "__main__":
  B = 2
  residual_channels = 128    # multiple of 128 -> lane-dense stores
  encoder_hidden = 64

  key = jax.random.PRNGKey(0)
  k_p, k_rest = jax.random.split(key)
  params = make_params(k_p, encoder_hidden, residual_channels)

  configs = [
      dict(T=512, dilation=4, tile_t=256),   # T an exact multiple of the tile
      dict(T=576, dilation=2, tile_t=256),   # ragged T -> padded + masked path
  ]

  for i, cfg in enumerate(configs):
    T, dilation, tile_t = cfg["T"], cfg["dilation"], cfg["tile_t"]
    ks = jax.random.split(jax.random.fold_in(k_rest, i), 4)
    x = jax.random.normal(ks[0], (B, T, residual_channels), jnp.float32)
    conditioner = jax.random.normal(ks[1], (B, T, encoder_hidden), jnp.float32)
    diffusion_step = jax.random.normal(ks[2], (B, residual_channels), jnp.float32)
    spk = jax.random.normal(ks[3], (B, residual_channels), jnp.float32)

    res, skip = residual_block_forward(x, conditioner, diffusion_step, spk,
                                       params, dilation, tile_t=tile_t)
    res = jax.block_until_ready(res).astype(jnp.float32)
    skip = jax.block_until_ready(skip).astype(jnp.float32)

    # Reference with the same bf16 rounding at the matmul feeds (f32 accum in
    # both paths); kernel outputs are bf16, tolerances absorb that rounding.
    res_ref, skip_ref = reference_forward(x, conditioner, diffusion_step, spk,
                                          params, dilation,
                                          mm_dtype=jnp.bfloat16)
    np.testing.assert_allclose(np.asarray(res), np.asarray(res_ref),
                               rtol=5e-2, atol=5e-2)
    np.testing.assert_allclose(np.asarray(skip), np.asarray(skip_ref),
                               rtol=5e-2, atol=5e-2)

  print("KERNEL_OK")
</pallas_src>

<mosaic_0001>
module attributes {stable_mosaic.version = 11 : i64} {
  func.func @_residual_block_kernel(%arg0: i32, %arg1: i32, %arg2: memref<1x256x128xf32, #tpu.memory_space<vmem>>, %arg3: memref<1x256x64xf32, #tpu.memory_space<vmem>>, %arg4: memref<1x1x4x128xf32, #tpu.memory_space<vmem>>, %arg5: memref<1x1x4x128xf32, #tpu.memory_space<vmem>>, %arg6: memref<1x256x1xf32, #tpu.memory_space<vmem>>, %arg7: memref<1x8x128xf32, #tpu.memory_space<vmem>>, %arg8: memref<64x256xbf16, #tpu.memory_space<vmem>>, %arg9: memref<3x128x256xbf16, #tpu.memory_space<vmem>>, %arg10: memref<128x256xbf16, #tpu.memory_space<vmem>>, %arg11: memref<1x256x128xbf16, #tpu.memory_space<vmem>>, %arg12: memref<1x256x128xbf16, #tpu.memory_space<vmem>>, %arg13: memref<272x128xbf16, #tpu.memory_space<vmem>>) attributes {dimension_semantics = [#tpu.dimension_semantics<parallel>, #tpu.dimension_semantics<parallel>], iteration_bounds = array<i64: 2, 2>, scalar_prefetch = 0 : i64, scratch_operands = 1 : i64, tpu.core_type = #tpu.core_type<tc>, window_params = [{transform_indices = @transform_0, window_bounds = array<i64: 1, 256, 128>}, {transform_indices = @transform_1, window_bounds = array<i64: 1, 256, 64>}, {transform_indices = @transform_2, window_bounds = array<i64: 1, 1, 4, 128>}, {transform_indices = @transform_3, window_bounds = array<i64: 1, 1, 4, 128>}, {transform_indices = @transform_4, window_bounds = array<i64: 1, 256, 1>}, {transform_indices = @transform_5, window_bounds = array<i64: 1, 8, 128>}, {pipeline_mode = #tpu.pipeline_mode<synchronous>, transform_indices = @transform_6, window_bounds = array<i64: 64, 256>}, {pipeline_mode = #tpu.pipeline_mode<synchronous>, transform_indices = @transform_7, window_bounds = array<i64: 3, 128, 256>}, {pipeline_mode = #tpu.pipeline_mode<synchronous>, transform_indices = @transform_8, window_bounds = array<i64: 128, 256>}, {transform_indices = @transform_9, window_bounds = array<i64: 1, 256, 128>}, {transform_indices = @transform_10, window_bounds = array<i64: 1, 256, 128>}]} {
    %c0 = arith.constant 0 : index
    %c0_0 = arith.constant 0 : index
    %c0_1 = arith.constant 0 : index
    %0 = vector.load %arg7[%c0, %c0_0, %c0_1] : memref<1x8x128xf32, #tpu.memory_space<vmem>>, vector<1x8x128xf32>
    %1 = vector.shape_cast %0 : vector<1x8x128xf32> to vector<8x128xf32>
    %2 = vector.extract_strided_slice %1 {offsets = [0, 0], sizes = [1, 128], strides = [1, 1]} : vector<8x128xf32> to vector<1x128xf32>
    %3 = vector.extract_strided_slice %1 {offsets = [1, 0], sizes = [1, 128], strides = [1, 1]} : vector<8x128xf32> to vector<1x128xf32>
    %4 = vector.extract_strided_slice %1 {offsets = [2, 0], sizes = [1, 128], strides = [1, 1]} : vector<8x128xf32> to vector<1x128xf32>
    %5 = vector.extract_strided_slice %1 {offsets = [3, 0], sizes = [1, 128], strides = [1, 1]} : vector<8x128xf32> to vector<1x128xf32>
    %6 = vector.extract_strided_slice %1 {offsets = [4, 0], sizes = [1, 128], strides = [1, 1]} : vector<8x128xf32> to vector<1x128xf32>
    %7 = vector.extract_strided_slice %1 {offsets = [5, 0], sizes = [1, 128], strides = [1, 1]} : vector<8x128xf32> to vector<1x128xf32>
    %8 = vector.extract_strided_slice %1 {offsets = [6, 0], sizes = [1, 128], strides = [1, 1]} : vector<8x128xf32> to vector<1x128xf32>
    %c0_2 = arith.constant 0 : index
    %c0_3 = arith.constant 0 : index
    %c0_4 = arith.constant 0 : index
    %9 = vector.load %arg2[%c0_2, %c0_3, %c0_4] : memref<1x256x128xf32, #tpu.memory_space<vmem>>, vector<1x256x128xf32>
    %10 = vector.shape_cast %9 : vector<1x256x128xf32> to vector<256x128xf32>
    %11 = vector.broadcast %2 : vector<1x128xf32> to vector<256x128xf32>
    %12 = arith.addf %10, %11 : vector<256x128xf32>
    %c0_5 = arith.constant 0 : index
    %c0_6 = arith.constant 0 : index
    %c0_7 = arith.constant 0 : index
    %c0_8 = arith.constant 0 : index
    %13 = vector.load %arg4[%c0_5, %c0_6, %c0_7, %c0_8] : memref<1x1x4x128xf32, #tpu.memory_space<vmem>>, vector<1x1x4x128xf32>
    %14 = vector.shape_cast %13 : vector<1x1x4x128xf32> to vector<4x128xf32>
    %15 = arith.truncf %14 : vector<4x128xf32> to vector<4x128xbf16>
    %c4 = arith.constant 4 : index
    %c0_9 = arith.constant 0 : index
    %16 = vector.load %arg13[%c4, %c0_9] : memref<272x128xbf16, #tpu.memory_space<vmem>>, vector<4x128xbf16>
    tpu.vector_store %arg13[%c4, %c0_9], %15 {strides = array<i32>} : memref<272x128xbf16, #tpu.memory_space<vmem>>, vector<4x128xbf16>,
    %17 = arith.truncf %12 : vector<256x128xf32> to vector<256x128xbf16>
    %c8 = arith.constant 8 : index
    %c0_10 = arith.constant 0 : index
    %18 = vector.load %arg13[%c8, %c0_10] : memref<272x128xbf16, #tpu.memory_space<vmem>>, vector<256x128xbf16>
    tpu.vector_store %arg13[%c8, %c0_10], %17 {strides = array<i32>} : memref<272x128xbf16, #tpu.memory_space<vmem>>, vector<256x128xbf16>,
    %c0_11 = arith.constant 0 : index
    %c0_12 = arith.constant 0 : index
    %c0_13 = arith.constant 0 : index
    %c0_14 = arith.constant 0 : index
    %19 = vector.load %arg5[%c0_11, %c0_12, %c0_13, %c0_14] : memref<1x1x4x128xf32, #tpu.memory_space<vmem>>, vector<1x1x4x128xf32>
    %20 = vector.shape_cast %19 : vector<1x1x4x128xf32> to vector<4x128xf32>
    %21 = arith.truncf %20 : vector<4x128xf32> to vector<4x128xbf16>
    %c264 = arith.constant 264 : index
    %c0_15 = arith.constant 0 : index
    %22 = vector.load %arg13[%c264, %c0_15] : memref<272x128xbf16, #tpu.memory_space<vmem>>, vector<4x128xbf16>
    tpu.vector_store %arg13[%c264, %c0_15], %21 {strides = array<i32>} : memref<272x128xbf16, #tpu.memory_space<vmem>>, vector<4x128xbf16>,
    %c4_16 = arith.constant 4 : index
    %c0_17 = arith.constant 0 : index
    %23 = vector.load %arg13[%c4_16, %c0_17] : memref<272x128xbf16, #tpu.memory_space<vmem>>, vector<256x128xbf16>
    %c8_18 = arith.constant 8 : index
    %c0_19 = arith.constant 0 : index
    %24 = vector.load %arg13[%c8_18, %c0_19] : memref<272x128xbf16, #tpu.memory_space<vmem>>, vector<256x128xbf16>
    %c12 = arith.constant 12 : index
    %c0_20 = arith.constant 0 : index
    %25 = vector.load %arg13[%c12, %c0_20] : memref<272x128xbf16, #tpu.memory_space<vmem>>, vector<256x128xbf16>
    %c0_21 = arith.constant 0 : index
    %c0_22 = arith.constant 0 : index
    %c0_23 = arith.constant 0 : index
    %26 = vector.load %arg9[%c0_21, %c0_22, %c0_23] : memref<3x128x256xbf16, #tpu.memory_space<vmem>>, vector<1x128x256xbf16>
    %27 = vector.shape_cast %26 : vector<1x128x256xbf16> to vector<128x256xbf16>
    %cst = arith.constant dense<0.000000e+00> : vector<256x256xf32>
    %28 = tpu.matmul %23, %27, %cst {dimension_numbers = #tpu.dot_dimension_numbers<[1], [0], [0], [1], [0, 0, 1, 1], [], []>} : vector<256x128xbf16>, vector<128x256xbf16>, vector<256x256xf32> -> vector<256x256xf32>
    %c1 = arith.constant 1 : index
    %c0_24 = arith.constant 0 : index
    %c0_25 = arith.constant 0 : index
    %29 = vector.load %arg9[%c1, %c0_24, %c0_25] : memref<3x128x256xbf16, #tpu.memory_space<vmem>>, vector<1x128x256xbf16>
    %30 = vector.shape_cast %29 : vector<1x128x256xbf16> to vector<128x256xbf16>
    %cst_26 = arith.constant dense<0.000000e+00> : vector<256x256xf32>
    %31 = tpu.matmul %24, %30, %cst_26 {dimension_numbers = #tpu.dot_dimension_numbers<[1], [0], [0], [1], [0, 0, 1, 1], [], []>} : vector<256x128xbf16>, vector<128x256xbf16>, vector<256x256xf32> -> vector<256x256xf32>
    %32 = arith.addf %28, %31 : vector<256x256xf32>
    %c2 = arith.constant 2 : index
    %c0_27 = arith.constant 0 : index
    %c0_28 = arith.constant 0 : index
    %33 = vector.load %arg9[%c2, %c0_27, %c0_28] : memref<3x128x256xbf16, #tpu.memory_space<vmem>>, vector<1x128x256xbf16>
    %34 = vector.shape_cast %33 : vector<1x128x256xbf16> to vector<128x256xbf16>
    %cst_29 = arith.constant dense<0.000000e+00> : vector<256x256xf32>
    %35 = tpu.matmul %25, %34, %cst_29 {dimension_numbers = #tpu.dot_dimension_numbers<[1], [0], [0], [1], [0, 0, 1, 1], [], []>} : vector<256x128xbf16>, vector<128x256xbf16>, vector<256x256xf32> -> vector<256x256xf32>
    %36 = arith.addf %32, %35 : vector<256x256xf32>
    %c0_30 = arith.constant 0 : index
    %c0_31 = arith.constant 0 : index
    %c0_32 = arith.constant 0 : index
    %37 = vector.load %arg3[%c0_30, %c0_31, %c0_32] : memref<1x256x64xf32, #tpu.memory_space<vmem>>, vector<1x256x64xf32>
    %38 = vector.shape_cast %37 : vector<1x256x64xf32> to vector<256x64xf32>
    %39 = arith.truncf %38 : vector<256x64xf32> to vector<256x64xbf16>
    %c0_33 = arith.constant 0 : index
    %c0_34 = arith.constant 0 : index
    %40 = vector.load %arg8[%c0_33, %c0_34] : memref<64x256xbf16, #tpu.memory_space<vmem>>, vector<64x256xbf16>
    %cst_35 = arith.constant dense<0.000000e+00> : vector<256x256xf32>
    %41 = tpu.matmul %39, %40, %cst_35 {dimension_numbers = #tpu.dot_dimension_numbers<[1], [0], [0], [1], [0, 0, 1, 1], [], []>} : vector<256x64xbf16>, vector<64x256xbf16>, vector<256x256xf32> -> vector<256x256xf32>
    %42 = arith.addf %36, %41 : vector<256x256xf32>
    %43 = vector.extract_strided_slice %42 {offsets = [0, 0], sizes = [256, 128], strides = [1, 1]} : vector<256x256xf32> to vector<256x128xf32>
    %44 = vector.broadcast %3 : vector<1x128xf32> to vector<256x128xf32>
    %45 = arith.mulf %43, %44 : vector<256x128xf32>
    %46 = vector.broadcast %5 : vector<1x128xf32> to vector<256x128xf32>
    %47 = arith.addf %45, %46 : vector<256x128xf32>
    %48 = vector.extract_strided_slice %42 {offsets = [0, 128], sizes = [256, 128], strides = [1, 1]} : vector<256x256xf32> to vector<256x128xf32>
    %49 = vector.broadcast %4 : vector<1x128xf32> to vector<256x128xf32>
    %50 = arith.mulf %48, %49 : vector<256x128xf32>
    %51 = vector.broadcast %6 : vector<1x128xf32> to vector<256x128xf32>
    %52 = arith.addf %50, %51 : vector<256x128xf32>
    %53 = arith.negf %47 : vector<256x128xf32>
    %54 = math.exp %53 : vector<256x128xf32>
    %cst_36 = arith.constant 1.000000e+00 : f32
    %55 = vector.broadcast %cst_36 : f32 to vector<256x128xf32>
    %56 = arith.addf %55, %54 : vector<256x128xf32>
    %57 = arith.divf %55, %56 : vector<256x128xf32>
    %58 = math.tanh %52 : vector<256x128xf32>
    %59 = arith.mulf %57, %58 : vector<256x128xf32>
    %60 = arith.truncf %59 : vector<256x128xf32> to vector<256x128xbf16>
    %c0_37 = arith.constant 0 : index
    %c0_38 = arith.constant 0 : index
    %61 = vector.load %arg10[%c0_37, %c0_38] : memref<128x256xbf16, #tpu.memory_space<vmem>>, vector<128x256xbf16>
    %cst_39 = arith.constant dense<0.000000e+00> : vector<256x256xf32>
    %62 = tpu.matmul %60, %61, %cst_39 {dimension_numbers = #tpu.dot_dimension_numbers<[1], [0], [0], [1], [0, 0, 1, 1], [], []>} : vector<256x128xbf16>, vector<128x256xbf16>, vector<256x256xf32> -> vector<256x256xf32>
    %c0_40 = arith.constant 0 : index
    %c0_41 = arith.constant 0 : index
    %c0_42 = arith.constant 0 : index
    %63 = vector.load %arg2[%c0_40, %c0_41, %c0_42] : memref<1x256x128xf32, #tpu.memory_space<vmem>>, vector<1x256x128xf32>
    %64 = vector.shape_cast %63 : vector<1x256x128xf32> to vector<256x128xf32>
    %65 = vector.extract_strided_slice %62 {offsets = [0, 0], sizes = [256, 128], strides = [1, 1]} : vector<256x256xf32> to vector<256x128xf32>
    %66 = arith.addf %64, %65 : vector<256x128xf32>
    %67 = vector.broadcast %7 : vector<1x128xf32> to vector<256x128xf32>
    %68 = arith.addf %66, %67 : vector<256x128xf32>
    %cst_43 = arith.constant 0.707106769 : f32
    %69 = vector.broadcast %cst_43 : f32 to vector<256x128xf32>
    %70 = arith.mulf %68, %69 : vector<256x128xf32>
    %71 = arith.truncf %70 : vector<256x128xf32> to vector<256x128xbf16>
    %c0_44 = arith.constant 0 : index
    %c0_45 = arith.constant 0 : index
    %c0_46 = arith.constant 0 : index
    %72 = vector.load %arg11[%c0_44, %c0_45, %c0_46] : memref<1x256x128xbf16, #tpu.memory_space<vmem>>, vector<1x256x128xbf16>
    %73 = vector.shape_cast %72 : vector<1x256x128xbf16> to vector<256x128xbf16>
    %74 = vector.shape_cast %71 : vector<256x128xbf16> to vector<1x256x128xbf16>
    tpu.vector_store %arg11[%c0_44, %c0_45, %c0_46], %74 {strides = array<i32>} : memref<1x256x128xbf16, #tpu.memory_space<vmem>>, vector<1x256x128xbf16>,
    %75 = vector.extract_strided_slice %62 {offsets = [0, 128], sizes = [256, 128], strides = [1, 1]} : vector<256x256xf32> to vector<256x128xf32>
    %76 = vector.broadcast %8 : vector<1x128xf32> to vector<256x128xf32>
    %77 = arith.addf %75, %76 : vector<256x128xf32>
    %78 = arith.truncf %77 : vector<256x128xf32> to vector<256x128xbf16>
    %c0_47 = arith.constant 0 : index
    %c0_48 = arith.constant 0 : index
    %c0_49 = arith.constant 0 : index
    %79 = vector.load %arg12[%c0_47, %c0_48, %c0_49] : memref<1x256x128xbf16, #tpu.memory_space<vmem>>, vector<1x256x128xbf16>
    %80 = vector.shape_cast %79 : vector<1x256x128xbf16> to vector<256x128xbf16>
    %81 = vector.shape_cast %78 : vector<256x128xbf16> to vector<1x256x128xbf16>
    tpu.vector_store %arg12[%c0_47, %c0_48, %c0_49], %81 {strides = array<i32>} : memref<1x256x128xbf16, #tpu.memory_space<vmem>>, vector<1x256x128xbf16>,
    return
  }
  func.func @transform_0(%arg0: i32, %arg1: i32) -> (i32, i32, i32) {
    %c0_i32 = arith.constant 0 : i32
    %c0_i32_0 = arith.constant 0 : i32
    return %arg0, %arg1, %c0_i32 : i32, i32, i32
  }
  func.func @transform_1(%arg0: i32, %arg1: i32) -> (i32, i32, i32) {
    %c0_i32 = arith.constant 0 : i32
    %c0_i32_0 = arith.constant 0 : i32
    return %arg0, %arg1, %c0_i32 : i32, i32, i32
  }
  func.func @transform_2(%arg0: i32, %arg1: i32) -> (i32, i32, i32, i32) {
    %c0_i32 = arith.constant 0 : i32
    %c0_i32_0 = arith.constant 0 : i32
    %c0_i32_1 = arith.constant 0 : i32
    return %arg0, %arg1, %c0_i32, %c0_i32_0 : i32, i32, i32, i32
  }
  func.func @transform_3(%arg0: i32, %arg1: i32) -> (i32, i32, i32, i32) {
    %c0_i32 = arith.constant 0 : i32
    %c0_i32_0 = arith.constant 0 : i32
    %c0_i32_1 = arith.constant 0 : i32
    return %arg0, %arg1, %c0_i32, %c0_i32_0 : i32, i32, i32, i32
  }
  func.func @transform_4(%arg0: i32, %arg1: i32) -> (i32, i32, i32) {
    %c0_i32 = arith.constant 0 : i32
    %c0_i32_0 = arith.constant 0 : i32
    %c0_i32_1 = arith.constant 0 : i32
    return %arg1, %c0_i32, %c0_i32_0 : i32, i32, i32
  }
  func.func @transform_5(%arg0: i32, %arg1: i32) -> (i32, i32, i32) {
    %c0_i32 = arith.constant 0 : i32
    %c0_i32_0 = arith.constant 0 : i32
    %c0_i32_1 = arith.constant 0 : i32
    return %arg0, %c0_i32, %c0_i32_0 : i32, i32, i32
  }
  func.func @transform_6(%arg0: i32, %arg1: i32) -> (i32, i32) {
    %c0_i32 = arith.constant 0 : i32
    %c0_i32_0 = arith.constant 0 : i32
    %c0_i32_1 = arith.constant 0 : i32
    return %c0_i32, %c0_i32_0 : i32, i32
  }
  func.func @transform_7(%arg0: i32, %arg1: i32) -> (i32, i32, i32) {
    %c0_i32 = arith.constant 0 : i32
    %c0_i32_0 = arith.constant 0 : i32
    %c0_i32_1 = arith.constant 0 : i32
    %c0_i32_2 = arith.constant 0 : i32
    return %c0_i32, %c0_i32_0, %c0_i32_1 : i32, i32, i32
  }
  func.func @transform_8(%arg0: i32, %arg1: i32) -> (i32, i32) {
    %c0_i32 = arith.constant 0 : i32
    %c0_i32_0 = arith.constant 0 : i32
    %c0_i32_1 = arith.constant 0 : i32
    return %c0_i32, %c0_i32_0 : i32, i32
  }
  func.func @transform_9(%arg0: i32, %arg1: i32) -> (i32, i32, i32) {
    %c0_i32 = arith.constant 0 : i32
    %c0_i32_0 = arith.constant 0 : i32
    return %arg0, %arg1, %c0_i32 : i32, i32, i32
  }
  func.func @transform_10(%arg0: i32, %arg1: i32) -> (i32, i32, i32) {
    %c0_i32 = arith.constant 0 : i32
    %c0_i32_0 = arith.constant 0 : i32
    return %arg0, %arg1, %c0_i32 : i32, i32, i32
  }
}

</mosaic_0001>

<llo_original>
// kernel: tpu_custom_call.1
$region0: #{tpu_custom_call.1}
  #allocation0 [shape = 'u32[]', space=smem, size = 0x4, offset = 0x4, fixed_abs, tag = 'smem constant byte address 0x4 - core index']
  #allocation1 [shape = 'u32[72,128]{1,0:T(1,128)}', space=vmem, size = 0x9000, scoped, tag = 'internal scratch']
  #allocation2 [shape = 'bf16[272,128]{1,0:T(8,128)(2,1)}', space=vmem, size = 0x11000, scoped, tag = 'scratch operand']
  %s0 = inlined_call_operand.vmem [shape: f32[2,512,128], index: 0, kind: input, shape index: {}]
  %s1 = inlined_call_operand.vmem [shape: f32[2,512,64], index: 1, kind: input, shape index: {}]
  %s2 = inlined_call_operand.hbm [shape: f32[2,2,4,128], index: 2, kind: input, shape index: {}]
  %s3 = inlined_call_operand.hbm [shape: f32[2,2,4,128], index: 3, kind: input, shape index: {}]
  %s4 = inlined_call_operand.vmem [shape: f32[2,256,1], index: 4, kind: input, shape index: {}]
  %s5 = inlined_call_operand.hbm [shape: f32[2,8,128], index: 5, kind: input, shape index: {}]
  %s6 = inlined_call_operand.hbm [shape: bf16[64,256], index: 6, kind: input, shape index: {}]
  %s7 = inlined_call_operand.vmem [shape: bf16[3,128,256], index: 7, kind: input, shape index: {}]
  %s8 = inlined_call_operand.vmem [shape: bf16[128,256], index: 8, kind: input, shape index: {}]
  %s9 = inlined_call_operand.hbm [shape: bf16[2,512,128], index: 9, kind: output, shape index: {0}]
  %s10 = inlined_call_operand.hbm [shape: bf16[2,512,128], index: 10, kind: output, shape index: {1}]
  %11 = xla_tuple %s9, %s10
  %s12 = sld [smem:[#allocation0]]
  $region93: #{tpu_custom_call.1} parent=0
    _
  %s14 = ssub.s32 1, %s12
  %s15 = scalar_select 0, %s14, %s12
  $region1: #{tpu_custom_call.1} parent=0
    #allocation3 [shape = 'u8[4096]{0}', space=vmem, size = 0x1000, scoped, tag = 'input window, operand 2']
    #allocation4 [shape = 's32[2]{0}', space=sflag, size = 0x8, scoped, tag = 'scoped memory for tpu_custom_call.1']
    #allocation5 [shape = 's32[2]{0}', space=sflag, size = 0x8, scoped, tag = 'scoped memory for tpu_custom_call.1']
    #allocation6 [shape = 'u8[4096]{0}', space=vmem, size = 0x1000, scoped, tag = 'input window, operand 3']
    #allocation7 [shape = 's32[2]{0}', space=sflag, size = 0x8, scoped, tag = 'scoped memory for tpu_custom_call.1']
    #allocation8 [shape = 'u8[8192]{0}', space=vmem, size = 0x2000, scoped, tag = 'input window, operand 5']
    #allocation9 [shape = 'u8[32768]{0}', space=vmem, size = 0x8000, scoped, tag = 'input window, operand 6, single buffered']
    #allocation10 [shape = 's32[1]{0}', space=sflag, size = 0x4, scoped, tag = 'scoped memory for tpu_custom_call.1']
    #allocation11 [shape = 'u8[131072]{0}', space=vmem, size = 0x20000, scoped, tag = 'output window, operand 0']
    #allocation12 [shape = 'u8[131072]{0}', space=vmem, size = 0x20000, scoped, tag = 'output window, operand 1']
    #allocation13 [shape = 's32[2]{0}', space=sflag, size = 0x8, scoped, tag = 'scoped memory for tpu_custom_call.1']
    %16 = vsyncpa [#allocation4], 0
    %s17 = scalar_lea.sflag [#allocation4], 1
    %18 = vsyncpa %s17, 0
    %19 = vsyncpa [#allocation7], 0
    %s20 = scalar_lea.sflag [#allocation7], 1
    %21 = vsyncpa %s20, 0
    %22 = vsyncpa [#allocation10], 0
    %23 = vsyncpa [#allocation5], 0
    %s24 = scalar_lea.sflag [#allocation5], 1
    %25 = vsyncpa %s24, 0
    %26 = vsyncpa [#allocation13], 0
    %s27 = scalar_lea.sflag [#allocation13], 1
    %28 = vsyncpa %s27, 0
    loop: start=0, step=1, limit=6
    $region2: #{tpu_custom_call.1} parent=1 // loop_pre_header
      _
    $region3: #{tpu_custom_call.1} parent=1 // loop_header
      %s30 = sphi 0, %s34
      %p31 = scmp.ge.s32.totalorder %s30, 6
      %s37 = sphi 0, %s49
      %s38 = sphi 0, %s45
      %s39 = sphi 0, %s37
      %s40 = sphi 0, %s38
      %s41 = sphi 0, %s39
      %s42 = sphi 0, %s40
      %s54 = sphi 0, %s56
      %s57 = sphi 0, %s54
      %s58 = sphi 0, %s57
      %s74 = sphi 0, %s58
      %s82 = sphi 0, %s84
      %s85 = sphi 0, %s82
      %s86 = sphi 0, %s85
      %s102 = sphi 0, %s86
      %s110 = sphi 0, %s112
      %s113 = sphi 0, %s110
      %s114 = sphi 0, %s113
      %s130 = sphi 0, %s114
      %s138 = sphi 0, %s140
      %s141 = sphi 0, %s138
      %s142 = sphi 0, %s141
      %s158 = sphi 0, %s142
      %s164 = sphi 0, %s166
      %s167 = sphi 0, %s164
      %s168 = sphi 0, %s167
      %s184 = sphi 0, %s168
      %s190 = sphi 0, %s192
      %s193 = sphi 0, %s190
      %s194 = sphi 0, %s193
      %s210 = sphi 0, %s194
      %s214 = sphi 0, %s214
      %s216 = sphi 0, %s214
      %s217 = sphi 0, %s216
      %s231 = sphi 0, %s217
      %s235 = sphi 0, %s235
      %s237 = sphi 0, %s235
      %s238 = sphi 0, %s237
      %s252 = sphi 0, %s238
      %s256 = sphi 0, %s256
      %s258 = sphi 0, %s256
      %s259 = sphi 0, %s258
      %s273 = sphi 0, %s259
      %s281 = sphi 0, %s283
      %s284 = sphi 0, %s281
      %s285 = sphi 0, %s284
      %s301 = sphi 0, %s285
      %s309 = sphi 0, %s311
      %s312 = sphi 0, %s309
      %s313 = sphi 0, %s312
      %s329 = sphi 0, %s313
    $region4: #{tpu_custom_call.1} parent=1 // loop_header_branch
      %33 = sbr.rel (%p31) target = $region8
    $region5: #{tpu_custom_call.1} parent=1 // loop_body
      %s35 = ssub.s32 %s30, 1
      %s36 = ssub.s32 %s30, 2
      %s43 = sadd.s32 1, %s38
      %p44 = scmp.ge.s32.totalorder %s43, 2
      %s45 = scalar_select %p44, 0, %s43
      %s46 = sadd.s32 1, %s37
      %s47 = scalar_select %p44, %s46, %s37
      %p48 = scmp.ge.s32.totalorder %s47, 2
      %s49 = scalar_select %p48, 0, %s47
      %s50 = ssub.s32 %s37, %s49
      %s51 = ssub.s32 %s38, %s45
      %s52 = sor.u32 %s50, %s51
      %p53 = scmp.eq.s32.totalorder %s52, 0
      %s55 = sadd.s32 %s54, 1
      %s56 = scalar_select %p53, %s54, %s55
      %p59 = pneg %p53
      %p60 = scmp.eq.s32.totalorder %s30, 3
      %p61 = por %p59, %p60
      %p62 = scmp.ne.s32.totalorder %s54, %s57
      %p63 = scmp.eq.s32.totalorder %s30, 0
      %p64 = por %p62, %p63
      %p65 = scmp.ne.s32.totalorder %s54, %s57
      %p66 = scmp.eq.s32.totalorder %s35, 3
      %p67 = por %p65, %p66
      %p68 = scmp.ne.s32.totalorder %s57, %s58
      %p69 = scmp.eq.s32.totalorder %s35, 0
      %p70 = por %p68, %p69
      %p71 = scmp.ne.s32.totalorder %s57, %s58
      %p72 = scmp.eq.s32.totalorder %s36, 3
      %p73 = por %p71, %p72
      %p75 = scmp.ne.s32.totalorder %s58, %s74
      %p76 = scmp.eq.s32.totalorder %s36, 0
      %p77 = por %p75, %p76
      %s78 = ssub.s32 %s37, %s49
      %s79 = ssub.s32 %s38, %s45
      %s80 = sor.u32 %s78, %s79
      %p81 = scmp.eq.s32.totalorder %s80, 0
      %s83 = sadd.s32 %s82, 1
      %s84 = scalar_select %p81, %s82, %s83
      %p87 = pneg %p81
      %p88 = scmp.eq.s32.totalorder %s30, 3
      %p89 = por %p87, %p88
      %p90 = scmp.ne.s32.totalorder %s82, %s85
      %p91 = scmp.eq.s32.totalorder %s30, 0
      %p92 = por %p90, %p91
      %p93 = scmp.ne.s32.totalorder %s82, %s85
      %p94 = scmp.eq.s32.totalorder %s35, 3
      %p95 = por %p93, %p94
      %p96 = scmp.ne.s32.totalorder %s85, %s86
      %p97 = scmp.eq.s32.totalorder %s35, 0
      %p98 = por %p96, %p97
      %p99 = scmp.ne.s32.totalorder %s85, %s86
      %p100 = scmp.eq.s32.totalorder %s36, 3
      %p101 = por %p99, %p100
      %p103 = scmp.ne.s32.totalorder %s86, %s102
      %p104 = scmp.eq.s32.totalorder %s36, 0
      %p105 = por %p103, %p104
      %s106 = ssub.s32 %s37, %s49
      %s107 = ssub.s32 %s38, %s45
      %s108 = sor.u32 %s106, %s107
      %p109 = scmp.eq.s32.totalorder %s108, 0
      %s111 = sadd.s32 %s110, 1
      %s112 = scalar_select %p109, %s110, %s111
      %p115 = pneg %p109
      %p116 = scmp.eq.s32.totalorder %s30, 3
      %p117 = por %p115, %p116
      %p118 = scmp.ne.s32.totalorder %s110, %s113
      %p119 = scmp.eq.s32.totalorder %s30, 0
      %p120 = por %p118, %p119
      %p121 = scmp.ne.s32.totalorder %s110, %s113
      %p122 = scmp.eq.s32.totalorder %s35, 3
      %p123 = por %p121, %p122
      %p124 = scmp.ne.s32.totalorder %s113, %s114
      %p125 = scmp.eq.s32.totalorder %s35, 0
      %p126 = por %p124, %p125
      %p127 = scmp.ne.s32.totalorder %s113, %s114
      %p128 = scmp.eq.s32.totalorder %s36, 3
      %p129 = por %p127, %p128
      %p131 = scmp.ne.s32.totalorder %s114, %s130
      %p132 = scmp.eq.s32.totalorder %s36, 0
      %p133 = por %p131, %p132
      %s134 = ssub.s32 %s37, %s49
      %s135 = ssub.s32 %s38, %s45
      %s136 = sor.u32 %s134, %s135
      %p137 = scmp.eq.s32.totalorder %s136, 0
      %s139 = sadd.s32 %s138, 1
      %s140 = scalar_select %p137, %s138, %s139
      %p143 = pneg %p137
      %p144 = scmp.eq.s32.totalorder %s30, 3
      %p145 = por %p143, %p144
      %p146 = scmp.ne.s32.totalorder %s138, %s141
      %p147 = scmp.eq.s32.totalorder %s30, 0
      %p148 = por %p146, %p147
      %p149 = scmp.ne.s32.totalorder %s138, %s141
      %p150 = scmp.eq.s32.totalorder %s35, 3
      %p151 = por %p149, %p150
      %p152 = scmp.ne.s32.totalorder %s141, %s142
      %p153 = scmp.eq.s32.totalorder %s35, 0
      %p154 = por %p152, %p153
      %p155 = scmp.ne.s32.totalorder %s141, %s142
      %p156 = scmp.eq.s32.totalorder %s36, 3
      %p157 = por %p155, %p156
      %p159 = scmp.ne.s32.totalorder %s142, %s158
      %p160 = scmp.eq.s32.totalorder %s36, 0
      %p161 = por %p159, %p160
      %s162 = ssub.s32 %s38, %s45
      %p163 = scmp.eq.s32.totalorder %s162, 0
      %s165 = sadd.s32 %s164, 1
      %s166 = scalar_select %p163, %s164, %s165
      %p169 = pneg %p163
      %p170 = scmp.eq.s32.totalorder %s30, 3
      %p171 = por %p169, %p170
      %p172 = scmp.ne.s32.totalorder %s164, %s167
      %p173 = scmp.eq.s32.totalorder %s30, 0
      %p174 = por %p172, %p173
      %p175 = scmp.ne.s32.totalorder %s164, %s167
      %p176 = scmp.eq.s32.totalorder %s35, 3
      %p177 = por %p175, %p176
      %p178 = scmp.ne.s32.totalorder %s167, %s168
      %p179 = scmp.eq.s32.totalorder %s35, 0
      %p180 = por %p178, %p179
      %p181 = scmp.ne.s32.totalorder %s167, %s168
      %p182 = scmp.eq.s32.totalorder %s36, 3
      %p183 = por %p181, %p182
      %p185 = scmp.ne.s32.totalorder %s168, %s184
      %p186 = scmp.eq.s32.totalorder %s36, 0
      %p187 = por %p185, %p186
      %s188 = ssub.s32 %s37, %s49
      %p189 = scmp.eq.s32.totalorder %s188, 0
      %s191 = sadd.s32 %s190, 1
      %s192 = scalar_select %p189, %s190, %s191
      %p195 = pneg %p189
      %p196 = scmp.eq.s32.totalorder %s30, 3
      %p197 = por %p195, %p196
      %p198 = scmp.ne.s32.totalorder %s190, %s193
      %p199 = scmp.eq.s32.totalorder %s30, 0
      %p200 = por %p198, %p199
      %p201 = scmp.ne.s32.totalorder %s190, %s193
      %p202 = scmp.eq.s32.totalorder %s35, 3
      %p203 = por %p201, %p202
      %p204 = scmp.ne.s32.totalorder %s193, %s194
      %p205 = scmp.eq.s32.totalorder %s35, 0
      %p206 = por %p204, %p205
      %p207 = scmp.ne.s32.totalorder %s193, %s194
      %p208 = scmp.eq.s32.totalorder %s36, 3
      %p209 = por %p207, %p208
      %p211 = scmp.ne.s32.totalorder %s194, %s210
      %p212 = scmp.eq.s32.totalorder %s36, 0
      %p213 = por %p211, %p212
      %s215 = sadd.s32 %s214, 1
      %p218 = scmp.eq.s32.totalorder %s30, 3
      %p219 = scmp.ne.s32.totalorder %s214, %s216
      %p220 = scmp.eq.s32.totalorder %s30, 0
      %p221 = por %p219, %p220
      %p222 = scmp.ne.s32.totalorder %s214, %s216
      %p223 = scmp.eq.s32.totalorder %s35, 3
      %p224 = por %p222, %p223
      %p225 = scmp.ne.s32.totalorder %s216, %s217
      %p226 = scmp.eq.s32.totalorder %s35, 0
      %p227 = por %p225, %p226
      %p228 = scmp.ne.s32.totalorder %s216, %s217
      %p229 = scmp.eq.s32.totalorder %s36, 3
      %p230 = por %p228, %p229
      %p232 = scmp.ne.s32.totalorder %s217, %s231
      %p233 = scmp.eq.s32.totalorder %s36, 0
      %p234 = por %p232, %p233
      %s236 = sadd.s32 %s235, 1
      %p239 = scmp.eq.s32.totalorder %s30, 3
      %p240 = scmp.ne.s32.totalorder %s235, %s237
      %p241 = scmp.eq.s32.totalorder %s30, 0
      %p242 = por %p240, %p241
      %p243 = scmp.ne.s32.totalorder %s235, %s237
      %p244 = scmp.eq.s32.totalorder %s35, 3
      %p245 = por %p243, %p244
      %p246 = scmp.ne.s32.totalorder %s237, %s238
      %p247 = scmp.eq.s32.totalorder %s35, 0
      %p248 = por %p246, %p247
      %p249 = scmp.ne.s32.totalorder %s237, %s238
      %p250 = scmp.eq.s32.totalorder %s36, 3
      %p251 = por %p249, %p250
      %p253 = scmp.ne.s32.totalorder %s238, %s252
      %p254 = scmp.eq.s32.totalorder %s36, 0
      %p255 = por %p253, %p254
      %s257 = sadd.s32 %s256, 1
      %p260 = scmp.eq.s32.totalorder %s30, 3
      %p261 = scmp.ne.s32.totalorder %s256, %s258
      %p262 = scmp.eq.s32.totalorder %s30, 0
      %p263 = por %p261, %p262
      %p264 = scmp.ne.s32.totalorder %s256, %s258
      %p265 = scmp.eq.s32.totalorder %s35, 3
      %p266 = por %p264, %p265
      %p267 = scmp.ne.s32.totalorder %s258, %s259
      %p268 = scmp.eq.s32.totalorder %s35, 0
      %p269 = por %p267, %p268
      %p270 = scmp.ne.s32.totalorder %s258, %s259
      %p271 = scmp.eq.s32.totalorder %s36, 3
      %p272 = por %p270, %p271
      %p274 = scmp.ne.s32.totalorder %s259, %s273
      %p275 = scmp.eq.s32.totalorder %s36, 0
      %p276 = por %p274, %p275
      %s277 = ssub.s32 %s37, %s49
      %s278 = ssub.s32 %s38, %s45
      %s279 = sor.u32 %s277, %s278
      %p280 = scmp.eq.s32.totalorder %s279, 0
      %s282 = sadd.s32 %s281, 1
      %s283 = scalar_select %p280, %s281, %s282
      %p286 = pneg %p280
      %p287 = scmp.eq.s32.totalorder %s30, 3
      %p288 = por %p286, %p287
      %p289 = scmp.ne.s32.totalorder %s281, %s284
      %p290 = scmp.eq.s32.totalorder %s30, 0
      %p291 = por %p289, %p290
      %p292 = scmp.ne.s32.totalorder %s281, %s284
      %p293 = scmp.eq.s32.totalorder %s35, 3
      %p294 = por %p292, %p293
      %p295 = scmp.ne.s32.totalorder %s284, %s285
      %p296 = scmp.eq.s32.totalorder %s35, 0
      %p297 = por %p295, %p296
      %p298 = scmp.ne.s32.totalorder %s284, %s285
      %p299 = scmp.eq.s32.totalorder %s36, 3
      %p300 = por %p298, %p299
      %p302 = scmp.ne.s32.totalorder %s285, %s301
      %p303 = scmp.eq.s32.totalorder %s36, 0
      %p304 = por %p302, %p303
      %s305 = ssub.s32 %s37, %s49
      %s306 = ssub.s32 %s38, %s45
      %s307 = sor.u32 %s305, %s306
      %p308 = scmp.eq.s32.totalorder %s307, 0
      %s310 = sadd.s32 %s309, 1
      %s311 = scalar_select %p308, %s309, %s310
      %p314 = pneg %p308
      %p315 = scmp.eq.s32.totalorder %s30, 3
      %p316 = por %p314, %p315
      %p317 = scmp.ne.s32.totalorder %s309, %s312
      %p318 = scmp.eq.s32.totalorder %s30, 0
      %p319 = por %p317, %p318
      %p320 = scmp.ne.s32.totalorder %s309, %s312
      %p321 = scmp.eq.s32.totalorder %s35, 3
      %p322 = por %p320, %p321
      %p323 = scmp.ne.s32.totalorder %s312, %s313
      %p324 = scmp.eq.s32.totalorder %s35, 0
      %p325 = por %p323, %p324
      %p326 = scmp.ne.s32.totalorder %s312, %s313
      %p327 = scmp.eq.s32.totalorder %s36, 3
      %p328 = por %p326, %p327
      %p330 = scmp.ne.s32.totalorder %s313, %s329
      %p331 = scmp.eq.s32.totalorder %s36, 0
      %p332 = por %p330, %p331
      %p333 = scmp.le.s32.totalorder 1, %s30
      %p334 = scmp.lt.s32.totalorder %s30, 5
      %p335 = pnand %p333, %p334
      %p336 = pneg %p335
      // Predicated region
      $region9: #{tpu_custom_call.1} parent=5 // pred_check
        _
      $region10: #{tpu_custom_call.1} parent=5 // pred_check_branch
        %338 = sbr.rel (%p335) target = $region12
      $region11: #{tpu_custom_call.1} parent=5 // pred_region
        %s339 = ssub.s32 %s30, 1
        // Predicated region
        $region13: #{tpu_custom_call.1} parent=11 // pred_check
          %p340 = pneg %p227
        $region14: #{tpu_custom_call.1} parent=11 // pred_check_branch
          %342 = sbr.rel (%p340) target = $region16
        $region15: #{tpu_custom_call.1} parent=11 // pred_region
          %344 = vsyncadd [#allocation10], 0
          %s345 = sshll.u32 %s6, 4
          %s346 = int_to_ptr.hbm [resolvable:$true] %s345
          %s347 = sshll.u32 [#allocation9], 4
          %s348 = int_to_ptr.vmem [resolvable:$true] %s347
          %353 = dma.hbm_to_vmem [thread:$0]  %s346, 1024, %s348, [#allocation10], 128, 128, 8
        $region16: #{tpu_custom_call.1} parent=11 // pred_fallthru
          _
        // Predicated region
        $region17: #{tpu_custom_call.1} parent=11 // pred_check
          %p354 = pneg %p248
        $region18: #{tpu_custom_call.1} parent=11 // pred_check_branch
          %356 = sbr.rel (%p354) target = $region20
        $region19: #{tpu_custom_call.1} parent=11 // pred_region
          _
        $region20: #{tpu_custom_call.1} parent=11 // pred_fallthru
          _
        // Predicated region
        $region21: #{tpu_custom_call.1} parent=11 // pred_check
          %p357 = pneg %p269
        $region22: #{tpu_custom_call.1} parent=11 // pred_check_branch
          %359 = sbr.rel (%p357) target = $region24
        $region23: #{tpu_custom_call.1} parent=11 // pred_region
          _
        $region24: #{tpu_custom_call.1} parent=11 // pred_fallthru
          _
      $region12: #{tpu_custom_call.1} parent=5 // pred_fallthru
        _
      %p360 = scmp.lt.s32.totalorder %s30, 4
      // Predicated region
      $region25: #{tpu_custom_call.1} parent=5 // pred_check
        %p361 = pneg %p360
      $region26: #{tpu_custom_call.1} parent=5 // pred_check_branch
        %363 = sbr.rel (%p361) target = $region28
      $region27: #{tpu_custom_call.1} parent=5 // pred_region
        // Predicated region
        $region29: #{tpu_custom_call.1} parent=27 // pred_check
          %p364 = pneg %p64
        $region30: #{tpu_custom_call.1} parent=27 // pred_check_branch
          %366 = sbr.rel (%p364) target = $region32
        $region31: #{tpu_custom_call.1} parent=27 // pred_region
          %s367 = smul.u32 32, %s38
          %p368 = scmp.lt.s32.totalorder %s37, 1
          %s369 = scalar_select %p368, %s37, 1
          %p370 = scmp.lt.s32.totalorder %s367, 63
          %s371 = scalar_select %p370, %s367, 63
          %s372 = smul.addr %s369, 64
          %s373 = sadd.s32 %s371, %s372
          %s374 = smul.addr %s373, 8
          %s375 = scalar_lea.vmem %s0, %s374
          %s376 = smul.u32 32, %s38
        $region32: #{tpu_custom_call.1} parent=27 // pred_fallthru
          _
        // Predicated region
        $region33: #{tpu_custom_call.1} parent=27 // pred_check
          %p377 = pneg %p92
        $region34: #{tpu_custom_call.1} parent=27 // pred_check_branch
          %379 = sbr.rel (%p377) target = $region36
        $region35: #{tpu_custom_call.1} parent=27 // pred_region
          %s380 = smul.u32 32, %s38
          %p381 = scmp.lt.s32.totalorder %s37, 1
          %s382 = scalar_select %p381, %s37, 1
          %p383 = scmp.lt.s32.totalorder %s380, 63
          %s384 = scalar_select %p383, %s380, 63
          %s385 = smul.addr %s382, 64
          %s386 = sadd.s32 %s384, %s385
          %s387 = smul.addr %s386, 8
          %s388 = scalar_lea.vmem %s1, %s387
          %s389 = smul.u32 32, %s38
        $region36: #{tpu_custom_call.1} parent=27 // pred_fallthru
          _
        // Predicated region
        $region37: #{tpu_custom_call.1} parent=27 // pred_check
          %p390 = pneg %p120
        $region38: #{tpu_custom_call.1} parent=27 // pred_check_branch
          %392 = sbr.rel (%p390) target = $region40
        $region39: #{tpu_custom_call.1} parent=27 // pred_region
          %s393 = sand.u32 %s110, 1
          %s394 = scalar_lea.sflag [#allocation4], %s393
          %s395 = sand.u32 %s110, 1
          %s396 = smul.addr %s395, 4
          %s397 = scalar_lea.vmem [#allocation3], %s396
          %399 = vsyncadd %s394, 0
          %s400 = smul.addr %s37, 2
          %s401 = sadd.s32 %s38, %s400
          %s402 = smul.addr %s401, 4
          %s403 = scalar_lea.hbm %s2, %s402
          %s405 = sshll.u32 %s403, 4
          %s406 = int_to_ptr.hbm [resolvable:$true] %s405
          %s407 = sshll.u32 %s397, 4
          %s408 = int_to_ptr.vmem [resolvable:$true] %s407
          %410 = dma.hbm_to_vmem [thread:$0]  %s406, 64, %s408, %s394
        $region40: #{tpu_custom_call.1} parent=27 // pred_fallthru
          _
        // Predicated region
        $region41: #{tpu_custom_call.1} parent=27 // pred_check
          %p411 = pneg %p148
        $region42: #{tpu_custom_call.1} parent=27 // pred_check_branch
          %413 = sbr.rel (%p411) target = $region44
        $region43: #{tpu_custom_call.1} parent=27 // pred_region
          %s414 = sand.u32 %s30, 1
          %s415 = scalar_lea.sflag [#allocation7], %s414
          %s416 = sand.u32 %s138, 1
          %s417 = smul.addr %s416, 4
          %s418 = scalar_lea.vmem [#allocation6], %s417
          %420 = vsyncadd %s415, 0
          %s421 = smul.addr %s37, 2
          %s422 = sadd.s32 %s38, %s421
          %s423 = smul.addr %s422, 4
          %s424 = scalar_lea.hbm %s3, %s423
          %s426 = sshll.u32 %s424, 4
          %s427 = int_to_ptr.hbm [resolvable:$true] %s426
          %s428 = sshll.u32 %s418, 4
          %s429 = int_to_ptr.vmem [resolvable:$true] %s428
          %431 = dma.hbm_to_vmem [thread:$0]  %s427, 64, %s429, %s415
        $region44: #{tpu_custom_call.1} parent=27 // pred_fallthru
          _
        // Predicated region
        $region45: #{tpu_custom_call.1} parent=27 // pred_check
          %p432 = pneg %p174
        $region46: #{tpu_custom_call.1} parent=27 // pred_check_branch
          %434 = sbr.rel (%p432) target = $region48
        $region47: #{tpu_custom_call.1} parent=27 // pred_region
          %p435 = scmp.lt.s32.totalorder %s38, 1
          %s436 = scalar_select %p435, %s38, 1
          %s437 = smul.addr %s436, 32
          %s438 = smul.addr %s437, 8
          %s439 = scalar_lea.vmem %s4, %s438
        $region48: #{tpu_custom_call.1} parent=27 // pred_fallthru
          _
        // Predicated region
        $region49: #{tpu_custom_call.1} parent=27 // pred_check
          %p440 = pneg %p200
        $region50: #{tpu_custom_call.1} parent=27 // pred_check_branch
          %442 = sbr.rel (%p440) target = $region52
        $region51: #{tpu_custom_call.1} parent=27 // pred_region
          %s443 = sand.u32 %s30, 1
          %s444 = scalar_lea.sflag [#allocation7], %s443
          %s445 = sand.u32 %s190, 1
          %s446 = smul.addr %s445, 8
          %s447 = scalar_lea.vmem [#allocation8], %s446
          %449 = vsyncadd %s444, 0
          %s450 = smul.addr %s37, 8
          %s451 = scalar_lea.hbm %s5, %s450
          %s453 = sshll.u32 %s451, 4
          %s454 = int_to_ptr.hbm [resolvable:$true] %s453
          %s455 = sshll.u32 %s447, 4
          %s456 = int_to_ptr.vmem [resolvable:$true] %s455
          %458 = dma.hbm_to_vmem [thread:$0]  %s454, 128, %s456, %s444
        $region52: #{tpu_custom_call.1} parent=27 // pred_fallthru
          _
      $region28: #{tpu_custom_call.1} parent=5 // pred_fallthru
        _
      %p459 = scmp.le.s32.totalorder 1, %s30
      %p460 = scmp.lt.s32.totalorder %s30, 5
      %p461 = pnand %p459, %p460
      %p462 = pneg %p461
      // Predicated region
      $region53: #{tpu_custom_call.1} parent=5 // pred_check
        _
      $region54: #{tpu_custom_call.1} parent=5 // pred_check_branch
        %464 = sbr.rel (%p461) target = $region56
      $region55: #{tpu_custom_call.1} parent=5 // pred_region
        %s465 = ssub.s32 %s30, 1
        %s466 = sand.u32 %s113, 1
        %s467 = scalar_lea.sflag [#allocation4], %s466
        %s468 = sand.u32 %s113, 1
        %s469 = smul.addr %s468, 4
        %s470 = scalar_lea.vmem [#allocation3], %s469
        // Predicated region
        $region57: #{tpu_custom_call.1} parent=55 // pred_check
          %p471 = pneg %p126
        $region58: #{tpu_custom_call.1} parent=55 // pred_check_branch
          %473 = sbr.rel (%p471) target = $region60
        $region59: #{tpu_custom_call.1} parent=55 // pred_region
          %475 = dma.done %s467, 64
        $region60: #{tpu_custom_call.1} parent=55 // pred_fallthru
          _
        %s476 = sand.u32 %s35, 1
        %s477 = scalar_lea.sflag [#allocation7], %s476
        %s478 = sand.u32 %s141, 1
        %s479 = smul.addr %s478, 4
        %s480 = scalar_lea.vmem [#allocation6], %s479
        // Predicated region
        $region61: #{tpu_custom_call.1} parent=55 // pred_check
          %p481 = pneg %p154
        $region62: #{tpu_custom_call.1} parent=55 // pred_check_branch
          %483 = sbr.rel (%p481) target = $region64
        $region63: #{tpu_custom_call.1} parent=55 // pred_region
          %485 = dma.done %s477, 64
        $region64: #{tpu_custom_call.1} parent=55 // pred_fallthru
          _
        %s486 = sand.u32 %s35, 1
        %s487 = scalar_lea.sflag [#allocation7], %s486
        %s488 = sand.u32 %s193, 1
        %s489 = smul.addr %s488, 8
        %s490 = scalar_lea.vmem [#allocation8], %s489
        // Predicated region
        $region65: #{tpu_custom_call.1} parent=55 // pred_check
          %p491 = pneg %p206
        $region66: #{tpu_custom_call.1} parent=55 // pred_check_branch
          %493 = sbr.rel (%p491) target = $region68
        $region67: #{tpu_custom_call.1} parent=55 // pred_region
          %495 = dma.done %s487, 128
        $region68: #{tpu_custom_call.1} parent=55 // pred_fallthru
          _
        // Predicated region
        $region69: #{tpu_custom_call.1} parent=55 // pred_check
          %p496 = pneg %p227
        $region70: #{tpu_custom_call.1} parent=55 // pred_check_branch
          %498 = sbr.rel (%p496) target = $region72
        $region71: #{tpu_custom_call.1} parent=55 // pred_region
          %500 = dma.done [#allocation10], 1024
        $region72: #{tpu_custom_call.1} parent=55 // pred_fallthru
          _
        %s501 = smul.u32 32, %s40
        %p502 = scmp.lt.s32.totalorder %s39, 1
        %s503 = scalar_select %p502, %s39, 1
        %p504 = scmp.lt.s32.totalorder %s501, 63
        %s505 = scalar_select %p504, %s501, 63
        %s506 = smul.addr %s503, 64
        %s507 = sadd.s32 %s505, %s506
        %s508 = smul.addr %s507, 8
        %s509 = scalar_lea.vmem %s0, %s508
        %p510 = pneg %p70
        %p511 = pneg %p67
        %s512 = smul.u32 32, %s40
        %p513 = scmp.lt.s32.totalorder %s39, 1
        %s514 = scalar_select %p513, %s39, 1
        %p515 = scmp.lt.s32.totalorder %s512, 63
        %s516 = scalar_select %p515, %s512, 63
        %s517 = smul.addr %s514, 64
        %s518 = sadd.s32 %s516, %s517
        %s519 = smul.addr %s518, 8
        %s520 = scalar_lea.vmem %s1, %s519
        %p521 = pneg %p98
        %p522 = pneg %p95
        %s523 = sand.u32 %s113, 1
        %s524 = scalar_lea.sflag [#allocation4], %s523
        %s525 = sand.u32 %s113, 1
        %s526 = smul.addr %s525, 4
        %s527 = scalar_lea.vmem [#allocation3], %s526
        %p528 = pneg %p126
        %p529 = pneg %p123
        %s530 = sand.u32 %s35, 1
        %s531 = scalar_lea.sflag [#allocation7], %s530
        %s532 = sand.u32 %s141, 1
        %s533 = smul.addr %s532, 4
        %s534 = scalar_lea.vmem [#allocation6], %s533
        %p535 = pneg %p154
        %p536 = pneg %p151
        %p537 = scmp.lt.s32.totalorder %s40, 1
        %s538 = scalar_select %p537, %s40, 1
        %s539 = smul.addr %s538, 32
        %s540 = smul.addr %s539, 8
        %s541 = scalar_lea.vmem %s4, %s540
        %p542 = pneg %p180
        %p543 = pneg %p177
        %s544 = sand.u32 %s35, 1
        %s545 = scalar_lea.sflag [#allocation7], %s544
        %s546 = sand.u32 %s193, 1
        %s547 = smul.addr %s546, 8
        %s548 = scalar_lea.vmem [#allocation8], %s547
        %p549 = pneg %p206
        %p550 = pneg %p203
        %p551 = pneg %p227
        %p552 = pneg %p224
        %p553 = pneg %p248
        %p554 = pneg %p245
        %p555 = pneg %p269
        %p556 = pneg %p266
        %p557 = pneg %p297
        %p558 = pneg %p294
        %s559 = sand.u32 %s284, 1
        %s560 = scalar_lea.sflag [#allocation5], %s559
        %s561 = sand.u32 %s284, 1
        %s562 = smul.addr %s561, 128
        %s563 = scalar_lea.vmem [#allocation11], %s562
        %p564 = pneg %p325
        %p565 = pneg %p322
        %s566 = sand.u32 %s312, 1
        %s567 = scalar_lea.sflag [#allocation13], %s566
        %s568 = sand.u32 %s312, 1
        %s569 = smul.addr %s568, 128
        %s570 = scalar_lea.vmem [#allocation12], %s569
        %s571 = smul.u32 32, %s40
        %p572 = scmp.lt.s32.totalorder %s39, 1
        %s573 = scalar_select %p572, %s39, 1
        %p574 = scmp.lt.s32.totalorder %s571, 63
        %s575 = scalar_select %p574, %s571, 63
        %s576 = smul.addr %s573, 64
        %s577 = sadd.s32 %s575, %s576
        %s578 = smul.addr %s577, 8
        %s579 = scalar_lea.vmem %s0, %s578
        %s580 = smul.u32 32, %s40
        %s581 = smul.u32 32, %s40
        %p582 = scmp.lt.s32.totalorder %s39, 1
        %s583 = scalar_select %p582, %s39, 1
        %p584 = scmp.lt.s32.totalorder %s581, 63
        %s585 = scalar_select %p584, %s581, 63
        %s586 = smul.addr %s583, 64
        %s587 = sadd.s32 %s585, %s586
        %s588 = smul.addr %s587, 8
        %s589 = scalar_lea.vmem %s1, %s588
        %s590 = smul.u32 32, %s40
        %p591 = scmp.lt.s32.totalorder %s40, 1
        %s592 = scalar_select %p591, %s40, 1
        %s593 = smul.addr %s592, 32
        %s594 = smul.addr %s593, 8
        %s595 = scalar_lea.vmem %s4, %s594
        %s596 = smul.u32 32, %s40
        %s597 = smul.u32 32, %s40
        %v599 = vld [vmem:[%s490] sm:$0xff]
        %v600 = vld [vmem:[%s579] sm:$0xff]
        %v601 = vld [vmem:[%s579 + $0x8] sm:$0xff]
        %v602 = vld [vmem:[%s579 + $0x10] sm:$0xff]
        %v603 = vld [vmem:[%s579 + $0x18] sm:$0xff]
        %v604 = vld [vmem:[%s579 + $0x20] sm:$0xff]
        %v605 = vld [vmem:[%s579 + $0x28] sm:$0xff]
        %v606 = vld [vmem:[%s579 + $0x30] sm:$0xff]
        %v607 = vld [vmem:[%s579 + $0x38] sm:$0xff]
        %v608 = vld [vmem:[%s579 + $0x40] sm:$0xff]
        %v609 = vld [vmem:[%s579 + $0x48] sm:$0xff]
        %v610 = vld [vmem:[%s579 + $0x50] sm:$0xff]
        %v611 = vld [vmem:[%s579 + $0x58] sm:$0xff]
        %v612 = vld [vmem:[%s579 + $0x60] sm:$0xff]
        %v613 = vld [vmem:[%s579 + $0x68] sm:$0xff]
        %v614 = vld [vmem:[%s579 + $0x70] sm:$0xff]
        %v615 = vld [vmem:[%s579 + $0x78] sm:$0xff]
        %v616 = vld [vmem:[%s579 + $0x80] sm:$0xff]
        %v617 = vld [vmem:[%s579 + $0x88] sm:$0xff]
        %v618 = vld [vmem:[%s579 + $0x90] sm:$0xff]
        %v619 = vld [vmem:[%s579 + $0x98] sm:$0xff]
        %v620 = vld [vmem:[%s579 + $0xa0] sm:$0xff]
        %v621 = vld [vmem:[%s579 + $0xa8] sm:$0xff]
        %v622 = vld [vmem:[%s579 + $0xb0] sm:$0xff]
        %v623 = vld [vmem:[%s579 + $0xb8] sm:$0xff]
        %v624 = vld [vmem:[%s579 + $0xc0] sm:$0xff]
        %v625 = vld [vmem:[%s579 + $0xc8] sm:$0xff]
        %v626 = vld [vmem:[%s579 + $0xd0] sm:$0xff]
        %v627 = vld [vmem:[%s579 + $0xd8] sm:$0xff]
        %v628 = vld [vmem:[%s579 + $0xe0] sm:$0xff]
        %v629 = vld [vmem:[%s579 + $0xe8] sm:$0xff]
        %v630 = vld [vmem:[%s579 + $0xf0] sm:$0xff]
        %v631 = vld [vmem:[%s579 + $0xf8] sm:$0xff]
        %v632 = vperm.slane %v599, 0
        %v633 = vadd.f32 %v600, %v632
        %v634 = vadd.f32 %v601, %v632
        %v635 = vadd.f32 %v602, %v632
        %v636 = vadd.f32 %v603, %v632
        %v637 = vadd.f32 %v604, %v632
        %v638 = vadd.f32 %v605, %v632
        %v639 = vadd.f32 %v606, %v632
        %v640 = vadd.f32 %v607, %v632
        %v641 = vadd.f32 %v608, %v632
        %v642 = vadd.f32 %v609, %v632
        %v643 = vadd.f32 %v610, %v632
        %v644 = vadd.f32 %v611, %v632
        %v645 = vadd.f32 %v612, %v632
        %v646 = vadd.f32 %v613, %v632
        %v647 = vadd.f32 %v614, %v632
        %v648 = vadd.f32 %v615, %v632
        %v649 = vadd.f32 %v616, %v632
        %v650 = vadd.f32 %v617, %v632
        %v651 = vadd.f32 %v618, %v632
        %v652 = vadd.f32 %v619, %v632
        %v653 = vadd.f32 %v620, %v632
        %v654 = vadd.f32 %v621, %v632
        %v655 = vadd.f32 %v622, %v632
        %v656 = vadd.f32 %v623, %v632
        %v657 = vadd.f32 %v624, %v632
        %v658 = vadd.f32 %v625, %v632
        %v659 = vadd.f32 %v626, %v632
        %v660 = vadd.f32 %v627, %v632
        %v661 = vadd.f32 %v628, %v632
        %v662 = vadd.f32 %v629, %v632
        %v663 = vadd.f32 %v630, %v632
        %v664 = vadd.f32 %v631, %v632
        %v665 = vld [vmem:[%s470] sm:$0xf]
        %v666 = vpack.c.bf16 %v665, %v665
        %v668 = vrot.slane %v666, 6
        %670 = vst [vmem:[#allocation2] sm:$0xc] %v668
        %v671 = vpack.c.bf16 %v633, %v633
        %v672 = vpack.c.bf16 %v634, %v634
        %v673 = vpack.c.bf16 %v635, %v635
        %v674 = vpack.c.bf16 %v636, %v636
        %v675 = vpack.c.bf16 %v637, %v637
        %v676 = vpack.c.bf16 %v638, %v638
        %v677 = vpack.c.bf16 %v639, %v639
        %v678 = vpack.c.bf16 %v640, %v640
        %v679 = vpack.c.bf16 %v641, %v641
        %v680 = vpack.c.bf16 %v642, %v642
        %v681 = vpack.c.bf16 %v643, %v643
        %v682 = vpack.c.bf16 %v644, %v644
        %v683 = vpack.c.bf16 %v645, %v645
        %v684 = vpack.c.bf16 %v646, %v646
        %v685 = vpack.c.bf16 %v647, %v647
        %v686 = vpack.c.bf16 %v648, %v648
        %v687 = vpack.c.bf16 %v649, %v649
        %v688 = vpack.c.bf16 %v650, %v650
        %v689 = vpack.c.bf16 %v651, %v651
        %v690 = vpack.c.bf16 %v652, %v652
        %v691 = vpack.c.bf16 %v653, %v653
        %v692 = vpack.c.bf16 %v654, %v654
        %v693 = vpack.c.bf16 %v655, %v655
        %v694 = vpack.c.bf16 %v656, %v656
        %v695 = vpack.c.bf16 %v657, %v657
        %v696 = vpack.c.bf16 %v658, %v658
        %v697 = vpack.c.bf16 %v659, %v659
        %v698 = vpack.c.bf16 %v660, %v660
        %v699 = vpack.c.bf16 %v661, %v661
        %v700 = vpack.c.bf16 %v662, %v662
        %v701 = vpack.c.bf16 %v663, %v663
        %v702 = vpack.c.bf16 %v664, %v664
        %703 = vst [vmem:[#allocation2 + $0x4] sm:$0xf] %v671
        %704 = vst [vmem:[#allocation2 + $0x8] sm:$0xf] %v672
        %705 = vst [vmem:[#allocation2 + $0xc] sm:$0xf] %v673
        %706 = vst [vmem:[#allocation2 + $0x10] sm:$0xf] %v674
        %707 = vst [vmem:[#allocation2 + $0x14] sm:$0xf] %v675
        %708 = vst [vmem:[#allocation2 + $0x18] sm:$0xf] %v676
        %709 = vst [vmem:[#allocation2 + $0x1c] sm:$0xf] %v677
        %710 = vst [vmem:[#allocation2 + $0x20] sm:$0xf] %v678
        %711 = vst [vmem:[#allocation2 + $0x24] sm:$0xf] %v679
        %712 = vst [vmem:[#allocation2 + $0x28] sm:$0xf] %v680
        %713 = vst [vmem:[#allocation2 + $0x2c] sm:$0xf] %v681
        %714 = vst [vmem:[#allocation2 + $0x30] sm:$0xf] %v682
        %715 = vst [vmem:[#allocation2 + $0x34] sm:$0xf] %v683
        %716 = vst [vmem:[#allocation2 + $0x38] sm:$0xf] %v684
        %717 = vst [vmem:[#allocation2 + $0x3c] sm:$0xf] %v685
        %718 = vst [vmem:[#allocation2 + $0x40] sm:$0xf] %v686
        %719 = vst [vmem:[#allocation2 + $0x44] sm:$0xf] %v687
        %720 = vst [vmem:[#allocation2 + $0x48] sm:$0xf] %v688
        %721 = vst [vmem:[#allocation2 + $0x4c] sm:$0xf] %v689
        %722 = vst [vmem:[#allocation2 + $0x50] sm:$0xf] %v690
        %723 = vst [vmem:[#allocation2 + $0x54] sm:$0xf] %v691
        %724 = vst [vmem:[#allocation2 + $0x58] sm:$0xf] %v692
        %725 = vst [vmem:[#allocation2 + $0x5c] sm:$0xf] %v693
        %726 = vst [vmem:[#allocation2 + $0x60] sm:$0xf] %v694
        %727 = vst [vmem:[#allocation2 + $0x64] sm:$0xf] %v695
        %728 = vst [vmem:[#allocation2 + $0x68] sm:$0xf] %v696
        %729 = vst [vmem:[#allocation2 + $0x6c] sm:$0xf] %v697
        %730 = vst [vmem:[#allocation2 + $0x70] sm:$0xf] %v698
        %731 = vst [vmem:[#allocation2 + $0x74] sm:$0xf] %v699
        %732 = vst [vmem:[#allocation2 + $0x78] sm:$0xf] %v700
        %733 = vst [vmem:[#allocation2 + $0x7c] sm:$0xf] %v701
        %734 = vst [vmem:[#allocation2 + $0x80] sm:$0xf] %v702
        %v735 = vld [vmem:[%s480] sm:$0xf]
        %v736 = vpack.c.bf16 %v735, %v735
        %737 = vst [vmem:[#allocation2 + $0x84] sm:$0x3] %v736
        %v738 = vld [vmem:[#allocation2] sm:$0xc]
        %v739 = vld [vmem:[#allocation2 + $0x4] sm:$0xf]
        %v740 = vld [vmem:[#allocation2 + $0x8] sm:$0xf]
        %v741 = vld [vmem:[#allocation2 + $0xc] sm:$0xf]
        %v742 = vld [vmem:[#allocation2 + $0x10] sm:$0xf]
        %v743 = vld [vmem:[#allocation2 + $0x14] sm:$0xf]
        %v744 = vld [vmem:[#allocation2 + $0x18] sm:$0xf]
        %v745 = vld [vmem:[#allocation2 + $0x1c] sm:$0xf]
        %v746 = vld [vmem:[#allocation2 + $0x20] sm:$0xf]
        %v747 = vld [vmem:[#allocation2 + $0x24] sm:$0xf]
        %v748 = vld [vmem:[#allocation2 + $0x28] sm:$0xf]
        %v749 = vld [vmem:[#allocation2 + $0x2c] sm:$0xf]
        %v750 = vld [vmem:[#allocation2 + $0x30] sm:$0xf]
        %v751 = vld [vmem:[#allocation2 + $0x34] sm:$0xf]
        %v752 = vld [vmem:[#allocation2 + $0x38] sm:$0xf]
        %v753 = vld [vmem:[#allocation2 + $0x3c] sm:$0xf]
        %v754 = vld [vmem:[#allocation2 + $0x40] sm:$0xf]
        %v755 = vld [vmem:[#allocation2 + $0x44] sm:$0xf]
        %v756 = vld [vmem:[#allocation2 + $0x48] sm:$0xf]
        %v757 = vld [vmem:[#allocation2 + $0x4c] sm:$0xf]
        %v758 = vld [vmem:[#allocation2 + $0x50] sm:$0xf]
        %v759 = vld [vmem:[#allocation2 + $0x54] sm:$0xf]
        %v760 = vld [vmem:[#allocation2 + $0x58] sm:$0xf]
        %v761 = vld [vmem:[#allocation2 + $0x5c] sm:$0xf]
        %v762 = vld [vmem:[#allocation2 + $0x60] sm:$0xf]
        %v763 = vld [vmem:[#allocation2 + $0x64] sm:$0xf]
        %v764 = vld [vmem:[#allocation2 + $0x68] sm:$0xf]
        %v765 = vld [vmem:[#allocation2 + $0x6c] sm:$0xf]
        %v766 = vld [vmem:[#allocation2 + $0x70] sm:$0xf]
        %v767 = vld [vmem:[#allocation2 + $0x74] sm:$0xf]
        %v768 = vld [vmem:[#allocation2 + $0x78] sm:$0xf]
        %v769 = vld [vmem:[#allocation2 + $0x7c] sm:$0xf]
        %v770 = vld [vmem:[#allocation2 + $0x80] sm:$0x3]
        %v771 = vld [vmem:[#allocation2 + $0x80] sm:$0xf]
        %v772 = vld [vmem:[#allocation2 + $0x4] sm:$0xc]
        %v773 = vld [vmem:[#allocation2 + $0x8] sm:$0xf]
        %v774 = vld [vmem:[#allocation2 + $0xc] sm:$0xf]
        %v775 = vld [vmem:[#allocation2 + $0x10] sm:$0xf]
        %v776 = vld [vmem:[#allocation2 + $0x14] sm:$0xf]
        %v777 = vld [vmem:[#allocation2 + $0x18] sm:$0xf]
        %v778 = vld [vmem:[#allocation2 + $0x1c] sm:$0xf]
        %v779 = vld [vmem:[#allocation2 + $0x20] sm:$0xf]
        %v780 = vld [vmem:[#allocation2 + $0x24] sm:$0xf]
        %v781 = vld [vmem:[#allocation2 + $0x28] sm:$0xf]
        %v782 = vld [vmem:[#allocation2 + $0x2c] sm:$0xf]
        %v783 = vld [vmem:[#allocation2 + $0x30] sm:$0xf]
        %v784 = vld [vmem:[#allocation2 + $0x34] sm:$0xf]
        %v785 = vld [vmem:[#allocation2 + $0x38] sm:$0xf]
        %v786 = vld [vmem:[#allocation2 + $0x3c] sm:$0xf]
        %v787 = vld [vmem:[#allocation2 + $0x40] sm:$0xf]
        %v788 = vld [vmem:[#allocation2 + $0x44] sm:$0xf]
        %v789 = vld [vmem:[#allocation2 + $0x48] sm:$0xf]
        %v790 = vld [vmem:[#allocation2 + $0x4c] sm:$0xf]
        %v791 = vld [vmem:[#allocation2 + $0x50] sm:$0xf]
        %v792 = vld [vmem:[#allocation2 + $0x54] sm:$0xf]
        %v793 = vld [vmem:[#allocation2 + $0x58] sm:$0xf]
        %v794 = vld [vmem:[#allocation2 + $0x5c] sm:$0xf]
        %v795 = vld [vmem:[#allocation2 + $0x60] sm:$0xf]
        %v796 = vld [vmem:[#allocation2 + $0x64] sm:$0xf]
        %v797 = vld [vmem:[#allocation2 + $0x68] sm:$0xf]
        %v798 = vld [vmem:[#allocation2 + $0x6c] sm:$0xf]
        %v799 = vld [vmem:[#allocation2 + $0x70] sm:$0xf]
        %v800 = vld [vmem:[#allocation2 + $0x74] sm:$0xf]
        %v801 = vld [vmem:[#allocation2 + $0x78] sm:$0xf]
        %v802 = vld [vmem:[#allocation2 + $0x7c] sm:$0xf]
        %v803 = vld [vmem:[#allocation2 + $0x80] sm:$0xf]
        %v804 = vld [vmem:[#allocation2 + $0x84] sm:$0x3]
        %v805 = vld [vmem:[%s7] sm:$0xff]
        %v806 = vld [vmem:[%s7 + $0x8] sm:$0xff]
        %v807 = vld [vmem:[%s7 + $0x10] sm:$0xff]
        %v808 = vld [vmem:[%s7 + $0x18] sm:$0xff]
        %v809 = vld [vmem:[%s7 + $0x20] sm:$0xff]
        %v810 = vld [vmem:[%s7 + $0x28] sm:$0xff]
        %v811 = vld [vmem:[%s7 + $0x30] sm:$0xff]
        %v812 = vld [vmem:[%s7 + $0x38] sm:$0xff]
        %v813 = vld [vmem:[%s7 + $0x40] sm:$0xff]
        %v814 = vld [vmem:[%s7 + $0x48] sm:$0xff]
        %v815 = vld [vmem:[%s7 + $0x50] sm:$0xff]
        %v816 = vld [vmem:[%s7 + $0x58] sm:$0xff]
        %v817 = vld [vmem:[%s7 + $0x60] sm:$0xff]
        %v818 = vld [vmem:[%s7 + $0x68] sm:$0xff]
        %v819 = vld [vmem:[%s7 + $0x70] sm:$0xff]
        %v820 = vld [vmem:[%s7 + $0x78] sm:$0xff]
        %s821 = scalar_lea.vmem %s7, 128
        %v822 = vld [vmem:[%s821] sm:$0xff]
        %v823 = vld [vmem:[%s821 + $0x8] sm:$0xff]
        %v824 = vld [vmem:[%s821 + $0x10] sm:$0xff]
        %v825 = vld [vmem:[%s821 + $0x18] sm:$0xff]
        %v826 = vld [vmem:[%s821 + $0x20] sm:$0xff]
        %v827 = vld [vmem:[%s821 + $0x28] sm:$0xff]
        %v828 = vld [vmem:[%s821 + $0x30] sm:$0xff]
        %v829 = vld [vmem:[%s821 + $0x38] sm:$0xff]
        %v830 = vld [vmem:[%s821 + $0x40] sm:$0xff]
        %v831 = vld [vmem:[%s821 + $0x48] sm:$0xff]
        %v832 = vld [vmem:[%s821 + $0x50] sm:$0xff]
        %v833 = vld [vmem:[%s821 + $0x58] sm:$0xff]
        %v834 = vld [vmem:[%s821 + $0x60] sm:$0xff]
        %v835 = vld [vmem:[%s821 + $0x68] sm:$0xff]
        %v836 = vld [vmem:[%s821 + $0x70] sm:$0xff]
        %v837 = vld [vmem:[%s821 + $0x78] sm:$0xff]
        %v870 = vunpack.c.l.b16 %v739
        %v871 = vunpack.c.l.b16 %v740
        %v872 = vunpack.c.l.b16 %v741
        %v873 = vunpack.c.l.b16 %v742
        %v874 = vunpack.c.l.b16 %v743
        %v875 = vunpack.c.l.b16 %v744
        %v876 = vunpack.c.l.b16 %v745
        %v877 = vunpack.c.l.b16 %v746
        %v878 = vunpack.c.l.b16 %v747
        %v879 = vunpack.c.l.b16 %v748
        %v880 = vunpack.c.l.b16 %v749
        %v881 = vunpack.c.l.b16 %v750
        %v882 = vunpack.c.l.b16 %v751
        %v883 = vunpack.c.l.b16 %v752
        %v884 = vunpack.c.l.b16 %v753
        %v885 = vunpack.c.l.b16 %v754
        %v886 = vunpack.c.l.b16 %v755
        %v887 = vunpack.c.l.b16 %v756
        %v888 = vunpack.c.l.b16 %v757
        %v889 = vunpack.c.l.b16 %v758
        %v890 = vunpack.c.l.b16 %v759
        %v891 = vunpack.c.l.b16 %v760
        %v892 = vunpack.c.l.b16 %v761
        %v893 = vunpack.c.l.b16 %v762
        %v894 = vunpack.c.l.b16 %v763
        %v895 = vunpack.c.l.b16 %v764
        %v896 = vunpack.c.l.b16 %v765
        %v897 = vunpack.c.l.b16 %v766
        %v898 = vunpack.c.l.b16 %v767
        %v899 = vunpack.c.l.b16 %v768
        %v900 = vunpack.c.l.b16 %v769
        %v901 = vunpack.c.l.b16 %v771
        %v902 = vpack.c.b16 %v871, %v870
        %v903 = vpack.c.b16 %v873, %v872
        %v904 = vpack.c.b16 %v875, %v874
        %v905 = vpack.c.b16 %v877, %v876
        %v906 = vpack.c.b16 %v879, %v878
        %v907 = vpack.c.b16 %v881, %v880
        %v908 = vpack.c.b16 %v883, %v882
        %v909 = vpack.c.b16 %v885, %v884
        %v910 = vpack.c.b16 %v887, %v886
        %v911 = vpack.c.b16 %v889, %v888
        %v912 = vpack.c.b16 %v891, %v890
        %v913 = vpack.c.b16 %v893, %v892
        %v914 = vpack.c.b16 %v895, %v894
        %v915 = vpack.c.b16 %v897, %v896
        %v916 = vpack.c.b16 %v899, %v898
        %v917 = vpack.c.b16 %v901, %v900
        %v950 = vunpack.c.l.b16 %v822
        %v951 = vunpack.c.h.b16 %v822
        %v952 = vunpack.c.l.b16 %v823
        %v953 = vunpack.c.h.b16 %v823
        %v954 = vunpack.c.l.b16 %v824
        %v955 = vunpack.c.h.b16 %v824
        %v956 = vunpack.c.l.b16 %v825
        %v957 = vunpack.c.h.b16 %v825
        %v958 = vunpack.c.l.b16 %v826
        %v959 = vunpack.c.h.b16 %v826
        %v960 = vunpack.c.l.b16 %v827
        %v961 = vunpack.c.h.b16 %v827
        %v962 = vunpack.c.l.b16 %v828
        %v963 = vunpack.c.h.b16 %v828
        %v964 = vunpack.c.l.b16 %v829
        %v965 = vunpack.c.h.b16 %v829
        %v966 = vunpack.c.l.b16 %v830
        %v967 = vunpack.c.h.b16 %v830
        %v968 = vunpack.c.l.b16 %v831
        %v969 = vunpack.c.h.b16 %v831
        %v970 = vunpack.c.l.b16 %v832
        %v971 = vunpack.c.h.b16 %v832
        %v972 = vunpack.c.l.b16 %v833
        %v973 = vunpack.c.h.b16 %v833
        %v974 = vunpack.c.l.b16 %v834
        %v975 = vunpack.c.h.b16 %v834
        %v976 = vunpack.c.l.b16 %v835
        %v977 = vunpack.c.h.b16 %v835
        %v978 = vunpack.c.l.b16 %v836
        %v979 = vunpack.c.h.b16 %v836
        %v980 = vunpack.c.l.b16 %v837
        %v981 = vunpack.c.h.b16 %v837
        %v982 = vpack.c.b16 %v952, %v950
        %v983 = vpack.c.b16 %v953, %v951
        %v984 = vpack.c.b16 %v956, %v954
        %v985 = vpack.c.b16 %v957, %v955
        %v986 = vpack.c.b16 %v960, %v958
        %v987 = vpack.c.b16 %v961, %v959
        %v988 = vpack.c.b16 %v964, %v962
        %v989 = vpack.c.b16 %v965, %v963
        %v990 = vpack.c.b16 %v968, %v966
        %v991 = vpack.c.b16 %v969, %v967
        %v992 = vpack.c.b16 %v972, %v970
        %v993 = vpack.c.b16 %v973, %v971
        %v994 = vpack.c.b16 %v976, %v974
        %v995 = vpack.c.b16 %v977, %v975
        %v996 = vpack.c.b16 %v980, %v978
        %v997 = vpack.c.b16 %v981, %v979
        %1014 = vmatpush.bf16.msra.mxu0 %v996
        %1015 = vmatpush.bf16.msra.mxu0 %v994
        %1016 = vmatpush.bf16.msra.mxu0 %v992
        %1017 = vmatpush.bf16.msra.mxu0 %v990
        %1018 = vmatpush.bf16.msra.mxu0 %v988
        %1019 = vmatpush.bf16.msra.mxu0 %v986
        %1020 = vmatpush.bf16.msra.mxu0 %v984
        %1021 = vmatpush.bf16.msra.mxu0 %v982
        %1022 = vmatmul.bf16.gmra.mxu0 %v902
        %v1023 = vpop.f32.mrf.mxu0
        %v1024 = vadd.f32 0.0, %v1023
        %v1025 = vpop.f32.mrf.mxu0
        %v1026 = vadd.f32 0.0, %v1025
        %1027 = vmatmul.bf16.gmra.mxu0 %v903
        %v1028 = vpop.f32.mrf.mxu0
        %v1029 = vadd.f32 0.0, %v1028
        %v1030 = vpop.f32.mrf.mxu0
        %v1031 = vadd.f32 0.0, %v1030
        %1032 = vmatmul.bf16.gmra.mxu0 %v904
        %v1033 = vpop.f32.mrf.mxu0
        %v1034 = vadd.f32 0.0, %v1033
        %v1035 = vpop.f32.mrf.mxu0
        %v1036 = vadd.f32 0.0, %v1035
        %1037 = vmatmul.bf16.gmra.mxu0 %v905
        %v1038 = vpop.f32.mrf.mxu0
        %v1039 = vadd.f32 0.0, %v1038
        %v1040 = vpop.f32.mrf.mxu0
        %v1041 = vadd.f32 0.0, %v1040
        %1042 = vmatmul.bf16.gmra.mxu0 %v906
        %v1043 = vpop.f32.mrf.mxu0
        %v1044 = vadd.f32 0.0, %v1043
        %v1045 = vpop.f32.mrf.mxu0
        %v1046 = vadd.f32 0.0, %v1045
        %1047 = vmatmul.bf16.gmra.mxu0 %v907
        %v1048 = vpop.f32.mrf.mxu0
        %v1049 = vadd.f32 0.0, %v1048
        %v1050 = vpop.f32.mrf.mxu0
        %v1051 = vadd.f32 0.0, %v1050
        %1052 = vmatmul.bf16.gmra.mxu0 %v908
        %v1053 = vpop.f32.mrf.mxu0
        %v1054 = vadd.f32 0.0, %v1053
        %v1055 = vpop.f32.mrf.mxu0
        %v1056 = vadd.f32 0.0, %v1055
        %1057 = vmatmul.bf16.gmra.mxu0 %v909
        %v1058 = vpop.f32.mrf.mxu0
        %v1059 = vadd.f32 0.0, %v1058
        %v1060 = vpop.f32.mrf.mxu0
        %v1061 = vadd.f32 0.0, %v1060
        %1062 = vmatmul.bf16.gmra.mxu0 %v910
        %v1063 = vpop.f32.mrf.mxu0
        %v1064 = vadd.f32 0.0, %v1063
        %v1065 = vpop.f32.mrf.mxu0
        %v1066 = vadd.f32 0.0, %v1065
        %1067 = vmatmul.bf16.gmra.mxu0 %v911
        %v1068 = vpop.f32.mrf.mxu0
        %v1069 = vadd.f32 0.0, %v1068
        %v1070 = vpop.f32.mrf.mxu0
        %v1071 = vadd.f32 0.0, %v1070
        %1072 = vmatmul.bf16.gmra.mxu0 %v912
        %v1073 = vpop.f32.mrf.mxu0
        %v1074 = vadd.f32 0.0, %v1073
        %v1075 = vpop.f32.mrf.mxu0
        %v1076 = vadd.f32 0.0, %v1075
        %1077 = vmatmul.bf16.gmra.mxu0 %v913
        %v1078 = vpop.f32.mrf.mxu0
        %v1079 = vadd.f32 0.0, %v1078
        %v1080 = vpop.f32.mrf.mxu0
        %v1081 = vadd.f32 0.0, %v1080
        %1082 = vmatmul.bf16.gmra.mxu0 %v914
        %v1083 = vpop.f32.mrf.mxu0
        %v1084 = vadd.f32 0.0, %v1083
        %v1085 = vpop.f32.mrf.mxu0
        %v1086 = vadd.f32 0.0, %v1085
        %1087 = vmatmul.bf16.gmra.mxu0 %v915
        %v1088 = vpop.f32.mrf.mxu0
        %v1089 = vadd.f32 0.0, %v1088
        %v1090 = vpop.f32.mrf.mxu0
        %v1091 = vadd.f32 0.0, %v1090
        %1092 = vmatmul.bf16.gmra.mxu0 %v916
        %v1093 = vpop.f32.mrf.mxu0
        %v1094 = vadd.f32 0.0, %v1093
        %v1095 = vpop.f32.mrf.mxu0
        %v1096 = vadd.f32 0.0, %v1095
        %1097 = vmatmul.bf16.gmra.mxu0 %v917
        %v1098 = vpop.f32.mrf.mxu0
        %v1099 = vadd.f32 0.0, %v1098
        %v1100 = vpop.f32.mrf.mxu0
        %v1101 = vadd.f32 0.0, %v1100
        %1102 = vdwg.mxu0
        %1103 = vmatpush.bf16.msra.mxu0 %v997
        %1104 = vmatpush.bf16.msra.mxu0 %v995
        %1105 = vmatpush.bf16.msra.mxu0 %v993
        %1106 = vmatpush.bf16.msra.mxu0 %v991
        %1107 = vmatpush.bf16.msra.mxu0 %v989
        %1108 = vmatpush.bf16.msra.mxu0 %v987
        %1109 = vmatpush.bf16.msra.mxu0 %v985
        %1110 = vmatpush.bf16.msra.mxu0 %v983
        %1111 = vmatmul.bf16.gmra.mxu0 %v902
        %v1112 = vpop.f32.mrf.mxu0
        %v1113 = vadd.f32 0.0, %v1112
        %v1114 = vpop.f32.mrf.mxu0
        %v1115 = vadd.f32 0.0, %v1114
        %1116 = vmatmul.bf16.gmra.mxu0 %v903
        %v1117 = vpop.f32.mrf.mxu0
        %v1118 = vadd.f32 0.0, %v1117
        %v1119 = vpop.f32.mrf.mxu0
        %v1120 = vadd.f32 0.0, %v1119
        %1121 = vmatmul.bf16.gmra.mxu0 %v904
        %v1122 = vpop.f32.mrf.mxu0
        %v1123 = vadd.f32 0.0, %v1122
        %v1124 = vpop.f32.mrf.mxu0
        %v1125 = vadd.f32 0.0, %v1124
        %1126 = vmatmul.bf16.gmra.mxu0 %v905
        %v1127 = vpop.f32.mrf.mxu0
        %v1128 = vadd.f32 0.0, %v1127
        %v1129 = vpop.f32.mrf.mxu0
        %v1130 = vadd.f32 0.0, %v1129
        %1131 = vmatmul.bf16.gmra.mxu0 %v906
        %v1132 = vpop.f32.mrf.mxu0
        %v1133 = vadd.f32 0.0, %v1132
        %v1134 = vpop.f32.mrf.mxu0
        %v1135 = vadd.f32 0.0, %v1134
        %1136 = vmatmul.bf16.gmra.mxu0 %v907
        %v1137 = vpop.f32.mrf.mxu0
        %v1138 = vadd.f32 0.0, %v1137
        %v1139 = vpop.f32.mrf.mxu0
        %v1140 = vadd.f32 0.0, %v1139
        %1141 = vmatmul.bf16.gmra.mxu0 %v908
        %v1142 = vpop.f32.mrf.mxu0
        %v1143 = vadd.f32 0.0, %v1142
        %v1144 = vpop.f32.mrf.mxu0
        %v1145 = vadd.f32 0.0, %v1144
        %1146 = vmatmul.bf16.gmra.mxu0 %v909
        %v1147 = vpop.f32.mrf.mxu0
        %v1148 = vadd.f32 0.0, %v1147
        %v1149 = vpop.f32.mrf.mxu0
        %v1150 = vadd.f32 0.0, %v1149
        %1151 = vmatmul.bf16.gmra.mxu0 %v910
        %v1152 = vpop.f32.mrf.mxu0
        %v1153 = vadd.f32 0.0, %v1152
        %v1154 = vpop.f32.mrf.mxu0
        %v1155 = vadd.f32 0.0, %v1154
        %1156 = vmatmul.bf16.gmra.mxu0 %v911
        %v1157 = vpop.f32.mrf.mxu0
        %v1158 = vadd.f32 0.0, %v1157
        %v1159 = vpop.f32.mrf.mxu0
        %v1160 = vadd.f32 0.0, %v1159
        %1161 = vmatmul.bf16.gmra.mxu0 %v912
        %v1162 = vpop.f32.mrf.mxu0
        %v1163 = vadd.f32 0.0, %v1162
        %v1164 = vpop.f32.mrf.mxu0
        %v1165 = vadd.f32 0.0, %v1164
        %1166 = vmatmul.bf16.gmra.mxu0 %v913
        %v1167 = vpop.f32.mrf.mxu0
        %v1168 = vadd.f32 0.0, %v1167
        %v1169 = vpop.f32.mrf.mxu0
        %v1170 = vadd.f32 0.0, %v1169
        %1171 = vmatmul.bf16.gmra.mxu0 %v914
        %v1172 = vpop.f32.mrf.mxu0
        %v1173 = vadd.f32 0.0, %v1172
        %v1174 = vpop.f32.mrf.mxu0
        %v1175 = vadd.f32 0.0, %v1174
        %1176 = vmatmul.bf16.gmra.mxu0 %v915
        %v1177 = vpop.f32.mrf.mxu0
        %v1178 = vadd.f32 0.0, %v1177
        %v1179 = vpop.f32.mrf.mxu0
        %v1180 = vadd.f32 0.0, %v1179
        %1181 = vmatmul.bf16.gmra.mxu0 %v916
        %v1182 = vpop.f32.mrf.mxu0
        %v1183 = vadd.f32 0.0, %v1182
        %v1184 = vpop.f32.mrf.mxu0
        %v1185 = vadd.f32 0.0, %v1184
        %1186 = vmatmul.bf16.gmra.mxu0 %v917
        %v1187 = vpop.f32.mrf.mxu0
        %v1188 = vadd.f32 0.0, %v1187
        %v1189 = vpop.f32.mrf.mxu0
        %v1190 = vadd.f32 0.0, %v1189
        %1191 = vdwg.mxu0
        %v1194 = vunpack.c.l.b16 %v738
        %v1195 = vunpack.c.l.b16 %v770
        %v1196 = vpack.c.b16 %v870, %v1194
        %v1197 = vpack.c.b16 %v872, %v871
        %v1198 = vpack.c.b16 %v874, %v873
        %v1199 = vpack.c.b16 %v876, %v875
        %v1200 = vpack.c.b16 %v878, %v877
        %v1201 = vpack.c.b16 %v880, %v879
        %v1202 = vpack.c.b16 %v882, %v881
        %v1203 = vpack.c.b16 %v884, %v883
        %v1204 = vpack.c.b16 %v886, %v885
        %v1205 = vpack.c.b16 %v888, %v887
        %v1206 = vpack.c.b16 %v890, %v889
        %v1207 = vpack.c.b16 %v892, %v891
        %v1208 = vpack.c.b16 %v894, %v893
        %v1209 = vpack.c.b16 %v896, %v895
        %v1210 = vpack.c.b16 %v898, %v897
        %v1211 = vpack.c.b16 %v900, %v899
        %v1212 = vpack.c.b16 %v1195, %v1195
        %vm1213 = vcmask 1045504
        %v1214 = vrot.slane %v1196, 2
        %v1215 = vrot.slane %v1197, 2
        %v1216 = vsel %vm1213, %v1214, %v1215
        %v1217 = vrot.slane %v1198, 2
        %v1218 = vsel %vm1213, %v1215, %v1217
        %v1219 = vrot.slane %v1199, 2
        %v1220 = vsel %vm1213, %v1217, %v1219
        %v1221 = vrot.slane %v1200, 2
        %v1222 = vsel %vm1213, %v1219, %v1221
        %v1223 = vrot.slane %v1201, 2
        %v1224 = vsel %vm1213, %v1221, %v1223
        %v1225 = vrot.slane %v1202, 2
        %v1226 = vsel %vm1213, %v1223, %v1225
        %v1227 = vrot.slane %v1203, 2
        %v1228 = vsel %vm1213, %v1225, %v1227
        %v1229 = vrot.slane %v1204, 2
        %v1230 = vsel %vm1213, %v1227, %v1229
        %v1231 = vrot.slane %v1205, 2
        %v1232 = vsel %vm1213, %v1229, %v1231
        %v1233 = vrot.slane %v1206, 2
        %v1234 = vsel %vm1213, %v1231, %v1233
        %v1235 = vrot.slane %v1207, 2
        %v1236 = vsel %vm1213, %v1233, %v1235
        %v1237 = vrot.slane %v1208, 2
        %v1238 = vsel %vm1213, %v1235, %v1237
        %v1239 = vrot.slane %v1209, 2
        %v1240 = vsel %vm1213, %v1237, %v1239
        %v1241 = vrot.slane %v1210, 2
        %v1242 = vsel %vm1213, %v1239, %v1241
        %v1243 = vrot.slane %v1211, 2
        %v1244 = vsel %vm1213, %v1241, %v1243
        %v1245 = vrot.slane %v1212, 2
        %v1246 = vsel %vm1213, %v1243, %v1245
        %v1279 = vunpack.c.l.b16 %v805
        %v1280 = vunpack.c.h.b16 %v805
        %v1281 = vunpack.c.l.b16 %v806
        %v1282 = vunpack.c.h.b16 %v806
        %v1283 = vunpack.c.l.b16 %v807
        %v1284 = vunpack.c.h.b16 %v807
        %v1285 = vunpack.c.l.b16 %v808
        %v1286 = vunpack.c.h.b16 %v808
        %v1287 = vunpack.c.l.b16 %v809
        %v1288 = vunpack.c.h.b16 %v809
        %v1289 = vunpack.c.l.b16 %v810
        %v1290 = vunpack.c.h.b16 %v810
        %v1291 = vunpack.c.l.b16 %v811
        %v1292 = vunpack.c.h.b16 %v811
        %v1293 = vunpack.c.l.b16 %v812
        %v1294 = vunpack.c.h.b16 %v812
        %v1295 = vunpack.c.l.b16 %v813
        %v1296 = vunpack.c.h.b16 %v813
        %v1297 = vunpack.c.l.b16 %v814
        %v1298 = vunpack.c.h.b16 %v814
        %v1299 = vunpack.c.l.b16 %v815
        %v1300 = vunpack.c.h.b16 %v815
        %v1301 = vunpack.c.l.b16 %v816
        %v1302 = vunpack.c.h.b16 %v816
        %v1303 = vunpack.c.l.b16 %v817
        %v1304 = vunpack.c.h.b16 %v817
        %v1305 = vunpack.c.l.b16 %v818
        %v1306 = vunpack.c.h.b16 %v818
        %v1307 = vunpack.c.l.b16 %v819
        %v1308 = vunpack.c.h.b16 %v819
        %v1309 = vunpack.c.l.b16 %v820
        %v1310 = vunpack.c.h.b16 %v820
        %v1311 = vpack.c.b16 %v1281, %v1279
        %v1312 = vpack.c.b16 %v1282, %v1280
        %v1313 = vpack.c.b16 %v1285, %v1283
        %v1314 = vpack.c.b16 %v1286, %v1284
        %v1315 = vpack.c.b16 %v1289, %v1287
        %v1316 = vpack.c.b16 %v1290, %v1288
        %v1317 = vpack.c.b16 %v1293, %v1291
        %v1318 = vpack.c.b16 %v1294, %v1292
        %v1319 = vpack.c.b16 %v1297, %v1295
        %v1320 = vpack.c.b16 %v1298, %v1296
        %v1321 = vpack.c.b16 %v1301, %v1299
        %v1322 = vpack.c.b16 %v1302, %v1300
        %v1323 = vpack.c.b16 %v1305, %v1303
        %v1324 = vpack.c.b16 %v1306, %v1304
        %v1325 = vpack.c.b16 %v1309, %v1307
        %v1326 = vpack.c.b16 %v1310, %v1308
        %1343 = vmatpush.bf16.msra.mxu0 %v1325
        %1344 = vmatpush.bf16.msra.mxu0 %v1323
        %1345 = vmatpush.bf16.msra.mxu0 %v1321
        %1346 = vmatpush.bf16.msra.mxu0 %v1319
        %1347 = vmatpush.bf16.msra.mxu0 %v1317
        %1348 = vmatpush.bf16.msra.mxu0 %v1315
        %1349 = vmatpush.bf16.msra.mxu0 %v1313
        %1350 = vmatpush.bf16.msra.mxu0 %v1311
        %1351 = vmatmul.bf16.gmra.mxu0 %v1216
        %v1352 = vpop.f32.mrf.mxu0
        %v1353 = vadd.f32 %v1024, %v1352
        %v1354 = vpop.f32.mrf.mxu0
        %v1355 = vadd.f32 %v1026, %v1354
        %1356 = vmatmul.bf16.gmra.mxu0 %v1218
        %v1357 = vpop.f32.mrf.mxu0
        %v1358 = vadd.f32 %v1029, %v1357
        %v1359 = vpop.f32.mrf.mxu0
        %v1360 = vadd.f32 %v1031, %v1359
        %1361 = vmatmul.bf16.gmra.mxu0 %v1220
        %v1362 = vpop.f32.mrf.mxu0
        %v1363 = vadd.f32 %v1034, %v1362
        %v1364 = vpop.f32.mrf.mxu0
        %v1365 = vadd.f32 %v1036, %v1364
        %1366 = vmatmul.bf16.gmra.mxu0 %v1222
        %v1367 = vpop.f32.mrf.mxu0
        %v1368 = vadd.f32 %v1039, %v1367
        %v1369 = vpop.f32.mrf.mxu0
        %v1370 = vadd.f32 %v1041, %v1369
        %1371 = vmatmul.bf16.gmra.mxu0 %v1224
        %v1372 = vpop.f32.mrf.mxu0
        %v1373 = vadd.f32 %v1044, %v1372
        %v1374 = vpop.f32.mrf.mxu0
        %v1375 = vadd.f32 %v1046, %v1374
        %1376 = vmatmul.bf16.gmra.mxu0 %v1226
        %v1377 = vpop.f32.mrf.mxu0
        %v1378 = vadd.f32 %v1049, %v1377
        %v1379 = vpop.f32.mrf.mxu0
        %v1380 = vadd.f32 %v1051, %v1379
        %1381 = vmatmul.bf16.gmra.mxu0 %v1228
        %v1382 = vpop.f32.mrf.mxu0
        %v1383 = vadd.f32 %v1054, %v1382
        %v1384 = vpop.f32.mrf.mxu0
        %v1385 = vadd.f32 %v1056, %v1384
        %1386 = vmatmul.bf16.gmra.mxu0 %v1230
        %v1387 = vpop.f32.mrf.mxu0
        %v1388 = vadd.f32 %v1059, %v1387
        %v1389 = vpop.f32.mrf.mxu0
        %v1390 = vadd.f32 %v1061, %v1389
        %1391 = vmatmul.bf16.gmra.mxu0 %v1232
        %v1392 = vpop.f32.mrf.mxu0
        %v1393 = vadd.f32 %v1064, %v1392
        %v1394 = vpop.f32.mrf.mxu0
        %v1395 = vadd.f32 %v1066, %v1394
        %1396 = vmatmul.bf16.gmra.mxu0 %v1234
        %v1397 = vpop.f32.mrf.mxu0
        %v1398 = vadd.f32 %v1069, %v1397
        %v1399 = vpop.f32.mrf.mxu0
        %v1400 = vadd.f32 %v1071, %v1399
        %1401 = vmatmul.bf16.gmra.mxu0 %v1236
        %v1402 = vpop.f32.mrf.mxu0
        %v1403 = vadd.f32 %v1074, %v1402
        %v1404 = vpop.f32.mrf.mxu0
        %v1405 = vadd.f32 %v1076, %v1404
        %1406 = vmatmul.bf16.gmra.mxu0 %v1238
        %v1407 = vpop.f32.mrf.mxu0
        %v1408 = vadd.f32 %v1079, %v1407
        %v1409 = vpop.f32.mrf.mxu0
        %v1410 = vadd.f32 %v1081, %v1409
        %1411 = vmatmul.bf16.gmra.mxu0 %v1240
        %v1412 = vpop.f32.mrf.mxu0
        %v1413 = vadd.f32 %v1084, %v1412
        %v1414 = vpop.f32.mrf.mxu0
        %v1415 = vadd.f32 %v1086, %v1414
        %1416 = vmatmul.bf16.gmra.mxu0 %v1242
        %v1417 = vpop.f32.mrf.mxu0
        %v1418 = vadd.f32 %v1089, %v1417
        %v1419 = vpop.f32.mrf.mxu0
        %v1420 = vadd.f32 %v1091, %v1419
        %1421 = vmatmul.bf16.gmra.mxu0 %v1244
        %v1422 = vpop.f32.mrf.mxu0
        %v1423 = vadd.f32 %v1094, %v1422
        %v1424 = vpop.f32.mrf.mxu0
        %v1425 = vadd.f32 %v1096, %v1424
        %1426 = vmatmul.bf16.gmra.mxu0 %v1246
        %v1427 = vpop.f32.mrf.mxu0
        %v1428 = vadd.f32 %v1099, %v1427
        %v1429 = vpop.f32.mrf.mxu0
        %v1430 = vadd.f32 %v1101, %v1429
        %1431 = vdwg.mxu0
        %1432 = vmatpush.bf16.msra.mxu0 %v1326
        %1433 = vmatpush.bf16.msra.mxu0 %v1324
        %1434 = vmatpush.bf16.msra.mxu0 %v1322
        %1435 = vmatpush.bf16.msra.mxu0 %v1320
        %1436 = vmatpush.bf16.msra.mxu0 %v1318
        %1437 = vmatpush.bf16.msra.mxu0 %v1316
        %1438 = vmatpush.bf16.msra.mxu0 %v1314
        %1439 = vmatpush.bf16.msra.mxu0 %v1312
        %1440 = vmatmul.bf16.gmra.mxu0 %v1216
        %v1441 = vpop.f32.mrf.mxu0
        %v1442 = vadd.f32 %v1113, %v1441
        %v1443 = vpop.f32.mrf.mxu0
        %v1444 = vadd.f32 %v1115, %v1443
        %1445 = vmatmul.bf16.gmra.mxu0 %v1218
        %v1446 = vpop.f32.mrf.mxu0
        %v1447 = vadd.f32 %v1118, %v1446
        %v1448 = vpop.f32.mrf.mxu0
        %v1449 = vadd.f32 %v1120, %v1448
        %1450 = vmatmul.bf16.gmra.mxu0 %v1220
        %v1451 = vpop.f32.mrf.mxu0
        %v1452 = vadd.f32 %v1123, %v1451
        %v1453 = vpop.f32.mrf.mxu0
        %v1454 = vadd.f32 %v1125, %v1453
        %1455 = vmatmul.bf16.gmra.mxu0 %v1222
        %v1456 = vpop.f32.mrf.mxu0
        %v1457 = vadd.f32 %v1128, %v1456
        %v1458 = vpop.f32.mrf.mxu0
        %v1459 = vadd.f32 %v1130, %v1458
        %1460 = vmatmul.bf16.gmra.mxu0 %v1224
        %v1461 = vpop.f32.mrf.mxu0
        %v1462 = vadd.f32 %v1133, %v1461
        %v1463 = vpop.f32.mrf.mxu0
        %v1464 = vadd.f32 %v1135, %v1463
        %1465 = vmatmul.bf16.gmra.mxu0 %v1226
        %v1466 = vpop.f32.mrf.mxu0
        %v1467 = vadd.f32 %v1138, %v1466
        %v1468 = vpop.f32.mrf.mxu0
        %v1469 = vadd.f32 %v1140, %v1468
        %1470 = vmatmul.bf16.gmra.mxu0 %v1228
        %v1471 = vpop.f32.mrf.mxu0
        %v1472 = vadd.f32 %v1143, %v1471
        %v1473 = vpop.f32.mrf.mxu0
        %v1474 = vadd.f32 %v1145, %v1473
        %1475 = vmatmul.bf16.gmra.mxu0 %v1230
        %v1476 = vpop.f32.mrf.mxu0
        %v1477 = vadd.f32 %v1148, %v1476
        %v1478 = vpop.f32.mrf.mxu0
        %v1479 = vadd.f32 %v1150, %v1478
        %1480 = vmatmul.bf16.gmra.mxu0 %v1232
        %v1481 = vpop.f32.mrf.mxu0
        %v1482 = vadd.f32 %v1153, %v1481
        %v1483 = vpop.f32.mrf.mxu0
        %v1484 = vadd.f32 %v1155, %v1483
        %1485 = vmatmul.bf16.gmra.mxu0 %v1234
        %v1486 = vpop.f32.mrf.mxu0
        %v1487 = vadd.f32 %v1158, %v1486
        %v1488 = vpop.f32.mrf.mxu0
        %v1489 = vadd.f32 %v1160, %v1488
        %1490 = vmatmul.bf16.gmra.mxu0 %v1236
        %v1491 = vpop.f32.mrf.mxu0
        %v1492 = vadd.f32 %v1163, %v1491
        %v1493 = vpop.f32.mrf.mxu0
        %v1494 = vadd.f32 %v1165, %v1493
        %1495 = vmatmul.bf16.gmra.mxu0 %v1238
        %v1496 = vpop.f32.mrf.mxu0
        %v1497 = vadd.f32 %v1168, %v1496
        %v1498 = vpop.f32.mrf.mxu0
        %v1499 = vadd.f32 %v1170, %v1498
        %1500 = vmatmul.bf16.gmra.mxu0 %v1240
        %v1501 = vpop.f32.mrf.mxu0
        %v1502 = vadd.f32 %v1173, %v1501
        %v1503 = vpop.f32.mrf.mxu0
        %v1504 = vadd.f32 %v1175, %v1503
        %1505 = vmatmul.bf16.gmra.mxu0 %v1242
        %v1506 = vpop.f32.mrf.mxu0
        %v1507 = vadd.f32 %v1178, %v1506
        %v1508 = vpop.f32.mrf.mxu0
        %v1509 = vadd.f32 %v1180, %v1508
        %1510 = vmatmul.bf16.gmra.mxu0 %v1244
        %v1511 = vpop.f32.mrf.mxu0
        %v1512 = vadd.f32 %v1183, %v1511
        %v1513 = vpop.f32.mrf.mxu0
        %v1514 = vadd.f32 %v1185, %v1513
        %1515 = vmatmul.bf16.gmra.mxu0 %v1246
        %v1516 = vpop.f32.mrf.mxu0
        %v1517 = vadd.f32 %v1188, %v1516
        %v1518 = vpop.f32.mrf.mxu0
        %v1519 = vadd.f32 %v1190, %v1518
        %1520 = vdwg.mxu0
        %s1521 = scalar_lea.vmem %s7, 256
        %v1522 = vld [vmem:[%s1521] sm:$0xff]
        %v1523 = vld [vmem:[%s1521 + $0x8] sm:$0xff]
        %v1524 = vld [vmem:[%s1521 + $0x10] sm:$0xff]
        %v1525 = vld [vmem:[%s1521 + $0x18] sm:$0xff]
        %v1526 = vld [vmem:[%s1521 + $0x20] sm:$0xff]
        %v1527 = vld [vmem:[%s1521 + $0x28] sm:$0xff]
        %v1528 = vld [vmem:[%s1521 + $0x30] sm:$0xff]
        %v1529 = vld [vmem:[%s1521 + $0x38] sm:$0xff]
        %v1530 = vld [vmem:[%s1521 + $0x40] sm:$0xff]
        %v1531 = vld [vmem:[%s1521 + $0x48] sm:$0xff]
        %v1532 = vld [vmem:[%s1521 + $0x50] sm:$0xff]
        %v1533 = vld [vmem:[%s1521 + $0x58] sm:$0xff]
        %v1534 = vld [vmem:[%s1521 + $0x60] sm:$0xff]
        %v1535 = vld [vmem:[%s1521 + $0x68] sm:$0xff]
        %v1536 = vld [vmem:[%s1521 + $0x70] sm:$0xff]
        %v1537 = vld [vmem:[%s1521 + $0x78] sm:$0xff]
        %v1571 = vunpack.c.l.b16 %v772
        %v1572 = vunpack.c.l.b16 %v773
        %v1573 = vunpack.c.l.b16 %v774
        %v1574 = vunpack.c.l.b16 %v775
        %v1575 = vunpack.c.l.b16 %v776
        %v1576 = vunpack.c.l.b16 %v777
        %v1577 = vunpack.c.l.b16 %v778
        %v1578 = vunpack.c.l.b16 %v779
        %v1579 = vunpack.c.l.b16 %v780
        %v1580 = vunpack.c.l.b16 %v781
        %v1581 = vunpack.c.l.b16 %v782
        %v1582 = vunpack.c.l.b16 %v783
        %v1583 = vunpack.c.l.b16 %v784
        %v1584 = vunpack.c.l.b16 %v785
        %v1585 = vunpack.c.l.b16 %v786
        %v1586 = vunpack.c.l.b16 %v787
        %v1587 = vunpack.c.l.b16 %v788
        %v1588 = vunpack.c.l.b16 %v789
        %v1589 = vunpack.c.l.b16 %v790
        %v1590 = vunpack.c.l.b16 %v791
        %v1591 = vunpack.c.l.b16 %v792
        %v1592 = vunpack.c.l.b16 %v793
        %v1593 = vunpack.c.l.b16 %v794
        %v1594 = vunpack.c.l.b16 %v795
        %v1595 = vunpack.c.l.b16 %v796
        %v1596 = vunpack.c.l.b16 %v797
        %v1597 = vunpack.c.l.b16 %v798
        %v1598 = vunpack.c.l.b16 %v799
        %v1599 = vunpack.c.l.b16 %v800
        %v1600 = vunpack.c.l.b16 %v801
        %v1601 = vunpack.c.l.b16 %v802
        %v1602 = vunpack.c.l.b16 %v803
        %v1603 = vunpack.c.l.b16 %v804
        %v1604 = vpack.c.b16 %v1572, %v1571
        %v1605 = vpack.c.b16 %v1574, %v1573
        %v1606 = vpack.c.b16 %v1576, %v1575
        %v1607 = vpack.c.b16 %v1578, %v1577
        %v1608 = vpack.c.b16 %v1580, %v1579
        %v1609 = vpack.c.b16 %v1582, %v1581
        %v1610 = vpack.c.b16 %v1584, %v1583
        %v1611 = vpack.c.b16 %v1586, %v1585
        %v1612 = vpack.c.b16 %v1588, %v1587
        %v1613 = vpack.c.b16 %v1590, %v1589
        %v1614 = vpack.c.b16 %v1592, %v1591
        %v1615 = vpack.c.b16 %v1594, %v1593
        %v1616 = vpack.c.b16 %v1596, %v1595
        %v1617 = vpack.c.b16 %v1598, %v1597
        %v1618 = vpack.c.b16 %v1600, %v1599
        %v1619 = vpack.c.b16 %v1602, %v1601
        %v1620 = vpack.c.b16 %v1603, %v1603
        %v1621 = vrot.slane %v1604, 2
        %v1622 = vrot.slane %v1605, 2
        %v1623 = vsel %vm1213, %v1621, %v1622
        %v1624 = vrot.slane %v1606, 2
        %v1625 = vsel %vm1213, %v1622, %v1624
        %v1626 = vrot.slane %v1607, 2
        %v1627 = vsel %vm1213, %v1624, %v1626
        %v1628 = vrot.slane %v1608, 2
        %v1629 = vsel %vm1213, %v1626, %v1628
        %v1630 = vrot.slane %v1609, 2
        %v1631 = vsel %vm1213, %v1628, %v1630
        %v1632 = vrot.slane %v1610, 2
        %v1633 = vsel %vm1213, %v1630, %v1632
        %v1634 = vrot.slane %v1611, 2
        %v1635 = vsel %vm1213, %v1632, %v1634
        %v1636 = vrot.slane %v1612, 2
        %v1637 = vsel %vm1213, %v1634, %v1636
        %v1638 = vrot.slane %v1613, 2
        %v1639 = vsel %vm1213, %v1636, %v1638
        %v1640 = vrot.slane %v1614, 2
        %v1641 = vsel %vm1213, %v1638, %v1640
        %v1642 = vrot.slane %v1615, 2
        %v1643 = vsel %vm1213, %v1640, %v1642
        %v1644 = vrot.slane %v1616, 2
        %v1645 = vsel %vm1213, %v1642, %v1644
        %v1646 = vrot.slane %v1617, 2
        %v1647 = vsel %vm1213, %v1644, %v1646
        %v1648 = vrot.slane %v1618, 2
        %v1649 = vsel %vm1213, %v1646, %v1648
        %v1650 = vrot.slane %v1619, 2
        %v1651 = vsel %vm1213, %v1648, %v1650
        %v1652 = vrot.slane %v1620, 2
        %v1653 = vsel %vm1213, %v1650, %v1652
        %v1686 = vunpack.c.l.b16 %v1522
        %v1687 = vunpack.c.h.b16 %v1522
        %v1688 = vunpack.c.l.b16 %v1523
        %v1689 = vunpack.c.h.b16 %v1523
        %v1690 = vunpack.c.l.b16 %v1524
        %v1691 = vunpack.c.h.b16 %v1524
        %v1692 = vunpack.c.l.b16 %v1525
        %v1693 = vunpack.c.h.b16 %v1525
        %v1694 = vunpack.c.l.b16 %v1526
        %v1695 = vunpack.c.h.b16 %v1526
        %v1696 = vunpack.c.l.b16 %v1527
        %v1697 = vunpack.c.h.b16 %v1527
        %v1698 = vunpack.c.l.b16 %v1528
        %v1699 = vunpack.c.h.b16 %v1528
        %v1700 = vunpack.c.l.b16 %v1529
        %v1701 = vunpack.c.h.b16 %v1529
        %v1702 = vunpack.c.l.b16 %v1530
        %v1703 = vunpack.c.h.b16 %v1530
        %v1704 = vunpack.c.l.b16 %v1531
        %v1705 = vunpack.c.h.b16 %v1531
        %v1706 = vunpack.c.l.b16 %v1532
        %v1707 = vunpack.c.h.b16 %v1532
        %v1708 = vunpack.c.l.b16 %v1533
        %v1709 = vunpack.c.h.b16 %v1533
        %v1710 = vunpack.c.l.b16 %v1534
        %v1711 = vunpack.c.h.b16 %v1534
        %v1712 = vunpack.c.l.b16 %v1535
        %v1713 = vunpack.c.h.b16 %v1535
        %v1714 = vunpack.c.l.b16 %v1536
        %v1715 = vunpack.c.h.b16 %v1536
        %v1716 = vunpack.c.l.b16 %v1537
        %v1717 = vunpack.c.h.b16 %v1537
        %v1718 = vpack.c.b16 %v1688, %v1686
        %v1719 = vpack.c.b16 %v1689, %v1687
        %v1720 = vpack.c.b16 %v1692, %v1690
        %v1721 = vpack.c.b16 %v1693, %v1691
        %v1722 = vpack.c.b16 %v1696, %v1694
        %v1723 = vpack.c.b16 %v1697, %v1695
        %v1724 = vpack.c.b16 %v1700, %v1698
        %v1725 = vpack.c.b16 %v1701, %v1699
        %v1726 = vpack.c.b16 %v1704, %v1702
        %v1727 = vpack.c.b16 %v1705, %v1703
        %v1728 = vpack.c.b16 %v1708, %v1706
        %v1729 = vpack.c.b16 %v1709, %v1707
        %v1730 = vpack.c.b16 %v1712, %v1710
        %v1731 = vpack.c.b16 %v1713, %v1711
        %v1732 = vpack.c.b16 %v1716, %v1714
        %v1733 = vpack.c.b16 %v1717, %v1715
        %1750 = vmatpush.bf16.msra.mxu0 %v1732
        %1751 = vmatpush.bf16.msra.mxu0 %v1730
        %1752 = vmatpush.bf16.msra.mxu0 %v1728
        %1753 = vmatpush.bf16.msra.mxu0 %v1726
        %1754 = vmatpush.bf16.msra.mxu0 %v1724
        %1755 = vmatpush.bf16.msra.mxu0 %v1722
        %1756 = vmatpush.bf16.msra.mxu0 %v1720
        %1757 = vmatpush.bf16.msra.mxu0 %v1718
        %1758 = vmatmul.bf16.gmra.mxu0 %v1623
        %v1759 = vpop.f32.mrf.mxu0
        %v1760 = vadd.f32 0.0, %v1759
        %v1761 = vpop.f32.mrf.mxu0
        %v1762 = vadd.f32 0.0, %v1761
        %1763 = vmatmul.bf16.gmra.mxu0 %v1625
        %v1764 = vpop.f32.mrf.mxu0
        %v1765 = vadd.f32 0.0, %v1764
        %v1766 = vpop.f32.mrf.mxu0
        %v1767 = vadd.f32 0.0, %v1766
        %1768 = vmatmul.bf16.gmra.mxu0 %v1627
        %v1769 = vpop.f32.mrf.mxu0
        %v1770 = vadd.f32 0.0, %v1769
        %v1771 = vpop.f32.mrf.mxu0
        %v1772 = vadd.f32 0.0, %v1771
        %1773 = vmatmul.bf16.gmra.mxu0 %v1629
        %v1774 = vpop.f32.mrf.mxu0
        %v1775 = vadd.f32 0.0, %v1774
        %v1776 = vpop.f32.mrf.mxu0
        %v1777 = vadd.f32 0.0, %v1776
        %1778 = vmatmul.bf16.gmra.mxu0 %v1631
        %v1779 = vpop.f32.mrf.mxu0
        %v1780 = vadd.f32 0.0, %v1779
        %v1781 = vpop.f32.mrf.mxu0
        %v1782 = vadd.f32 0.0, %v1781
        %1783 = vmatmul.bf16.gmra.mxu0 %v1633
        %v1784 = vpop.f32.mrf.mxu0
        %v1785 = vadd.f32 0.0, %v1784
        %v1786 = vpop.f32.mrf.mxu0
        %v1787 = vadd.f32 0.0, %v1786
        %1788 = vmatmul.bf16.gmra.mxu0 %v1635
        %v1789 = vpop.f32.mrf.mxu0
        %v1790 = vadd.f32 0.0, %v1789
        %v1791 = vpop.f32.mrf.mxu0
        %v1792 = vadd.f32 0.0, %v1791
        %1793 = vmatmul.bf16.gmra.mxu0 %v1637
        %v1794 = vpop.f32.mrf.mxu0
        %v1795 = vadd.f32 0.0, %v1794
        %v1796 = vpop.f32.mrf.mxu0
        %v1797 = vadd.f32 0.0, %v1796
        %1798 = vmatmul.bf16.gmra.mxu0 %v1639
        %v1799 = vpop.f32.mrf.mxu0
        %v1800 = vadd.f32 0.0, %v1799
        %v1801 = vpop.f32.mrf.mxu0
        %v1802 = vadd.f32 0.0, %v1801
        %1803 = vmatmul.bf16.gmra.mxu0 %v1641
        %v1804 = vpop.f32.mrf.mxu0
        %v1805 = vadd.f32 0.0, %v1804
        %v1806 = vpop.f32.mrf.mxu0
        %v1807 = vadd.f32 0.0, %v1806
        %1808 = vmatmul.bf16.gmra.mxu0 %v1643
        %v1809 = vpop.f32.mrf.mxu0
        %v1810 = vadd.f32 0.0, %v1809
        %v1811 = vpop.f32.mrf.mxu0
        %v1812 = vadd.f32 0.0, %v1811
        %1813 = vmatmul.bf16.gmra.mxu0 %v1645
        %v1814 = vpop.f32.mrf.mxu0
        %v1815 = vadd.f32 0.0, %v1814
        %v1816 = vpop.f32.mrf.mxu0
        %v1817 = vadd.f32 0.0, %v1816
        %1818 = vmatmul.bf16.gmra.mxu0 %v1647
        %v1819 = vpop.f32.mrf.mxu0
        %v1820 = vadd.f32 0.0, %v1819
        %v1821 = vpop.f32.mrf.mxu0
        %v1822 = vadd.f32 0.0, %v1821
        %1823 = vmatmul.bf16.gmra.mxu0 %v1649
        %v1824 = vpop.f32.mrf.mxu0
        %v1825 = vadd.f32 0.0, %v1824
        %v1826 = vpop.f32.mrf.mxu0
        %v1827 = vadd.f32 0.0, %v1826
        %1828 = vmatmul.bf16.gmra.mxu0 %v1651
        %v1829 = vpop.f32.mrf.mxu0
        %v1830 = vadd.f32 0.0, %v1829
        %v1831 = vpop.f32.mrf.mxu0
        %v1832 = vadd.f32 0.0, %v1831
        %1833 = vmatmul.bf16.gmra.mxu0 %v1653
        %v1834 = vpop.f32.mrf.mxu0
        %v1835 = vadd.f32 0.0, %v1834
        %v1836 = vpop.f32.mrf.mxu0
        %v1837 = vadd.f32 0.0, %v1836
        %1838 = vdwg.mxu0
        %1839 = vmatpush.bf16.msra.mxu0 %v1733
        %1840 = vmatpush.bf16.msra.mxu0 %v1731
        %1841 = vmatpush.bf16.msra.mxu0 %v1729
        %1842 = vmatpush.bf16.msra.mxu0 %v1727
        %1843 = vmatpush.bf16.msra.mxu0 %v1725
        %1844 = vmatpush.bf16.msra.mxu0 %v1723
        %1845 = vmatpush.bf16.msra.mxu0 %v1721
        %1846 = vmatpush.bf16.msra.mxu0 %v1719
        %1847 = vmatmul.bf16.gmra.mxu0 %v1623
        %v1848 = vpop.f32.mrf.mxu0
        %v1849 = vadd.f32 0.0, %v1848
        %v1850 = vpop.f32.mrf.mxu0
        %v1851 = vadd.f32 0.0, %v1850
        %1852 = vmatmul.bf16.gmra.mxu0 %v1625
        %v1853 = vpop.f32.mrf.mxu0
        %v1854 = vadd.f32 0.0, %v1853
        %v1855 = vpop.f32.mrf.mxu0
        %v1856 = vadd.f32 0.0, %v1855
        %1857 = vmatmul.bf16.gmra.mxu0 %v1627
        %v1858 = vpop.f32.mrf.mxu0
        %v1859 = vadd.f32 0.0, %v1858
        %v1860 = vpop.f32.mrf.mxu0
        %v1861 = vadd.f32 0.0, %v1860
        %1862 = vmatmul.bf16.gmra.mxu0 %v1629
        %v1863 = vpop.f32.mrf.mxu0
        %v1864 = vadd.f32 0.0, %v1863
        %v1865 = vpop.f32.mrf.mxu0
        %v1866 = vadd.f32 0.0, %v1865
        %1867 = vmatmul.bf16.gmra.mxu0 %v1631
        %v1868 = vpop.f32.mrf.mxu0
        %v1869 = vadd.f32 0.0, %v1868
        %v1870 = vpop.f32.mrf.mxu0
        %v1871 = vadd.f32 0.0, %v1870
        %1872 = vmatmul.bf16.gmra.mxu0 %v1633
        %v1873 = vpop.f32.mrf.mxu0
        %v1874 = vadd.f32 0.0, %v1873
        %v1875 = vpop.f32.mrf.mxu0
        %v1876 = vadd.f32 0.0, %v1875
        %1877 = vmatmul.bf16.gmra.mxu0 %v1635
        %v1878 = vpop.f32.mrf.mxu0
        %v1879 = vadd.f32 0.0, %v1878
        %v1880 = vpop.f32.mrf.mxu0
        %v1881 = vadd.f32 0.0, %v1880
        %1882 = vmatmul.bf16.gmra.mxu0 %v1637
        %v1883 = vpop.f32.mrf.mxu0
        %v1884 = vadd.f32 0.0, %v1883
        %v1885 = vpop.f32.mrf.mxu0
        %v1886 = vadd.f32 0.0, %v1885
        %1887 = vmatmul.bf16.gmra.mxu0 %v1639
        %v1888 = vpop.f32.mrf.mxu0
        %v1889 = vadd.f32 0.0, %v1888
        %v1890 = vpop.f32.mrf.mxu0
        %v1891 = vadd.f32 0.0, %v1890
        %1892 = vmatmul.bf16.gmra.mxu0 %v1641
        %v1893 = vpop.f32.mrf.mxu0
        %v1894 = vadd.f32 0.0, %v1893
        %v1895 = vpop.f32.mrf.mxu0
        %v1896 = vadd.f32 0.0, %v1895
        %1897 = vmatmul.bf16.gmra.mxu0 %v1643
        %v1898 = vpop.f32.mrf.mxu0
        %v1899 = vadd.f32 0.0, %v1898
        %v1900 = vpop.f32.mrf.mxu0
        %v1901 = vadd.f32 0.0, %v1900
        %1902 = vmatmul.bf16.gmra.mxu0 %v1645
        %v1903 = vpop.f32.mrf.mxu0
        %v1904 = vadd.f32 0.0, %v1903
        %v1905 = vpop.f32.mrf.mxu0
        %v1906 = vadd.f32 0.0, %v1905
        %1907 = vmatmul.bf16.gmra.mxu0 %v1647
        %v1908 = vpop.f32.mrf.mxu0
        %v1909 = vadd.f32 0.0, %v1908
        %v1910 = vpop.f32.mrf.mxu0
        %v1911 = vadd.f32 0.0, %v1910
        %1912 = vmatmul.bf16.gmra.mxu0 %v1649
        %v1913 = vpop.f32.mrf.mxu0
        %v1914 = vadd.f32 0.0, %v1913
        %v1915 = vpop.f32.mrf.mxu0
        %v1916 = vadd.f32 0.0, %v1915
        %1917 = vmatmul.bf16.gmra.mxu0 %v1651
        %v1918 = vpop.f32.mrf.mxu0
        %v1919 = vadd.f32 0.0, %v1918
        %v1920 = vpop.f32.mrf.mxu0
        %v1921 = vadd.f32 0.0, %v1920
        %1922 = vmatmul.bf16.gmra.mxu0 %v1653
        %v1923 = vpop.f32.mrf.mxu0
        %v1924 = vadd.f32 0.0, %v1923
        %v1925 = vpop.f32.mrf.mxu0
        %v1926 = vadd.f32 0.0, %v1925
        %1927 = vdwg.mxu0
        %v1928 = vadd.f32 %v1353, %v1760
        %v1929 = vadd.f32 %v1442, %v1849
        %v1930 = vadd.f32 %v1355, %v1762
        %v1931 = vadd.f32 %v1444, %v1851
        %v1932 = vadd.f32 %v1358, %v1765
        %v1933 = vadd.f32 %v1447, %v1854
        %v1934 = vadd.f32 %v1360, %v1767
        %v1935 = vadd.f32 %v1449, %v1856
        %v1936 = vadd.f32 %v1363, %v1770
        %v1937 = vadd.f32 %v1452, %v1859
        %v1938 = vadd.f32 %v1365, %v1772
        %v1939 = vadd.f32 %v1454, %v1861
        %v1940 = vadd.f32 %v1368, %v1775
        %v1941 = vadd.f32 %v1457, %v1864
        %v1942 = vadd.f32 %v1370, %v1777
        %v1943 = vadd.f32 %v1459, %v1866
        %v1944 = vadd.f32 %v1373, %v1780
        %v1945 = vadd.f32 %v1462, %v1869
        %v1946 = vadd.f32 %v1375, %v1782
        %v1947 = vadd.f32 %v1464, %v1871
        %v1948 = vadd.f32 %v1378, %v1785
        %v1949 = vadd.f32 %v1467, %v1874
        %v1950 = vadd.f32 %v1380, %v1787
        %v1951 = vadd.f32 %v1469, %v1876
        %v1952 = vadd.f32 %v1383, %v1790
        %v1953 = vadd.f32 %v1472, %v1879
        %v1954 = vadd.f32 %v1385, %v1792
        %v1955 = vadd.f32 %v1474, %v1881
        %v1956 = vadd.f32 %v1388, %v1795
        %v1957 = vadd.f32 %v1477, %v1884
        %v1958 = vadd.f32 %v1390, %v1797
        %v1959 = vadd.f32 %v1479, %v1886
        %v1960 = vadd.f32 %v1393, %v1800
        %v1961 = vadd.f32 %v1482, %v1889
        %v1962 = vadd.f32 %v1395, %v1802
        %v1963 = vadd.f32 %v1484, %v1891
        %v1964 = vadd.f32 %v1398, %v1805
        %v1965 = vadd.f32 %v1487, %v1894
        %v1966 = vadd.f32 %v1400, %v1807
        %v1967 = vadd.f32 %v1489, %v1896
        %v1968 = vadd.f32 %v1403, %v1810
        %v1969 = vadd.f32 %v1492, %v1899
        %v1970 = vadd.f32 %v1405, %v1812
        %v1971 = vadd.f32 %v1494, %v1901
        %v1972 = vadd.f32 %v1408, %v1815
        %v1973 = vadd.f32 %v1497, %v1904
        %v1974 = vadd.f32 %v1410, %v1817
        %v1975 = vadd.f32 %v1499, %v1906
        %v1976 = vadd.f32 %v1413, %v1820
        %v1977 = vadd.f32 %v1502, %v1909
        %v1978 = vadd.f32 %v1415, %v1822
        %v1979 = vadd.f32 %v1504, %v1911
        %v1980 = vadd.f32 %v1418, %v1825
        %v1981 = vadd.f32 %v1507, %v1914
        %v1982 = vadd.f32 %v1420, %v1827
        %v1983 = vadd.f32 %v1509, %v1916
        %v1984 = vadd.f32 %v1423, %v1830
        %v1985 = vadd.f32 %v1512, %v1919
        %v1986 = vadd.f32 %v1425, %v1832
        %v1987 = vadd.f32 %v1514, %v1921
        %v1988 = vadd.f32 %v1428, %v1835
        %v1989 = vadd.f32 %v1517, %v1924
        %v1990 = vadd.f32 %v1430, %v1837
        %v1991 = vadd.f32 %v1519, %v1926
        %v1992 = vld [vmem:[%s589] sm:$0xff]
        %v1993 = vld [vmem:[%s589 + $0x8] sm:$0xff]
        %v1994 = vld [vmem:[%s589 + $0x10] sm:$0xff]
        %v1995 = vld [vmem:[%s589 + $0x18] sm:$0xff]
        %v1996 = vld [vmem:[%s589 + $0x20] sm:$0xff]
        %v1997 = vld [vmem:[%s589 + $0x28] sm:$0xff]
        %v1998 = vld [vmem:[%s589 + $0x30] sm:$0xff]
        %v1999 = vld [vmem:[%s589 + $0x38] sm:$0xff]
        %v2000 = vld [vmem:[%s589 + $0x40] sm:$0xff]
        %v2001 = vld [vmem:[%s589 + $0x48] sm:$0xff]
        %v2002 = vld [vmem:[%s589 + $0x50] sm:$0xff]
        %v2003 = vld [vmem:[%s589 + $0x58] sm:$0xff]
        %v2004 = vld [vmem:[%s589 + $0x60] sm:$0xff]
        %v2005 = vld [vmem:[%s589 + $0x68] sm:$0xff]
        %v2006 = vld [vmem:[%s589 + $0x70] sm:$0xff]
        %v2007 = vld [vmem:[%s589 + $0x78] sm:$0xff]
        %v2008 = vld [vmem:[%s589 + $0x80] sm:$0xff]
        %v2009 = vld [vmem:[%s589 + $0x88] sm:$0xff]
        %v2010 = vld [vmem:[%s589 + $0x90] sm:$0xff]
        %v2011 = vld [vmem:[%s589 + $0x98] sm:$0xff]
        %v2012 = vld [vmem:[%s589 + $0xa0] sm:$0xff]
        %v2013 = vld [vmem:[%s589 + $0xa8] sm:$0xff]
        %v2014 = vld [vmem:[%s589 + $0xb0] sm:$0xff]
        %v2015 = vld [vmem:[%s589 + $0xb8] sm:$0xff]
        %v2016 = vld [vmem:[%s589 + $0xc0] sm:$0xff]
        %v2017 = vld [vmem:[%s589 + $0xc8] sm:$0xff]
        %v2018 = vld [vmem:[%s589 + $0xd0] sm:$0xff]
        %v2019 = vld [vmem:[%s589 + $0xd8] sm:$0xff]
        %v2020 = vld [vmem:[%s589 + $0xe0] sm:$0xff]
        %v2021 = vld [vmem:[%s589 + $0xe8] sm:$0xff]
        %v2022 = vld [vmem:[%s589 + $0xf0] sm:$0xff]
        %v2023 = vld [vmem:[%s589 + $0xf8] sm:$0xff]
        %v2024 = vpack.c.bf16 %v1993, %v1992
        %v2025 = vpack.c.bf16 %v1995, %v1994
        %v2026 = vpack.c.bf16 %v1997, %v1996
        %v2027 = vpack.c.bf16 %v1999, %v1998
        %v2028 = vpack.c.bf16 %v2001, %v2000
        %v2029 = vpack.c.bf16 %v2003, %v2002
        %v2030 = vpack.c.bf16 %v2005, %v2004
        %v2031 = vpack.c.bf16 %v2007, %v2006
        %v2032 = vpack.c.bf16 %v2009, %v2008
        %v2033 = vpack.c.bf16 %v2011, %v2010
        %v2034 = vpack.c.bf16 %v2013, %v2012
        %v2035 = vpack.c.bf16 %v2015, %v2014
        %v2036 = vpack.c.bf16 %v2017, %v2016
        %v2037 = vpack.c.bf16 %v2019, %v2018
        %v2038 = vpack.c.bf16 %v2021, %v2020
        %v2039 = vpack.c.bf16 %v2023, %v2022
        %v2040 = vld [vmem:[#allocation9] sm:$0xff]
        %v2041 = vld [vmem:[#allocation9 + $0x8] sm:$0xff]
        %v2042 = vld [vmem:[#allocation9 + $0x10] sm:$0xff]
        %v2043 = vld [vmem:[#allocation9 + $0x18] sm:$0xff]
        %v2044 = vld [vmem:[#allocation9 + $0x20] sm:$0xff]
        %v2045 = vld [vmem:[#allocation9 + $0x28] sm:$0xff]
        %v2046 = vld [vmem:[#allocation9 + $0x30] sm:$0xff]
        %v2047 = vld [vmem:[#allocation9 + $0x38] sm:$0xff]
        %v2056 = vunpack.c.l.b16 %v2040
        %v2057 = vunpack.c.h.b16 %v2040
        %v2058 = vunpack.c.l.b16 %v2041
        %v2059 = vunpack.c.h.b16 %v2041
        %v2060 = vunpack.c.l.b16 %v2042
        %v2061 = vunpack.c.h.b16 %v2042
        %v2062 = vunpack.c.l.b16 %v2043
        %v2063 = vunpack.c.h.b16 %v2043
        %v2064 = vunpack.c.l.b16 %v2044
        %v2065 = vunpack.c.h.b16 %v2044
        %v2066 = vunpack.c.l.b16 %v2045
        %v2067 = vunpack.c.h.b16 %v2045
        %v2068 = vunpack.c.l.b16 %v2046
        %v2069 = vunpack.c.h.b16 %v2046
        %v2070 = vunpack.c.l.b16 %v2047
        %v2071 = vunpack.c.h.b16 %v2047
        %v2072 = vpack.c.b16 %v2058, %v2056
        %v2073 = vpack.c.b16 %v2059, %v2057
        %v2074 = vpack.c.b16 %v2062, %v2060
        %v2075 = vpack.c.b16 %v2063, %v2061
        %v2076 = vpack.c.b16 %v2066, %v2064
        %v2077 = vpack.c.b16 %v2067, %v2065
        %v2078 = vpack.c.b16 %v2070, %v2068
        %v2079 = vpack.c.b16 %v2071, %v2069
        %vm2088 = vcmask 523264
        %v2090 = vsel %vm2088, %v2024, 0
        %v2093 = vsel %vm2088, %v2025, 0
        %v2096 = vsel %vm2088, %v2026, 0
        %v2099 = vsel %vm2088, %v2027, 0
        %v2102 = vsel %vm2088, %v2028, 0
        %v2105 = vsel %vm2088, %v2029, 0
        %v2108 = vsel %vm2088, %v2030, 0
        %v2111 = vsel %vm2088, %v2031, 0
        %v2114 = vsel %vm2088, %v2032, 0
        %v2117 = vsel %vm2088, %v2033, 0
        %v2120 = vsel %vm2088, %v2034, 0
        %v2123 = vsel %vm2088, %v2035, 0
        %v2126 = vsel %vm2088, %v2036, 0
        %v2129 = vsel %vm2088, %v2037, 0
        %v2132 = vsel %vm2088, %v2038, 0
        %v2135 = vsel %vm2088, %v2039, 0
        %2137 = vmatpush.bf16.msra.mxu0 0
        %2138 = vmatpush.bf16.msra.mxu0 0
        %2139 = vmatpush.bf16.msra.mxu0 0
        %2140 = vmatpush.bf16.msra.mxu0 0
        %2141 = vmatpush.bf16.msra.mxu0 %v2078
        %2142 = vmatpush.bf16.msra.mxu0 %v2076
        %2143 = vmatpush.bf16.msra.mxu0 %v2074
        %2144 = vmatpush.bf16.msra.mxu0 %v2072
        %2145 = vmatmul.bf16.gmra.mxu0 %v2090
        %v2146 = vpop.f32.mrf.mxu0
        %v2147 = vadd.f32 0.0, %v2146
        %v2148 = vpop.f32.mrf.mxu0
        %v2149 = vadd.f32 0.0, %v2148
        %2150 = vmatmul.bf16.gmra.mxu0 %v2093
        %v2151 = vpop.f32.mrf.mxu0
        %v2152 = vadd.f32 0.0, %v2151
        %v2153 = vpop.f32.mrf.mxu0
        %v2154 = vadd.f32 0.0, %v2153
        %2155 = vmatmul.bf16.gmra.mxu0 %v2096
        %v2156 = vpop.f32.mrf.mxu0
        %v2157 = vadd.f32 0.0, %v2156
        %v2158 = vpop.f32.mrf.mxu0
        %v2159 = vadd.f32 0.0, %v2158
        %2160 = vmatmul.bf16.gmra.mxu0 %v2099
        %v2161 = vpop.f32.mrf.mxu0
        %v2162 = vadd.f32 0.0, %v2161
        %v2163 = vpop.f32.mrf.mxu0
        %v2164 = vadd.f32 0.0, %v2163
        %2165 = vmatmul.bf16.gmra.mxu0 %v2102
        %v2166 = vpop.f32.mrf.mxu0
        %v2167 = vadd.f32 0.0, %v2166
        %v2168 = vpop.f32.mrf.mxu0
        %v2169 = vadd.f32 0.0, %v2168
        %2170 = vmatmul.bf16.gmra.mxu0 %v2105
        %v2171 = vpop.f32.mrf.mxu0
        %v2172 = vadd.f32 0.0, %v2171
        %v2173 = vpop.f32.mrf.mxu0
        %v2174 = vadd.f32 0.0, %v2173
        %2175 = vmatmul.bf16.gmra.mxu0 %v2108
        %v2176 = vpop.f32.mrf.mxu0
        %v2177 = vadd.f32 0.0, %v2176
        %v2178 = vpop.f32.mrf.mxu0
        %v2179 = vadd.f32 0.0, %v2178
        %2180 = vmatmul.bf16.gmra.mxu0 %v2111
        %v2181 = vpop.f32.mrf.mxu0
        %v2182 = vadd.f32 0.0, %v2181
        %v2183 = vpop.f32.mrf.mxu0
        %v2184 = vadd.f32 0.0, %v2183
        %2185 = vmatmul.bf16.gmra.mxu0 %v2114
        %v2186 = vpop.f32.mrf.mxu0
        %v2187 = vadd.f32 0.0, %v2186
        %v2188 = vpop.f32.mrf.mxu0
        %v2189 = vadd.f32 0.0, %v2188
        %2190 = vmatmul.bf16.gmra.mxu0 %v2117
        %v2191 = vpop.f32.mrf.mxu0
        %v2192 = vadd.f32 0.0, %v2191
        %v2193 = vpop.f32.mrf.mxu0
        %v2194 = vadd.f32 0.0, %v2193
        %2195 = vmatmul.bf16.gmra.mxu0 %v2120
        %v2196 = vpop.f32.mrf.mxu0
        %v2197 = vadd.f32 0.0, %v2196
        %v2198 = vpop.f32.mrf.mxu0
        %v2199 = vadd.f32 0.0, %v2198
        %2200 = vmatmul.bf16.gmra.mxu0 %v2123
        %v2201 = vpop.f32.mrf.mxu0
        %v2202 = vadd.f32 0.0, %v2201
        %v2203 = vpop.f32.mrf.mxu0
        %v2204 = vadd.f32 0.0, %v2203
        %2205 = vmatmul.bf16.gmra.mxu0 %v2126
        %v2206 = vpop.f32.mrf.mxu0
        %v2207 = vadd.f32 0.0, %v2206
        %v2208 = vpop.f32.mrf.mxu0
        %v2209 = vadd.f32 0.0, %v2208
        %2210 = vmatmul.bf16.gmra.mxu0 %v2129
        %v2211 = vpop.f32.mrf.mxu0
        %v2212 = vadd.f32 0.0, %v2211
        %v2213 = vpop.f32.mrf.mxu0
        %v2214 = vadd.f32 0.0, %v2213
        %2215 = vmatmul.bf16.gmra.mxu0 %v2132
        %v2216 = vpop.f32.mrf.mxu0
        %v2217 = vadd.f32 0.0, %v2216
        %v2218 = vpop.f32.mrf.mxu0
        %v2219 = vadd.f32 0.0, %v2218
        %2220 = vmatmul.bf16.gmra.mxu0 %v2135
        %v2221 = vpop.f32.mrf.mxu0
        %v2222 = vadd.f32 0.0, %v2221
        %v2223 = vpop.f32.mrf.mxu0
        %v2224 = vadd.f32 0.0, %v2223
        %2225 = vdwg.mxu0
        %2226 = vmatpush.bf16.msra.mxu0 0
        %2227 = vmatpush.bf16.msra.mxu0 0
        %2228 = vmatpush.bf16.msra.mxu0 0
        %2229 = vmatpush.bf16.msra.mxu0 0
        %2230 = vmatpush.bf16.msra.mxu0 %v2079
        %2231 = vmatpush.bf16.msra.mxu0 %v2077
        %2232 = vmatpush.bf16.msra.mxu0 %v2075
        %2233 = vmatpush.bf16.msra.mxu0 %v2073
        %2234 = vmatmul.bf16.gmra.mxu0 %v2090
        %v2235 = vpop.f32.mrf.mxu0
        %v2236 = vadd.f32 0.0, %v2235
        %v2237 = vpop.f32.mrf.mxu0
        %v2238 = vadd.f32 0.0, %v2237
        %2239 = vmatmul.bf16.gmra.mxu0 %v2093
        %v2240 = vpop.f32.mrf.mxu0
        %v2241 = vadd.f32 0.0, %v2240
        %v2242 = vpop.f32.mrf.mxu0
        %v2243 = vadd.f32 0.0, %v2242
        %2244 = vmatmul.bf16.gmra.mxu0 %v2096
        %v2245 = vpop.f32.mrf.mxu0
        %v2246 = vadd.f32 0.0, %v2245
        %v2247 = vpop.f32.mrf.mxu0
        %v2248 = vadd.f32 0.0, %v2247
        %2249 = vmatmul.bf16.gmra.mxu0 %v2099
        %v2250 = vpop.f32.mrf.mxu0
        %v2251 = vadd.f32 0.0, %v2250
        %v2252 = vpop.f32.mrf.mxu0
        %v2253 = vadd.f32 0.0, %v2252
        %2254 = vmatmul.bf16.gmra.mxu0 %v2102
        %v2255 = vpop.f32.mrf.mxu0
        %v2256 = vadd.f32 0.0, %v2255
        %v2257 = vpop.f32.mrf.mxu0
        %v2258 = vadd.f32 0.0, %v2257
        %2259 = vmatmul.bf16.gmra.mxu0 %v2105
        %v2260 = vpop.f32.mrf.mxu0
        %v2261 = vadd.f32 0.0, %v2260
        %v2262 = vpop.f32.mrf.mxu0
        %v2263 = vadd.f32 0.0, %v2262
        %2264 = vmatmul.bf16.gmra.mxu0 %v2108
        %v2265 = vpop.f32.mrf.mxu0
        %v2266 = vadd.f32 0.0, %v2265
        %v2267 = vpop.f32.mrf.mxu0
        %v2268 = vadd.f32 0.0, %v2267
        %2269 = vmatmul.bf16.gmra.mxu0 %v2111
        %v2270 = vpop.f32.mrf.mxu0
        %v2271 = vadd.f32 0.0, %v2270
        %v2272 = vpop.f32.mrf.mxu0
        %v2273 = vadd.f32 0.0, %v2272
        %2274 = vmatmul.bf16.gmra.mxu0 %v2114
        %v2275 = vpop.f32.mrf.mxu0
        %v2276 = vadd.f32 0.0, %v2275
        %v2277 = vpop.f32.mrf.mxu0
        %v2278 = vadd.f32 0.0, %v2277
        %2279 = vmatmul.bf16.gmra.mxu0 %v2117
        %v2280 = vpop.f32.mrf.mxu0
        %v2281 = vadd.f32 0.0, %v2280
        %v2282 = vpop.f32.mrf.mxu0
        %v2283 = vadd.f32 0.0, %v2282
        %2284 = vmatmul.bf16.gmra.mxu0 %v2120
        %v2285 = vpop.f32.mrf.mxu0
        %v2286 = vadd.f32 0.0, %v2285
        %v2287 = vpop.f32.mrf.mxu0
        %v2288 = vadd.f32 0.0, %v2287
        %2289 = vmatmul.bf16.gmra.mxu0 %v2123
        %v2290 = vpop.f32.mrf.mxu0
        %v2291 = vadd.f32 0.0, %v2290
        %v2292 = vpop.f32.mrf.mxu0
        %v2293 = vadd.f32 0.0, %v2292
        %2294 = vmatmul.bf16.gmra.mxu0 %v2126
        %v2295 = vpop.f32.mrf.mxu0
        %v2296 = vadd.f32 0.0, %v2295
        %v2297 = vpop.f32.mrf.mxu0
        %v2298 = vadd.f32 0.0, %v2297
        %2299 = vmatmul.bf16.gmra.mxu0 %v2129
        %v2300 = vpop.f32.mrf.mxu0
        %v2301 = vadd.f32 0.0, %v2300
        %v2302 = vpop.f32.mrf.mxu0
        %v2303 = vadd.f32 0.0, %v2302
        %2304 = vmatmul.bf16.gmra.mxu0 %v2132
        %v2305 = vpop.f32.mrf.mxu0
        %v2306 = vadd.f32 0.0, %v2305
        %v2307 = vpop.f32.mrf.mxu0
        %v2308 = vadd.f32 0.0, %v2307
        %2309 = vmatmul.bf16.gmra.mxu0 %v2135
        %v2310 = vpop.f32.mrf.mxu0
        %v2311 = vadd.f32 0.0, %v2310
        %v2312 = vpop.f32.mrf.mxu0
        %v2313 = vadd.f32 0.0, %v2312
        %2314 = vdwg.mxu0
        %v2315 = vadd.f32 %v1928, %v2147
        %v2316 = vadd.f32 %v1929, %v2236
        %v2317 = vadd.f32 %v1930, %v2149
        %v2318 = vadd.f32 %v1931, %v2238
        %v2319 = vadd.f32 %v1932, %v2152
        %v2320 = vadd.f32 %v1933, %v2241
        %v2321 = vadd.f32 %v1934, %v2154
        %v2322 = vadd.f32 %v1935, %v2243
        %v2323 = vadd.f32 %v1936, %v2157
        %v2324 = vadd.f32 %v1937, %v2246
        %v2325 = vadd.f32 %v1938, %v2159
        %v2326 = vadd.f32 %v1939, %v2248
        %v2327 = vadd.f32 %v1940, %v2162
        %v2328 = vadd.f32 %v1941, %v2251
        %v2329 = vadd.f32 %v1942, %v2164
        %v2330 = vadd.f32 %v1943, %v2253
        %v2331 = vadd.f32 %v1944, %v2167
        %v2332 = vadd.f32 %v1945, %v2256
        %v2333 = vadd.f32 %v1946, %v2169
        %v2334 = vadd.f32 %v1947, %v2258
        %v2335 = vadd.f32 %v1948, %v2172
        %v2336 = vadd.f32 %v1949, %v2261
        %v2337 = vadd.f32 %v1950, %v2174
        %v2338 = vadd.f32 %v1951, %v2263
        %v2339 = vadd.f32 %v1952, %v2177
        %v2340 = vadd.f32 %v1953, %v2266
        %v2341 = vadd.f32 %v1954, %v2179
        %v2342 = vadd.f32 %v1955, %v2268
        %v2343 = vadd.f32 %v1956, %v2182
        %v2344 = vadd.f32 %v1957, %v2271
        %v2345 = vadd.f32 %v1958, %v2184
        %v2346 = vadd.f32 %v1959, %v2273
        %v2347 = vadd.f32 %v1960, %v2187
        %v2348 = vadd.f32 %v1961, %v2276
        %v2349 = vadd.f32 %v1962, %v2189
        %v2350 = vadd.f32 %v1963, %v2278
        %v2351 = vadd.f32 %v1964, %v2192
        %v2352 = vadd.f32 %v1965, %v2281
        %v2353 = vadd.f32 %v1966, %v2194
        %v2354 = vadd.f32 %v1967, %v2283
        %v2355 = vadd.f32 %v1968, %v2197
        %v2356 = vadd.f32 %v1969, %v2286
        %v2357 = vadd.f32 %v1970, %v2199
        %v2358 = vadd.f32 %v1971, %v2288
        %v2359 = vadd.f32 %v1972, %v2202
        %v2360 = vadd.f32 %v1973, %v2291
        %v2361 = vadd.f32 %v1974, %v2204
        %v2362 = vadd.f32 %v1975, %v2293
        %v2363 = vadd.f32 %v1976, %v2207
        %v2364 = vadd.f32 %v1977, %v2296
        %v2365 = vadd.f32 %v1978, %v2209
        %v2366 = vadd.f32 %v1979, %v2298
        %v2367 = vadd.f32 %v1980, %v2212
        %v2368 = vadd.f32 %v1981, %v2301
        %v2369 = vadd.f32 %v1982, %v2214
        %v2370 = vadd.f32 %v1983, %v2303
        %v2371 = vadd.f32 %v1984, %v2217
        %v2372 = vadd.f32 %v1985, %v2306
        %v2373 = vadd.f32 %v1986, %v2219
        %v2374 = vadd.f32 %v1987, %v2308
        %v2375 = vadd.f32 %v1988, %v2222
        %v2376 = vadd.f32 %v1989, %v2311
        %v2377 = vadd.f32 %v1990, %v2224
        %v2378 = vadd.f32 %v1991, %v2313
        %v2379 = vperm.slane %v599, 1
        %v2380 = vmul.f32 %v2315, %v2379
        %v2381 = vmul.f32 %v2317, %v2379
        %v2382 = vmul.f32 %v2319, %v2379
        %v2383 = vmul.f32 %v2321, %v2379
        %v2384 = vmul.f32 %v2323, %v2379
        %v2385 = vmul.f32 %v2325, %v2379
        %v2386 = vmul.f32 %v2327, %v2379
        %v2387 = vmul.f32 %v2329, %v2379
        %v2388 = vmul.f32 %v2331, %v2379
        %v2389 = vmul.f32 %v2333, %v2379
        %v2390 = vmul.f32 %v2335, %v2379
        %v2391 = vmul.f32 %v2337, %v2379
        %v2392 = vmul.f32 %v2339, %v2379
        %v2393 = vmul.f32 %v2341, %v2379
        %v2394 = vmul.f32 %v2343, %v2379
        %v2395 = vmul.f32 %v2345, %v2379
        %v2396 = vmul.f32 %v2347, %v2379
        %v2397 = vmul.f32 %v2349, %v2379
        %v2398 = vmul.f32 %v2351, %v2379
        %v2399 = vmul.f32 %v2353, %v2379
        %v2400 = vmul.f32 %v2355, %v2379
        %v2401 = vmul.f32 %v2357, %v2379
        %v2402 = vmul.f32 %v2359, %v2379
        %v2403 = vmul.f32 %v2361, %v2379
        %v2404 = vmul.f32 %v2363, %v2379
        %v2405 = vmul.f32 %v2365, %v2379
        %v2406 = vmul.f32 %v2367, %v2379
        %v2407 = vmul.f32 %v2369, %v2379
        %v2408 = vmul.f32 %v2371, %v2379
        %v2409 = vmul.f32 %v2373, %v2379
        %v2410 = vmul.f32 %v2375, %v2379
        %v2411 = vmul.f32 %v2377, %v2379
        %v2412 = vperm.slane %v599, 3
        %v2413 = vadd.f32 %v2380, %v2412
        %v2414 = vadd.f32 %v2381, %v2412
        %v2415 = vadd.f32 %v2382, %v2412
        %v2416 = vadd.f32 %v2383, %v2412
        %v2417 = vadd.f32 %v2384, %v2412
        %v2418 = vadd.f32 %v2385, %v2412
        %v2419 = vadd.f32 %v2386, %v2412
        %v2420 = vadd.f32 %v2387, %v2412
        %v2421 = vadd.f32 %v2388, %v2412
        %v2422 = vadd.f32 %v2389, %v2412
        %v2423 = vadd.f32 %v2390, %v2412
        %v2424 = vadd.f32 %v2391, %v2412
        %v2425 = vadd.f32 %v2392, %v2412
        %v2426 = vadd.f32 %v2393, %v2412
        %v2427 = vadd.f32 %v2394, %v2412
        %v2428 = vadd.f32 %v2395, %v2412
        %v2429 = vadd.f32 %v2396, %v2412
        %v2430 = vadd.f32 %v2397, %v2412
        %v2431 = vadd.f32 %v2398, %v2412
        %v2432 = vadd.f32 %v2399, %v2412
        %v2433 = vadd.f32 %v2400, %v2412
        %v2434 = vadd.f32 %v2401, %v2412
        %v2435 = vadd.f32 %v2402, %v2412
        %v2436 = vadd.f32 %v2403, %v2412
        %v2437 = vadd.f32 %v2404, %v2412
        %v2438 = vadd.f32 %v2405, %v2412
        %v2439 = vadd.f32 %v2406, %v2412
        %v2440 = vadd.f32 %v2407, %v2412
        %v2441 = vadd.f32 %v2408, %v2412
        %v2442 = vadd.f32 %v2409, %v2412
        %v2443 = vadd.f32 %v2410, %v2412
        %v2444 = vadd.f32 %v2411, %v2412
        %v2445 = vperm.slane %v599, 2
        %v2446 = vmul.f32 %v2316, %v2445
        %v2447 = vmul.f32 %v2318, %v2445
        %v2448 = vmul.f32 %v2320, %v2445
        %v2449 = vmul.f32 %v2322, %v2445
        %v2450 = vmul.f32 %v2324, %v2445
        %v2451 = vmul.f32 %v2326, %v2445
        %v2452 = vmul.f32 %v2328, %v2445
        %v2453 = vmul.f32 %v2330, %v2445
        %v2454 = vmul.f32 %v2332, %v2445
        %v2455 = vmul.f32 %v2334, %v2445
        %v2456 = vmul.f32 %v2336, %v2445
        %v2457 = vmul.f32 %v2338, %v2445
        %v2458 = vmul.f32 %v2340, %v2445
        %v2459 = vmul.f32 %v2342, %v2445
        %v2460 = vmul.f32 %v2344, %v2445
        %v2461 = vmul.f32 %v2346, %v2445
        %v2462 = vmul.f32 %v2348, %v2445
        %v2463 = vmul.f32 %v2350, %v2445
        %v2464 = vmul.f32 %v2352, %v2445
        %v2465 = vmul.f32 %v2354, %v2445
        %v2466 = vmul.f32 %v2356, %v2445
        %v2467 = vmul.f32 %v2358, %v2445
        %v2468 = vmul.f32 %v2360, %v2445
        %v2469 = vmul.f32 %v2362, %v2445
        %v2470 = vmul.f32 %v2364, %v2445
        %v2471 = vmul.f32 %v2366, %v2445
        %v2472 = vmul.f32 %v2368, %v2445
        %v2473 = vmul.f32 %v2370, %v2445
        %v2474 = vmul.f32 %v2372, %v2445
        %v2475 = vmul.f32 %v2374, %v2445
        %v2476 = vmul.f32 %v2376, %v2445
        %v2477 = vmul.f32 %v2378, %v2445
        %v2478 = vperm.slane %v599, 4
        %v2479 = vadd.f32 %v2446, %v2478
        %v2480 = vadd.f32 %v2447, %v2478
        %v2481 = vadd.f32 %v2448, %v2478
        %v2482 = vadd.f32 %v2449, %v2478
        %v2483 = vadd.f32 %v2450, %v2478
        %v2484 = vadd.f32 %v2451, %v2478
        %v2485 = vadd.f32 %v2452, %v2478
        %v2486 = vadd.f32 %v2453, %v2478
        %v2487 = vadd.f32 %v2454, %v2478
        %v2488 = vadd.f32 %v2455, %v2478
        %v2489 = vadd.f32 %v2456, %v2478
        %v2490 = vadd.f32 %v2457, %v2478
        %v2491 = vadd.f32 %v2458, %v2478
        %v2492 = vadd.f32 %v2459, %v2478
        %v2493 = vadd.f32 %v2460, %v2478
        %v2494 = vadd.f32 %v2461, %v2478
        %v2495 = vadd.f32 %v2462, %v2478
        %v2496 = vadd.f32 %v2463, %v2478
        %v2497 = vadd.f32 %v2464, %v2478
        %v2498 = vadd.f32 %v2465, %v2478
        %v2499 = vadd.f32 %v2466, %v2478
        %v2500 = vadd.f32 %v2467, %v2478
        %v2501 = vadd.f32 %v2468, %v2478
        %v2502 = vadd.f32 %v2469, %v2478
        %v2503 = vadd.f32 %v2470, %v2478
        %v2504 = vadd.f32 %v2471, %v2478
        %v2505 = vadd.f32 %v2472, %v2478
        %v2506 = vadd.f32 %v2473, %v2478
        %v2507 = vadd.f32 %v2474, %v2478
        %v2508 = vadd.f32 %v2475, %v2478
        %v2509 = vadd.f32 %v2476, %v2478
        %v2510 = vadd.f32 %v2477, %v2478
        %v2511 = vxor.u32 %v2413, 2147483648
        %v2512 = vxor.u32 %v2414, 2147483648
        %v2513 = vxor.u32 %v2415, 2147483648
        %v2514 = vxor.u32 %v2416, 2147483648
        %v2515 = vxor.u32 %v2417, 2147483648
        %v2516 = vxor.u32 %v2418, 2147483648
        %v2517 = vxor.u32 %v2419, 2147483648
        %v2518 = vxor.u32 %v2420, 2147483648
        %v2519 = vxor.u32 %v2421, 2147483648
        %v2520 = vxor.u32 %v2422, 2147483648
        %v2521 = vxor.u32 %v2423, 2147483648
        %v2522 = vxor.u32 %v2424, 2147483648
        %v2523 = vxor.u32 %v2425, 2147483648
        %v2524 = vxor.u32 %v2426, 2147483648
        %v2525 = vxor.u32 %v2427, 2147483648
        %v2526 = vxor.u32 %v2428, 2147483648
        %v2527 = vxor.u32 %v2429, 2147483648
        %v2528 = vxor.u32 %v2430, 2147483648
        %v2529 = vxor.u32 %v2431, 2147483648
        %v2530 = vxor.u32 %v2432, 2147483648
        %v2531 = vxor.u32 %v2433, 2147483648
        %v2532 = vxor.u32 %v2434, 2147483648
        %v2533 = vxor.u32 %v2435, 2147483648
        %v2534 = vxor.u32 %v2436, 2147483648
        %v2535 = vxor.u32 %v2437, 2147483648
        %v2536 = vxor.u32 %v2438, 2147483648
        %v2537 = vxor.u32 %v2439, 2147483648
        %v2538 = vxor.u32 %v2440, 2147483648
        %v2539 = vxor.u32 %v2441, 2147483648
        %v2540 = vxor.u32 %v2442, 2147483648
        %v2541 = vxor.u32 %v2443, 2147483648
        %v2542 = vxor.u32 %v2444, 2147483648
        %v2543 = vmul.f32 %v2511, 1.442695
        %v2544 = vpow.pop %v2543
        %v2545 = vmul.f32 %v2512, 1.442695
        %v2546 = vpow.pop %v2545
        %v2547 = vmul.f32 %v2513, 1.442695
        %v2548 = vpow.pop %v2547
        %v2549 = vmul.f32 %v2514, 1.442695
        %v2550 = vpow.pop %v2549
        %v2551 = vmul.f32 %v2515, 1.442695
        %v2552 = vpow.pop %v2551
        %v2553 = vmul.f32 %v2516, 1.442695
        %v2554 = vpow.pop %v2553
        %v2555 = vmul.f32 %v2517, 1.442695
        %v2556 = vpow.pop %v2555
        %v2557 = vmul.f32 %v2518, 1.442695
        %v2558 = vpow.pop %v2557
        %v2559 = vmul.f32 %v2519, 1.442695
        %v2560 = vpow.pop %v2559
        %v2561 = vmul.f32 %v2520, 1.442695
        %v2562 = vpow.pop %v2561
        %v2563 = vmul.f32 %v2521, 1.442695
        %v2564 = vpow.pop %v2563
        %v2565 = vmul.f32 %v2522, 1.442695
        %v2566 = vpow.pop %v2565
        %v2567 = vmul.f32 %v2523, 1.442695
        %v2568 = vpow.pop %v2567
        %v2569 = vmul.f32 %v2524, 1.442695
        %v2570 = vpow.pop %v2569
        %v2571 = vmul.f32 %v2525, 1.442695
        %v2572 = vpow.pop %v2571
        %v2573 = vmul.f32 %v2526, 1.442695
        %v2574 = vpow.pop %v2573
        %v2575 = vmul.f32 %v2527, 1.442695
        %v2576 = vpow.pop %v2575
        %v2577 = vmul.f32 %v2528, 1.442695
        %v2578 = vpow.pop %v2577
        %v2579 = vmul.f32 %v2529, 1.442695
        %v2580 = vpow.pop %v2579
        %v2581 = vmul.f32 %v2530, 1.442695
        %v2582 = vpow.pop %v2581
        %v2583 = vmul.f32 %v2531, 1.442695
        %v2584 = vpow.pop %v2583
        %v2585 = vmul.f32 %v2532, 1.442695
        %v2586 = vpow.pop %v2585
        %v2587 = vmul.f32 %v2533, 1.442695
        %v2588 = vpow.pop %v2587
        %v2589 = vmul.f32 %v2534, 1.442695
        %v2590 = vpow.pop %v2589
        %v2591 = vmul.f32 %v2535, 1.442695
        %v2592 = vpow.pop %v2591
        %v2593 = vmul.f32 %v2536, 1.442695
        %v2594 = vpow.pop %v2593
        %v2595 = vmul.f32 %v2537, 1.442695
        %v2596 = vpow.pop %v2595
        %v2597 = vmul.f32 %v2538, 1.442695
        %v2598 = vpow.pop %v2597
        %v2599 = vmul.f32 %v2539, 1.442695
        %v2600 = vpow.pop %v2599
        %v2601 = vmul.f32 %v2540, 1.442695
        %v2602 = vpow.pop %v2601
        %v2603 = vmul.f32 %v2541, 1.442695
        %v2604 = vpow.pop %v2603
        %v2605 = vmul.f32 %v2542, 1.442695
        %v2606 = vpow.pop %v2605
        %v2607 = vadd.f32 %v2544, 1.0
        %v2608 = vadd.f32 %v2546, 1.0
        %v2609 = vadd.f32 %v2548, 1.0
        %v2610 = vadd.f32 %v2550, 1.0
        %v2611 = vadd.f32 %v2552, 1.0
        %v2612 = vadd.f32 %v2554, 1.0
        %v2613 = vadd.f32 %v2556, 1.0
        %v2614 = vadd.f32 %v2558, 1.0
        %v2615 = vadd.f32 %v2560, 1.0
        %v2616 = vadd.f32 %v2562, 1.0
        %v2617 = vadd.f32 %v2564, 1.0
        %v2618 = vadd.f32 %v2566, 1.0
        %v2619 = vadd.f32 %v2568, 1.0
        %v2620 = vadd.f32 %v2570, 1.0
        %v2621 = vadd.f32 %v2572, 1.0
        %v2622 = vadd.f32 %v2574, 1.0
        %v2623 = vadd.f32 %v2576, 1.0
        %v2624 = vadd.f32 %v2578, 1.0
        %v2625 = vadd.f32 %v2580, 1.0
        %v2626 = vadd.f32 %v2582, 1.0
        %v2627 = vadd.f32 %v2584, 1.0
        %v2628 = vadd.f32 %v2586, 1.0
        %v2629 = vadd.f32 %v2588, 1.0
        %v2630 = vadd.f32 %v2590, 1.0
        %v2631 = vadd.f32 %v2592, 1.0
        %v2632 = vadd.f32 %v2594, 1.0
        %v2633 = vadd.f32 %v2596, 1.0
        %v2634 = vadd.f32 %v2598, 1.0
        %v2635 = vadd.f32 %v2600, 1.0
        %v2636 = vadd.f32 %v2602, 1.0
        %v2637 = vadd.f32 %v2604, 1.0
        %v2638 = vadd.f32 %v2606, 1.0
        %v2639 = vrcp.pop %v2607
        %v2640 = vmul.f32 %v2607, %v2639
        %v2641 = vsub.f32 1.0, %v2640
        %v2642 = vmul.f32 %v2639, %v2641
        %v2643 = vadd.f32 %v2639, %v2642
        %vm2644 = vweird.f32 %v2607
        %vm2645 = vweird.f32 %v2639
        %vm2646 = vmor %vm2644, %vm2645
        %v2647 = vsel %vm2646, %v2639, %v2643
        %v2648 = vand.u32 2147483647, %v2607
        %vm2649 = vcmp.eq.f32.partialorder %v2648, 8.507059e+37
        %v2650 = vand.u32 %v2607, 2147483648
        %v2651 = vor.u32 1.1754944e-38, %v2650
        %v2652 = vsel %vm2649, %v2651, %v2647
        %v2653 = vmul.f32 1.0, %v2652
        %v2654 = vrcp.pop %v2608
        %v2655 = vmul.f32 %v2608, %v2654
        %v2656 = vsub.f32 1.0, %v2655
        %v2657 = vmul.f32 %v2654, %v2656
        %v2658 = vadd.f32 %v2654, %v2657
        %vm2659 = vweird.f32 %v2608
        %vm2660 = vweird.f32 %v2654
        %vm2661 = vmor %vm2659, %vm2660
        %v2662 = vsel %vm2661, %v2654, %v2658
        %v2663 = vand.u32 2147483647, %v2608
        %vm2664 = vcmp.eq.f32.partialorder %v2663, 8.507059e+37
        %v2665 = vand.u32 %v2608, 2147483648
        %v2666 = vor.u32 1.1754944e-38, %v2665
        %v2667 = vsel %vm2664, %v2666, %v2662
        %v2668 = vmul.f32 1.0, %v2667
        %v2669 = vrcp.pop %v2609
        %v2670 = vmul.f32 %v2609, %v2669
        %v2671 = vsub.f32 1.0, %v2670
        %v2672 = vmul.f32 %v2669, %v2671
        %v2673 = vadd.f32 %v2669, %v2672
        %vm2674 = vweird.f32 %v2609
        %vm2675 = vweird.f32 %v2669
        %vm2676 = vmor %vm2674, %vm2675
        %v2677 = vsel %vm2676, %v2669, %v2673
        %v2678 = vand.u32 2147483647, %v2609
        %vm2679 = vcmp.eq.f32.partialorder %v2678, 8.507059e+37
        %v2680 = vand.u32 %v2609, 2147483648
        %v2681 = vor.u32 1.1754944e-38, %v2680
        %v2682 = vsel %vm2679, %v2681, %v2677
        %v2683 = vmul.f32 1.0, %v2682
        %v2684 = vrcp.pop %v2610
        %v2685 = vmul.f32 %v2610, %v2684
        %v2686 = vsub.f32 1.0, %v2685
        %v2687 = vmul.f32 %v2684, %v2686
        %v2688 = vadd.f32 %v2684, %v2687
        %vm2689 = vweird.f32 %v2610
        %vm2690 = vweird.f32 %v2684
        %vm2691 = vmor %vm2689, %vm2690
        %v2692 = vsel %vm2691, %v2684, %v2688
        %v2693 = vand.u32 2147483647, %v2610
        %vm2694 = vcmp.eq.f32.partialorder %v2693, 8.507059e+37
        %v2695 = vand.u32 %v2610, 2147483648
        %v2696 = vor.u32 1.1754944e-38, %v2695
        %v2697 = vsel %vm2694, %v2696, %v2692
        %v2698 = vmul.f32 1.0, %v2697
        %v2699 = vrcp.pop %v2611
        %v2700 = vmul.f32 %v2611, %v2699
        %v2701 = vsub.f32 1.0, %v2700
        %v2702 = vmul.f32 %v2699, %v2701
        %v2703 = vadd.f32 %v2699, %v2702
        %vm2704 = vweird.f32 %v2611
        %vm2705 = vweird.f32 %v2699
        %vm2706 = vmor %vm2704, %vm2705
        %v2707 = vsel %vm2706, %v2699, %v2703
        %v2708 = vand.u32 2147483647, %v2611
        %vm2709 = vcmp.eq.f32.partialorder %v2708, 8.507059e+37
        %v2710 = vand.u32 %v2611, 2147483648
        %v2711 = vor.u32 1.1754944e-38, %v2710
        %v2712 = vsel %vm2709, %v2711, %v2707
        %v2713 = vmul.f32 1.0, %v2712
        %v2714 = vrcp.pop %v2612
        %v2715 = vmul.f32 %v2612, %v2714
        %v2716 = vsub.f32 1.0, %v2715
        %v2717 = vmul.f32 %v2714, %v2716
        %v2718 = vadd.f32 %v2714, %v2717
        %vm2719 = vweird.f32 %v2612
        %vm2720 = vweird.f32 %v2714
        %vm2721 = vmor %vm2719, %vm2720
        %v2722 = vsel %vm2721, %v2714, %v2718
        %v2723 = vand.u32 2147483647, %v2612
        %vm2724 = vcmp.eq.f32.partialorder %v2723, 8.507059e+37
        %v2725 = vand.u32 %v2612, 2147483648
        %v2726 = vor.u32 1.1754944e-38, %v2725
        %v2727 = vsel %vm2724, %v2726, %v2722
        %v2728 = vmul.f32 1.0, %v2727
        %v2729 = vrcp.pop %v2613
        %v2730 = vmul.f32 %v2613, %v2729
        %v2731 = vsub.f32 1.0, %v2730
        %v2732 = vmul.f32 %v2729, %v2731
        %v2733 = vadd.f32 %v2729, %v2732
        %vm2734 = vweird.f32 %v2613
        %vm2735 = vweird.f32 %v2729
        %vm2736 = vmor %vm2734, %vm2735
        %v2737 = vsel %vm2736, %v2729, %v2733
        %v2738 = vand.u32 2147483647, %v2613
        %vm2739 = vcmp.eq.f32.partialorder %v2738, 8.507059e+37
        %v2740 = vand.u32 %v2613, 2147483648
        %v2741 = vor.u32 1.1754944e-38, %v2740
        %v2742 = vsel %vm2739, %v2741, %v2737
        %v2743 = vmul.f32 1.0, %v2742
        %v2744 = vrcp.pop %v2614
        %v2745 = vmul.f32 %v2614, %v2744
        %v2746 = vsub.f32 1.0, %v2745
        %v2747 = vmul.f32 %v2744, %v2746
        %v2748 = vadd.f32 %v2744, %v2747
        %vm2749 = vweird.f32 %v2614
        %vm2750 = vweird.f32 %v2744
        %vm2751 = vmor %vm2749, %vm2750
        %v2752 = vsel %vm2751, %v2744, %v2748
        %v2753 = vand.u32 2147483647, %v2614
        %vm2754 = vcmp.eq.f32.partialorder %v2753, 8.507059e+37
        %v2755 = vand.u32 %v2614, 2147483648
        %v2756 = vor.u32 1.1754944e-38, %v2755
        %v2757 = vsel %vm2754, %v2756, %v2752
        %v2758 = vmul.f32 1.0, %v2757
        %v2759 = vrcp.pop %v2615
        %v2760 = vmul.f32 %v2615, %v2759
        %v2761 = vsub.f32 1.0, %v2760
        %v2762 = vmul.f32 %v2759, %v2761
        %v2763 = vadd.f32 %v2759, %v2762
        %vm2764 = vweird.f32 %v2615
        %vm2765 = vweird.f32 %v2759
        %vm2766 = vmor %vm2764, %vm2765
        %v2767 = vsel %vm2766, %v2759, %v2763
        %v2768 = vand.u32 2147483647, %v2615
        %vm2769 = vcmp.eq.f32.partialorder %v2768, 8.507059e+37
        %v2770 = vand.u32 %v2615, 2147483648
        %v2771 = vor.u32 1.1754944e-38, %v2770
        %v2772 = vsel %vm2769, %v2771, %v2767
        %v2773 = vmul.f32 1.0, %v2772
        %v2774 = vrcp.pop %v2616
        %v2775 = vmul.f32 %v2616, %v2774
        %v2776 = vsub.f32 1.0, %v2775
        %v2777 = vmul.f32 %v2774, %v2776
        %v2778 = vadd.f32 %v2774, %v2777
        %vm2779 = vweird.f32 %v2616
        %vm2780 = vweird.f32 %v2774
        %vm2781 = vmor %vm2779, %vm2780
        %v2782 = vsel %vm2781, %v2774, %v2778
        %v2783 = vand.u32 2147483647, %v2616
        %vm2784 = vcmp.eq.f32.partialorder %v2783, 8.507059e+37
        %v2785 = vand.u32 %v2616, 2147483648
        %v2786 = vor.u32 1.1754944e-38, %v2785
        %v2787 = vsel %vm2784, %v2786, %v2782
        %v2788 = vmul.f32 1.0, %v2787
        %v2789 = vrcp.pop %v2617
        %v2790 = vmul.f32 %v2617, %v2789
        %v2791 = vsub.f32 1.0, %v2790
        %v2792 = vmul.f32 %v2789, %v2791
        %v2793 = vadd.f32 %v2789, %v2792
        %vm2794 = vweird.f32 %v2617
        %vm2795 = vweird.f32 %v2789
        %vm2796 = vmor %vm2794, %vm2795
        %v2797 = vsel %vm2796, %v2789, %v2793
        %v2798 = vand.u32 2147483647, %v2617
        %vm2799 = vcmp.eq.f32.partialorder %v2798, 8.507059e+37
        %v2800 = vand.u32 %v2617, 2147483648
        %v2801 = vor.u32 1.1754944e-38, %v2800
        %v2802 = vsel %vm2799, %v2801, %v2797
        %v2803 = vmul.f32 1.0, %v2802
        %v2804 = vrcp.pop %v2618
        %v2805 = vmul.f32 %v2618, %v2804
        %v2806 = vsub.f32 1.0, %v2805
        %v2807 = vmul.f32 %v2804, %v2806
        %v2808 = vadd.f32 %v2804, %v2807
        %vm2809 = vweird.f32 %v2618
        %vm2810 = vweird.f32 %v2804
        %vm2811 = vmor %vm2809, %vm2810
        %v2812 = vsel %vm2811, %v2804, %v2808
        %v2813 = vand.u32 2147483647, %v2618
        %vm2814 = vcmp.eq.f32.partialorder %v2813, 8.507059e+37
        %v2815 = vand.u32 %v2618, 2147483648
        %v2816 = vor.u32 1.1754944e-38, %v2815
        %v2817 = vsel %vm2814, %v2816, %v2812
        %v2818 = vmul.f32 1.0, %v2817
        %v2819 = vrcp.pop %v2619
        %v2820 = vmul.f32 %v2619, %v2819
        %v2821 = vsub.f32 1.0, %v2820
        %v2822 = vmul.f32 %v2819, %v2821
        %v2823 = vadd.f32 %v2819, %v2822
        %vm2824 = vweird.f32 %v2619
        %vm2825 = vweird.f32 %v2819
        %vm2826 = vmor %vm2824, %vm2825
        %v2827 = vsel %vm2826, %v2819, %v2823
        %v2828 = vand.u32 2147483647, %v2619
        %vm2829 = vcmp.eq.f32.partialorder %v2828, 8.507059e+37
        %v2830 = vand.u32 %v2619, 2147483648
        %v2831 = vor.u32 1.1754944e-38, %v2830
        %v2832 = vsel %vm2829, %v2831, %v2827
        %v2833 = vmul.f32 1.0, %v2832
        %v2834 = vrcp.pop %v2620
        %v2835 = vmul.f32 %v2620, %v2834
        %v2836 = vsub.f32 1.0, %v2835
        %v2837 = vmul.f32 %v2834, %v2836
        %v2838 = vadd.f32 %v2834, %v2837
        %vm2839 = vweird.f32 %v2620
        %vm2840 = vweird.f32 %v2834
        %vm2841 = vmor %vm2839, %vm2840
        %v2842 = vsel %vm2841, %v2834, %v2838
        %v2843 = vand.u32 2147483647, %v2620
        %vm2844 = vcmp.eq.f32.partialorder %v2843, 8.507059e+37
        %v2845 = vand.u32 %v2620, 2147483648
        %v2846 = vor.u32 1.1754944e-38, %v2845
        %v2847 = vsel %vm2844, %v2846, %v2842
        %v2848 = vmul.f32 1.0, %v2847
        %v2849 = vrcp.pop %v2621
        %v2850 = vmul.f32 %v2621, %v2849
        %v2851 = vsub.f32 1.0, %v2850
        %v2852 = vmul.f32 %v2849, %v2851
        %v2853 = vadd.f32 %v2849, %v2852
        %vm2854 = vweird.f32 %v2621
        %vm2855 = vweird.f32 %v2849
        %vm2856 = vmor %vm2854, %vm2855
        %v2857 = vsel %vm2856, %v2849, %v2853
        %v2858 = vand.u32 2147483647, %v2621
        %vm2859 = vcmp.eq.f32.partialorder %v2858, 8.507059e+37
        %v2860 = vand.u32 %v2621, 2147483648
        %v2861 = vor.u32 1.1754944e-38, %v2860
        %v2862 = vsel %vm2859, %v2861, %v2857
        %v2863 = vmul.f32 1.0, %v2862
        %v2864 = vrcp.pop %v2622
        %v2865 = vmul.f32 %v2622, %v2864
        %v2866 = vsub.f32 1.0, %v2865
        %v2867 = vmul.f32 %v2864, %v2866
        %v2868 = vadd.f32 %v2864, %v2867
        %vm2869 = vweird.f32 %v2622
        %vm2870 = vweird.f32 %v2864
        %vm2871 = vmor %vm2869, %vm2870
        %v2872 = vsel %vm2871, %v2864, %v2868
        %v2873 = vand.u32 2147483647, %v2622
        %vm2874 = vcmp.eq.f32.partialorder %v2873, 8.507059e+37
        %v2875 = vand.u32 %v2622, 2147483648
        %v2876 = vor.u32 1.1754944e-38, %v2875
        %v2877 = vsel %vm2874, %v2876, %v2872
        %v2878 = vmul.f32 1.0, %v2877
        %v2879 = vrcp.pop %v2623
        %v2880 = vmul.f32 %v2623, %v2879
        %v2881 = vsub.f32 1.0, %v2880
        %v2882 = vmul.f32 %v2879, %v2881
        %v2883 = vadd.f32 %v2879, %v2882
        %vm2884 = vweird.f32 %v2623
        %vm2885 = vweird.f32 %v2879
        %vm2886 = vmor %vm2884, %vm2885
        %v2887 = vsel %vm2886, %v2879, %v2883
        %v2888 = vand.u32 2147483647, %v2623
        %vm2889 = vcmp.eq.f32.partialorder %v2888, 8.507059e+37
        %v2890 = vand.u32 %v2623, 2147483648
        %v2891 = vor.u32 1.1754944e-38, %v2890
        %v2892 = vsel %vm2889, %v2891, %v2887
        %v2893 = vmul.f32 1.0, %v2892
        %v2894 = vrcp.pop %v2624
        %v2895 = vmul.f32 %v2624, %v2894
        %v2896 = vsub.f32 1.0, %v2895
        %v2897 = vmul.f32 %v2894, %v2896
        %v2898 = vadd.f32 %v2894, %v2897
        %vm2899 = vweird.f32 %v2624
        %vm2900 = vweird.f32 %v2894
        %vm2901 = vmor %vm2899, %vm2900
        %v2902 = vsel %vm2901, %v2894, %v2898
        %v2903 = vand.u32 2147483647, %v2624
        %vm2904 = vcmp.eq.f32.partialorder %v2903, 8.507059e+37
        %v2905 = vand.u32 %v2624, 2147483648
        %v2906 = vor.u32 1.1754944e-38, %v2905
        %v2907 = vsel %vm2904, %v2906, %v2902
        %v2908 = vmul.f32 1.0, %v2907
        %v2909 = vrcp.pop %v2625
        %v2910 = vmul.f32 %v2625, %v2909
        %v2911 = vsub.f32 1.0, %v2910
        %v2912 = vmul.f32 %v2909, %v2911
        %v2913 = vadd.f32 %v2909, %v2912
        %vm2914 = vweird.f32 %v2625
        %vm2915 = vweird.f32 %v2909
        %vm2916 = vmor %vm2914, %vm2915
        %v2917 = vsel %vm2916, %v2909, %v2913
        %v2918 = vand.u32 2147483647, %v2625
        %vm2919 = vcmp.eq.f32.partialorder %v2918, 8.507059e+37
        %v2920 = vand.u32 %v2625, 2147483648
        %v2921 = vor.u32 1.1754944e-38, %v2920
        %v2922 = vsel %vm2919, %v2921, %v2917
        %v2923 = vmul.f32 1.0, %v2922
        %v2924 = vrcp.pop %v2626
        %v2925 = vmul.f32 %v2626, %v2924
        %v2926 = vsub.f32 1.0, %v2925
        %v2927 = vmul.f32 %v2924, %v2926
        %v2928 = vadd.f32 %v2924, %v2927
        %vm2929 = vweird.f32 %v2626
        %vm2930 = vweird.f32 %v2924
        %vm2931 = vmor %vm2929, %vm2930
        %v2932 = vsel %vm2931, %v2924, %v2928
        %v2933 = vand.u32 2147483647, %v2626
        %vm2934 = vcmp.eq.f32.partialorder %v2933, 8.507059e+37
        %v2935 = vand.u32 %v2626, 2147483648
        %v2936 = vor.u32 1.1754944e-38, %v2935
        %v2937 = vsel %vm2934, %v2936, %v2932
        %v2938 = vmul.f32 1.0, %v2937
        %v2939 = vrcp.pop %v2627
        %v2940 = vmul.f32 %v2627, %v2939
        %v2941 = vsub.f32 1.0, %v2940
        %v2942 = vmul.f32 %v2939, %v2941
        %v2943 = vadd.f32 %v2939, %v2942
        %vm2944 = vweird.f32 %v2627
        %vm2945 = vweird.f32 %v2939
        %vm2946 = vmor %vm2944, %vm2945
        %v2947 = vsel %vm2946, %v2939, %v2943
        %v2948 = vand.u32 2147483647, %v2627
        %vm2949 = vcmp.eq.f32.partialorder %v2948, 8.507059e+37
        %v2950 = vand.u32 %v2627, 2147483648
        %v2951 = vor.u32 1.1754944e-38, %v2950
        %v2952 = vsel %vm2949, %v2951, %v2947
        %v2953 = vmul.f32 1.0, %v2952
        %v2954 = vrcp.pop %v2628
        %v2955 = vmul.f32 %v2628, %v2954
        %v2956 = vsub.f32 1.0, %v2955
        %v2957 = vmul.f32 %v2954, %v2956
        %v2958 = vadd.f32 %v2954, %v2957
        %vm2959 = vweird.f32 %v2628
        %vm2960 = vweird.f32 %v2954
        %vm2961 = vmor %vm2959, %vm2960
        %v2962 = vsel %vm2961, %v2954, %v2958
        %v2963 = vand.u32 2147483647, %v2628
        %vm2964 = vcmp.eq.f32.partialorder %v2963, 8.507059e+37
        %v2965 = vand.u32 %v2628, 2147483648
        %v2966 = vor.u32 1.1754944e-38, %v2965
        %v2967 = vsel %vm2964, %v2966, %v2962
        %v2968 = vmul.f32 1.0, %v2967
        %v2969 = vrcp.pop %v2629
        %v2970 = vmul.f32 %v2629, %v2969
        %v2971 = vsub.f32 1.0, %v2970
        %v2972 = vmul.f32 %v2969, %v2971
        %v2973 = vadd.f32 %v2969, %v2972
        %vm2974 = vweird.f32 %v2629
        %vm2975 = vweird.f32 %v2969
        %vm2976 = vmor %vm2974, %vm2975
        %v2977 = vsel %vm2976, %v2969, %v2973
        %v2978 = vand.u32 2147483647, %v2629
        %vm2979 = vcmp.eq.f32.partialorder %v2978, 8.507059e+37
        %v2980 = vand.u32 %v2629, 2147483648
        %v2981 = vor.u32 1.1754944e-38, %v2980
        %v2982 = vsel %vm2979, %v2981, %v2977
        %v2983 = vmul.f32 1.0, %v2982
        %v2984 = vrcp.pop %v2630
        %v2985 = vmul.f32 %v2630, %v2984
        %v2986 = vsub.f32 1.0, %v2985
        %v2987 = vmul.f32 %v2984, %v2986
        %v2988 = vadd.f32 %v2984, %v2987
        %vm2989 = vweird.f32 %v2630
        %vm2990 = vweird.f32 %v2984
        %vm2991 = vmor %vm2989, %vm2990
        %v2992 = vsel %vm2991, %v2984, %v2988
        %v2993 = vand.u32 2147483647, %v2630
        %vm2994 = vcmp.eq.f32.partialorder %v2993, 8.507059e+37
        %v2995 = vand.u32 %v2630, 2147483648
        %v2996 = vor.u32 1.1754944e-38, %v2995
        %v2997 = vsel %vm2994, %v2996, %v2992
        %v2998 = vmul.f32 1.0, %v2997
        %v2999 = vrcp.pop %v2631
        %v3000 = vmul.f32 %v2631, %v2999
        %v3001 = vsub.f32 1.0, %v3000
        %v3002 = vmul.f32 %v2999, %v3001
        %v3003 = vadd.f32 %v2999, %v3002
        %vm3004 = vweird.f32 %v2631
        %vm3005 = vweird.f32 %v2999
        %vm3006 = vmor %vm3004, %vm3005
        %v3007 = vsel %vm3006, %v2999, %v3003
        %v3008 = vand.u32 2147483647, %v2631
        %vm3009 = vcmp.eq.f32.partialorder %v3008, 8.507059e+37
        %v3010 = vand.u32 %v2631, 2147483648
        %v3011 = vor.u32 1.1754944e-38, %v3010
        %v3012 = vsel %vm3009, %v3011, %v3007
        %v3013 = vmul.f32 1.0, %v3012
        %v3014 = vrcp.pop %v2632
        %v3015 = vmul.f32 %v2632, %v3014
        %v3016 = vsub.f32 1.0, %v3015
        %v3017 = vmul.f32 %v3014, %v3016
        %v3018 = vadd.f32 %v3014, %v3017
        %vm3019 = vweird.f32 %v2632
        %vm3020 = vweird.f32 %v3014
        %vm3021 = vmor %vm3019, %vm3020
        %v3022 = vsel %vm3021, %v3014, %v3018
        %v3023 = vand.u32 2147483647, %v2632
        %vm3024 = vcmp.eq.f32.partialorder %v3023, 8.507059e+37
        %v3025 = vand.u32 %v2632, 2147483648
        %v3026 = vor.u32 1.1754944e-38, %v3025
        %v3027 = vsel %vm3024, %v3026, %v3022
        %v3028 = vmul.f32 1.0, %v3027
        %v3029 = vrcp.pop %v2633
        %v3030 = vmul.f32 %v2633, %v3029
        %v3031 = vsub.f32 1.0, %v3030
        %v3032 = vmul.f32 %v3029, %v3031
        %v3033 = vadd.f32 %v3029, %v3032
        %vm3034 = vweird.f32 %v2633
        %vm3035 = vweird.f32 %v3029
        %vm3036 = vmor %vm3034, %vm3035
        %v3037 = vsel %vm3036, %v3029, %v3033
        %v3038 = vand.u32 2147483647, %v2633
        %vm3039 = vcmp.eq.f32.partialorder %v3038, 8.507059e+37
        %v3040 = vand.u32 %v2633, 2147483648
        %v3041 = vor.u32 1.1754944e-38, %v3040
        %v3042 = vsel %vm3039, %v3041, %v3037
        %v3043 = vmul.f32 1.0, %v3042
        %v3044 = vrcp.pop %v2634
        %v3045 = vmul.f32 %v2634, %v3044
        %v3046 = vsub.f32 1.0, %v3045
        %v3047 = vmul.f32 %v3044, %v3046
        %v3048 = vadd.f32 %v3044, %v3047
        %vm3049 = vweird.f32 %v2634
        %vm3050 = vweird.f32 %v3044
        %vm3051 = vmor %vm3049, %vm3050
        %v3052 = vsel %vm3051, %v3044, %v3048
        %v3053 = vand.u32 2147483647, %v2634
        %vm3054 = vcmp.eq.f32.partialorder %v3053, 8.507059e+37
        %v3055 = vand.u32 %v2634, 2147483648
        %v3056 = vor.u32 1.1754944e-38, %v3055
        %v3057 = vsel %vm3054, %v3056, %v3052
        %v3058 = vmul.f32 1.0, %v3057
        %v3059 = vrcp.pop %v2635
        %v3060 = vmul.f32 %v2635, %v3059
        %v3061 = vsub.f32 1.0, %v3060
        %v3062 = vmul.f32 %v3059, %v3061
        %v3063 = vadd.f32 %v3059, %v3062
        %vm3064 = vweird.f32 %v2635
        %vm3065 = vweird.f32 %v3059
        %vm3066 = vmor %vm3064, %vm3065
        %v3067 = vsel %vm3066, %v3059, %v3063
        %v3068 = vand.u32 2147483647, %v2635
        %vm3069 = vcmp.eq.f32.partialorder %v3068, 8.507059e+37
        %v3070 = vand.u32 %v2635, 2147483648
        %v3071 = vor.u32 1.1754944e-38, %v3070
        %v3072 = vsel %vm3069, %v3071, %v3067
        %v3073 = vmul.f32 1.0, %v3072
        %v3074 = vrcp.pop %v2636
        %v3075 = vmul.f32 %v2636, %v3074
        %v3076 = vsub.f32 1.0, %v3075
        %v3077 = vmul.f32 %v3074, %v3076
        %v3078 = vadd.f32 %v3074, %v3077
        %vm3079 = vweird.f32 %v2636
        %vm3080 = vweird.f32 %v3074
        %vm3081 = vmor %vm3079, %vm3080
        %v3082 = vsel %vm3081, %v3074, %v3078
        %v3083 = vand.u32 2147483647, %v2636
        %vm3084 = vcmp.eq.f32.partialorder %v3083, 8.507059e+37
        %v3085 = vand.u32 %v2636, 2147483648
        %v3086 = vor.u32 1.1754944e-38, %v3085
        %v3087 = vsel %vm3084, %v3086, %v3082
        %v3088 = vmul.f32 1.0, %v3087
        %v3089 = vrcp.pop %v2637
        %v3090 = vmul.f32 %v2637, %v3089
        %v3091 = vsub.f32 1.0, %v3090
        %v3092 = vmul.f32 %v3089, %v3091
        %v3093 = vadd.f32 %v3089, %v3092
        %vm3094 = vweird.f32 %v2637
        %vm3095 = vweird.f32 %v3089
        %vm3096 = vmor %vm3094, %vm3095
        %v3097 = vsel %vm3096, %v3089, %v3093
        %v3098 = vand.u32 2147483647, %v2637
        %vm3099 = vcmp.eq.f32.partialorder %v3098, 8.507059e+37
        %v3100 = vand.u32 %v2637, 2147483648
        %v3101 = vor.u32 1.1754944e-38, %v3100
        %v3102 = vsel %vm3099, %v3101, %v3097
        %v3103 = vmul.f32 1.0, %v3102
        %v3104 = vrcp.pop %v2638
        %v3105 = vmul.f32 %v2638, %v3104
        %v3106 = vsub.f32 1.0, %v3105
        %v3107 = vmul.f32 %v3104, %v3106
        %v3108 = vadd.f32 %v3104, %v3107
        %vm3109 = vweird.f32 %v2638
        %vm3110 = vweird.f32 %v3104
        %vm3111 = vmor %vm3109, %vm3110
        %v3112 = vsel %vm3111, %v3104, %v3108
        %v3113 = vand.u32 2147483647, %v2638
        %vm3114 = vcmp.eq.f32.partialorder %v3113, 8.507059e+37
        %v3115 = vand.u32 %v2638, 2147483648
        %v3116 = vor.u32 1.1754944e-38, %v3115
        %v3117 = vsel %vm3114, %v3116, %v3112
        %v3118 = vmul.f32 1.0, %v3117
        %v3119 = vtanh.pop %v2479
        %v3120 = vtanh.pop %v2480
        %v3121 = vtanh.pop %v2481
        %v3122 = vtanh.pop %v2482
        %v3123 = vtanh.pop %v2483
        %v3124 = vtanh.pop %v2484
        %v3125 = vtanh.pop %v2485
        %v3126 = vtanh.pop %v2486
        %v3127 = vtanh.pop %v2487
        %v3128 = vtanh.pop %v2488
        %v3129 = vtanh.pop %v2489
        %v3130 = vtanh.pop %v2490
        %v3131 = vtanh.pop %v2491
        %v3132 = vtanh.pop %v2492
        %v3133 = vtanh.pop %v2493
        %v3134 = vtanh.pop %v2494
        %v3135 = vtanh.pop %v2495
        %v3136 = vtanh.pop %v2496
        %v3137 = vtanh.pop %v2497
        %v3138 = vtanh.pop %v2498
        %v3139 = vtanh.pop %v2499
        %v3140 = vtanh.pop %v2500
        %v3141 = vtanh.pop %v2501
        %v3142 = vtanh.pop %v2502
        %v3143 = vtanh.pop %v2503
        %v3144 = vtanh.pop %v2504
        %v3145 = vtanh.pop %v2505
        %v3146 = vtanh.pop %v2506
        %v3147 = vtanh.pop %v2507
        %v3148 = vtanh.pop %v2508
        %v3149 = vtanh.pop %v2509
        %v3150 = vtanh.pop %v2510
        %v3151 = vmul.f32 %v2653, %v3119
        %v3152 = vmul.f32 %v2668, %v3120
        %v3153 = vmul.f32 %v2683, %v3121
        %v3154 = vmul.f32 %v2698, %v3122
        %v3155 = vmul.f32 %v2713, %v3123
        %v3156 = vmul.f32 %v2728, %v3124
        %v3157 = vmul.f32 %v2743, %v3125
        %v3158 = vmul.f32 %v2758, %v3126
        %v3159 = vmul.f32 %v2773, %v3127
        %v3160 = vmul.f32 %v2788, %v3128
        %v3161 = vmul.f32 %v2803, %v3129
        %v3162 = vmul.f32 %v2818, %v3130
        %v3163 = vmul.f32 %v2833, %v3131
        %v3164 = vmul.f32 %v2848, %v3132
        %v3165 = vmul.f32 %v2863, %v3133
        %v3166 = vmul.f32 %v2878, %v3134
        %v3167 = vmul.f32 %v2893, %v3135
        %v3168 = vmul.f32 %v2908, %v3136
        %v3169 = vmul.f32 %v2923, %v3137
        %v3170 = vmul.f32 %v2938, %v3138
        %v3171 = vmul.f32 %v2953, %v3139
        %v3172 = vmul.f32 %v2968, %v3140
        %v3173 = vmul.f32 %v2983, %v3141
        %v3174 = vmul.f32 %v2998, %v3142
        %v3175 = vmul.f32 %v3013, %v3143
        %v3176 = vmul.f32 %v3028, %v3144
        %v3177 = vmul.f32 %v3043, %v3145
        %v3178 = vmul.f32 %v3058, %v3146
        %v3179 = vmul.f32 %v3073, %v3147
        %v3180 = vmul.f32 %v3088, %v3148
        %v3181 = vmul.f32 %v3103, %v3149
        %v3182 = vmul.f32 %v3118, %v3150
        %v3183 = vpack.c.bf16 %v3152, %v3151
        %v3184 = vpack.c.bf16 %v3154, %v3153
        %v3185 = vpack.c.bf16 %v3156, %v3155
        %v3186 = vpack.c.bf16 %v3158, %v3157
        %v3187 = vpack.c.bf16 %v3160, %v3159
        %v3188 = vpack.c.bf16 %v3162, %v3161
        %v3189 = vpack.c.bf16 %v3164, %v3163
        %v3190 = vpack.c.bf16 %v3166, %v3165
        %v3191 = vpack.c.bf16 %v3168, %v3167
        %v3192 = vpack.c.bf16 %v3170, %v3169
        %v3193 = vpack.c.bf16 %v3172, %v3171
        %v3194 = vpack.c.bf16 %v3174, %v3173
        %v3195 = vpack.c.bf16 %v3176, %v3175
        %v3196 = vpack.c.bf16 %v3178, %v3177
        %v3197 = vpack.c.bf16 %v3180, %v3179
        %v3198 = vpack.c.bf16 %v3182, %v3181
        %v3199 = vld [vmem:[%s8] sm:$0xff]
        %v3200 = vld [vmem:[%s8 + $0x8] sm:$0xff]
        %v3201 = vld [vmem:[%s8 + $0x10] sm:$0xff]
        %v3202 = vld [vmem:[%s8 + $0x18] sm:$0xff]
        %v3203 = vld [vmem:[%s8 + $0x20] sm:$0xff]
        %v3204 = vld [vmem:[%s8 + $0x28] sm:$0xff]
        %v3205 = vld [vmem:[%s8 + $0x30] sm:$0xff]
        %v3206 = vld [vmem:[%s8 + $0x38] sm:$0xff]
        %v3207 = vld [vmem:[%s8 + $0x40] sm:$0xff]
        %v3208 = vld [vmem:[%s8 + $0x48] sm:$0xff]
        %v3209 = vld [vmem:[%s8 + $0x50] sm:$0xff]
        %v3210 = vld [vmem:[%s8 + $0x58] sm:$0xff]
        %v3211 = vld [vmem:[%s8 + $0x60] sm:$0xff]
        %v3212 = vld [vmem:[%s8 + $0x68] sm:$0xff]
        %v3213 = vld [vmem:[%s8 + $0x70] sm:$0xff]
        %v3214 = vld [vmem:[%s8 + $0x78] sm:$0xff]
        %v3231 = vunpack.c.l.b16 %v3199
        %v3232 = vunpack.c.h.b16 %v3199
        %v3233 = vunpack.c.l.b16 %v3200
        %v3234 = vunpack.c.h.b16 %v3200
        %v3235 = vunpack.c.l.b16 %v3201
        %v3236 = vunpack.c.h.b16 %v3201
        %v3237 = vunpack.c.l.b16 %v3202
        %v3238 = vunpack.c.h.b16 %v3202
        %v3239 = vunpack.c.l.b16 %v3203
        %v3240 = vunpack.c.h.b16 %v3203
        %v3241 = vunpack.c.l.b16 %v3204
        %v3242 = vunpack.c.h.b16 %v3204
        %v3243 = vunpack.c.l.b16 %v3205
        %v3244 = vunpack.c.h.b16 %v3205
        %v3245 = vunpack.c.l.b16 %v3206
        %v3246 = vunpack.c.h.b16 %v3206
        %v3247 = vunpack.c.l.b16 %v3207
        %v3248 = vunpack.c.h.b16 %v3207
        %v3249 = vunpack.c.l.b16 %v3208
        %v3250 = vunpack.c.h.b16 %v3208
        %v3251 = vunpack.c.l.b16 %v3209
        %v3252 = vunpack.c.h.b16 %v3209
        %v3253 = vunpack.c.l.b16 %v3210
        %v3254 = vunpack.c.h.b16 %v3210
        %v3255 = vunpack.c.l.b16 %v3211
        %v3256 = vunpack.c.h.b16 %v3211
        %v3257 = vunpack.c.l.b16 %v3212
        %v3258 = vunpack.c.h.b16 %v3212
        %v3259 = vunpack.c.l.b16 %v3213
        %v3260 = vunpack.c.h.b16 %v3213
        %v3261 = vunpack.c.l.b16 %v3214
        %v3262 = vunpack.c.h.b16 %v3214
        %v3263 = vpack.c.b16 %v3233, %v3231
        %v3264 = vpack.c.b16 %v3234, %v3232
        %v3265 = vpack.c.b16 %v3237, %v3235
        %v3266 = vpack.c.b16 %v3238, %v3236
        %v3267 = vpack.c.b16 %v3241, %v3239
        %v3268 = vpack.c.b16 %v3242, %v3240
        %v3269 = vpack.c.b16 %v3245, %v3243
        %v3270 = vpack.c.b16 %v3246, %v3244
        %v3271 = vpack.c.b16 %v3249, %v3247
        %v3272 = vpack.c.b16 %v3250, %v3248
        %v3273 = vpack.c.b16 %v3253, %v3251
        %v3274 = vpack.c.b16 %v3254, %v3252
        %v3275 = vpack.c.b16 %v3257, %v3255
        %v3276 = vpack.c.b16 %v3258, %v3256
        %v3277 = vpack.c.b16 %v3261, %v3259
        %v3278 = vpack.c.b16 %v3262, %v3260
        %3295 = vmatpush.bf16.msra.mxu0 %v3277
        %3296 = vmatpush.bf16.msra.mxu0 %v3275
        %3297 = vmatpush.bf16.msra.mxu0 %v3273
        %3298 = vmatpush.bf16.msra.mxu0 %v3271
        %3299 = vmatpush.bf16.msra.mxu0 %v3269
        %3300 = vmatpush.bf16.msra.mxu0 %v3267
        %3301 = vmatpush.bf16.msra.mxu0 %v3265
        %3302 = vmatpush.bf16.msra.mxu0 %v3263
        %3303 = vmatmul.bf16.gmra.mxu0 %v3183
        %v3304 = vpop.f32.mrf.mxu0
        %v3305 = vadd.f32 0.0, %v3304
        %v3306 = vpop.f32.mrf.mxu0
        %v3307 = vadd.f32 0.0, %v3306
        %3308 = vmatmul.bf16.gmra.mxu0 %v3184
        %v3309 = vpop.f32.mrf.mxu0
        %v3310 = vadd.f32 0.0, %v3309
        %v3311 = vpop.f32.mrf.mxu0
        %v3312 = vadd.f32 0.0, %v3311
        %3313 = vmatmul.bf16.gmra.mxu0 %v3185
        %v3314 = vpop.f32.mrf.mxu0
        %v3315 = vadd.f32 0.0, %v3314
        %v3316 = vpop.f32.mrf.mxu0
        %v3317 = vadd.f32 0.0, %v3316
        %3318 = vmatmul.bf16.gmra.mxu0 %v3186
        %v3319 = vpop.f32.mrf.mxu0
        %v3320 = vadd.f32 0.0, %v3319
        %v3321 = vpop.f32.mrf.mxu0
        %v3322 = vadd.f32 0.0, %v3321
        %3323 = vmatmul.bf16.gmra.mxu0 %v3187
        %v3324 = vpop.f32.mrf.mxu0
        %v3325 = vadd.f32 0.0, %v3324
        %v3326 = vpop.f32.mrf.mxu0
        %v3327 = vadd.f32 0.0, %v3326
        %3328 = vmatmul.bf16.gmra.mxu0 %v3188
        %v3329 = vpop.f32.mrf.mxu0
        %v3330 = vadd.f32 0.0, %v3329
        %v3331 = vpop.f32.mrf.mxu0
        %v3332 = vadd.f32 0.0, %v3331
        %3333 = vmatmul.bf16.gmra.mxu0 %v3189
        %v3334 = vpop.f32.mrf.mxu0
        %v3335 = vadd.f32 0.0, %v3334
        %v3336 = vpop.f32.mrf.mxu0
        %v3337 = vadd.f32 0.0, %v3336
        %3338 = vmatmul.bf16.gmra.mxu0 %v3190
        %v3339 = vpop.f32.mrf.mxu0
        %v3340 = vadd.f32 0.0, %v3339
        %v3341 = vpop.f32.mrf.mxu0
        %v3342 = vadd.f32 0.0, %v3341
        %3343 = vmatmul.bf16.gmra.mxu0 %v3191
        %v3344 = vpop.f32.mrf.mxu0
        %v3345 = vadd.f32 0.0, %v3344
        %v3346 = vpop.f32.mrf.mxu0
        %v3347 = vadd.f32 0.0, %v3346
        %3348 = vmatmul.bf16.gmra.mxu0 %v3192
        %v3349 = vpop.f32.mrf.mxu0
        %v3350 = vadd.f32 0.0, %v3349
        %v3351 = vpop.f32.mrf.mxu0
        %v3352 = vadd.f32 0.0, %v3351
        %3353 = vmatmul.bf16.gmra.mxu0 %v3193
        %v3354 = vpop.f32.mrf.mxu0
        %v3355 = vadd.f32 0.0, %v3354
        %v3356 = vpop.f32.mrf.mxu0
        %v3357 = vadd.f32 0.0, %v3356
        %3358 = vmatmul.bf16.gmra.mxu0 %v3194
        %v3359 = vpop.f32.mrf.mxu0
        %v3360 = vadd.f32 0.0, %v3359
        %v3361 = vpop.f32.mrf.mxu0
        %v3362 = vadd.f32 0.0, %v3361
        %3363 = vmatmul.bf16.gmra.mxu0 %v3195
        %v3364 = vpop.f32.mrf.mxu0
        %v3365 = vadd.f32 0.0, %v3364
        %v3366 = vpop.f32.mrf.mxu0
        %v3367 = vadd.f32 0.0, %v3366
        %3368 = vmatmul.bf16.gmra.mxu0 %v3196
        %v3369 = vpop.f32.mrf.mxu0
        %v3370 = vadd.f32 0.0, %v3369
        %v3371 = vpop.f32.mrf.mxu0
        %v3372 = vadd.f32 0.0, %v3371
        %3373 = vmatmul.bf16.gmra.mxu0 %v3197
        %v3374 = vpop.f32.mrf.mxu0
        %v3375 = vadd.f32 0.0, %v3374
        %v3376 = vpop.f32.mrf.mxu0
        %v3377 = vadd.f32 0.0, %v3376
        %3378 = vmatmul.bf16.gmra.mxu0 %v3198
        %v3379 = vpop.f32.mrf.mxu0
        %v3380 = vadd.f32 0.0, %v3379
        %v3381 = vpop.f32.mrf.mxu0
        %v3382 = vadd.f32 0.0, %v3381
        %3383 = vdwg.mxu0
        %3384 = vmatpush.bf16.msra.mxu0 %v3278
        %3385 = vmatpush.bf16.msra.mxu0 %v3276
        %3386 = vmatpush.bf16.msra.mxu0 %v3274
        %3387 = vmatpush.bf16.msra.mxu0 %v3272
        %3388 = vmatpush.bf16.msra.mxu0 %v3270
        %3389 = vmatpush.bf16.msra.mxu0 %v3268
        %3390 = vmatpush.bf16.msra.mxu0 %v3266
        %3391 = vmatpush.bf16.msra.mxu0 %v3264
        %3392 = vmatmul.bf16.gmra.mxu0 %v3183
        %v3393 = vpop.f32.mrf.mxu0
        %v3394 = vadd.f32 0.0, %v3393
        %v3395 = vpop.f32.mrf.mxu0
        %v3396 = vadd.f32 0.0, %v3395
        %3397 = vmatmul.bf16.gmra.mxu0 %v3184
        %v3398 = vpop.f32.mrf.mxu0
        %v3399 = vadd.f32 0.0, %v3398
        %v3400 = vpop.f32.mrf.mxu0
        %v3401 = vadd.f32 0.0, %v3400
        %3402 = vmatmul.bf16.gmra.mxu0 %v3185
        %v3403 = vpop.f32.mrf.mxu0
        %v3404 = vadd.f32 0.0, %v3403
        %v3405 = vpop.f32.mrf.mxu0
        %v3406 = vadd.f32 0.0, %v3405
        %3407 = vmatmul.bf16.gmra.mxu0 %v3186
        %v3408 = vpop.f32.mrf.mxu0
        %v3409 = vadd.f32 0.0, %v3408
        %v3410 = vpop.f32.mrf.mxu0
        %v3411 = vadd.f32 0.0, %v3410
        %3412 = vmatmul.bf16.gmra.mxu0 %v3187
        %v3413 = vpop.f32.mrf.mxu0
        %v3414 = vadd.f32 0.0, %v3413
        %v3415 = vpop.f32.mrf.mxu0
        %v3416 = vadd.f32 0.0, %v3415
        %3417 = vmatmul.bf16.gmra.mxu0 %v3188
        %v3418 = vpop.f32.mrf.mxu0
        %v3419 = vadd.f32 0.0, %v3418
        %v3420 = vpop.f32.mrf.mxu0
        %v3421 = vadd.f32 0.0, %v3420
        %3422 = vmatmul.bf16.gmra.mxu0 %v3189
        %v3423 = vpop.f32.mrf.mxu0
        %v3424 = vadd.f32 0.0, %v3423
        %v3425 = vpop.f32.mrf.mxu0
        %v3426 = vadd.f32 0.0, %v3425
        %3427 = vmatmul.bf16.gmra.mxu0 %v3190
        %v3428 = vpop.f32.mrf.mxu0
        %v3429 = vadd.f32 0.0, %v3428
        %v3430 = vpop.f32.mrf.mxu0
        %v3431 = vadd.f32 0.0, %v3430
        %3432 = vmatmul.bf16.gmra.mxu0 %v3191
        %v3433 = vpop.f32.mrf.mxu0
        %v3434 = vadd.f32 0.0, %v3433
        %v3435 = vpop.f32.mrf.mxu0
        %v3436 = vadd.f32 0.0, %v3435
        %3437 = vmatmul.bf16.gmra.mxu0 %v3192
        %v3438 = vpop.f32.mrf.mxu0
        %v3439 = vadd.f32 0.0, %v3438
        %v3440 = vpop.f32.mrf.mxu0
        %v3441 = vadd.f32 0.0, %v3440
        %3442 = vmatmul.bf16.gmra.mxu0 %v3193
        %v3443 = vpop.f32.mrf.mxu0
        %v3444 = vadd.f32 0.0, %v3443
        %v3445 = vpop.f32.mrf.mxu0
        %v3446 = vadd.f32 0.0, %v3445
        %3447 = vmatmul.bf16.gmra.mxu0 %v3194
        %v3448 = vpop.f32.mrf.mxu0
        %v3449 = vadd.f32 0.0, %v3448
        %v3450 = vpop.f32.mrf.mxu0
        %v3451 = vadd.f32 0.0, %v3450
        %3452 = vmatmul.bf16.gmra.mxu0 %v3195
        %v3453 = vpop.f32.mrf.mxu0
        %v3454 = vadd.f32 0.0, %v3453
        %v3455 = vpop.f32.mrf.mxu0
        %v3456 = vadd.f32 0.0, %v3455
        %3457 = vmatmul.bf16.gmra.mxu0 %v3196
        %v3458 = vpop.f32.mrf.mxu0
        %v3459 = vadd.f32 0.0, %v3458
        %v3460 = vpop.f32.mrf.mxu0
        %v3461 = vadd.f32 0.0, %v3460
        %3462 = vmatmul.bf16.gmra.mxu0 %v3197
        %v3463 = vpop.f32.mrf.mxu0
        %v3464 = vadd.f32 0.0, %v3463
        %v3465 = vpop.f32.mrf.mxu0
        %v3466 = vadd.f32 0.0, %v3465
        %3467 = vmatmul.bf16.gmra.mxu0 %v3198
        %v3468 = vpop.f32.mrf.mxu0
        %v3469 = vadd.f32 0.0, %v3468
        %v3470 = vpop.f32.mrf.mxu0
        %v3471 = vadd.f32 0.0, %v3470
        %3472 = vdwg.mxu0
        %v3473 = vld [vmem:[%s579] sm:$0xff]
        %v3474 = vld [vmem:[%s579 + $0x8] sm:$0xff]
        %v3475 = vld [vmem:[%s579 + $0x10] sm:$0xff]
        %v3476 = vld [vmem:[%s579 + $0x18] sm:$0xff]
        %v3477 = vld [vmem:[%s579 + $0x20] sm:$0xff]
        %v3478 = vld [vmem:[%s579 + $0x28] sm:$0xff]
        %v3479 = vld [vmem:[%s579 + $0x30] sm:$0xff]
        %v3480 = vld [vmem:[%s579 + $0x38] sm:$0xff]
        %v3481 = vld [vmem:[%s579 + $0x40] sm:$0xff]
        %v3482 = vld [vmem:[%s579 + $0x48] sm:$0xff]
        %v3483 = vld [vmem:[%s579 + $0x50] sm:$0xff]
        %v3484 = vld [vmem:[%s579 + $0x58] sm:$0xff]
        %v3485 = vld [vmem:[%s579 + $0x60] sm:$0xff]
        %v3486 = vld [vmem:[%s579 + $0x68] sm:$0xff]
        %v3487 = vld [vmem:[%s579 + $0x70] sm:$0xff]
        %v3488 = vld [vmem:[%s579 + $0x78] sm:$0xff]
        %v3489 = vld [vmem:[%s579 + $0x80] sm:$0xff]
        %v3490 = vld [vmem:[%s579 + $0x88] sm:$0xff]
        %v3491 = vld [vmem:[%s579 + $0x90] sm:$0xff]
        %v3492 = vld [vmem:[%s579 + $0x98] sm:$0xff]
        %v3493 = vld [vmem:[%s579 + $0xa0] sm:$0xff]
        %v3494 = vld [vmem:[%s579 + $0xa8] sm:$0xff]
        %v3495 = vld [vmem:[%s579 + $0xb0] sm:$0xff]
        %v3496 = vld [vmem:[%s579 + $0xb8] sm:$0xff]
        %v3497 = vld [vmem:[%s579 + $0xc0] sm:$0xff]
        %v3498 = vld [vmem:[%s579 + $0xc8] sm:$0xff]
        %v3499 = vld [vmem:[%s579 + $0xd0] sm:$0xff]
        %v3500 = vld [vmem:[%s579 + $0xd8] sm:$0xff]
        %v3501 = vld [vmem:[%s579 + $0xe0] sm:$0xff]
        %v3502 = vld [vmem:[%s579 + $0xe8] sm:$0xff]
        %v3503 = vld [vmem:[%s579 + $0xf0] sm:$0xff]
        %v3504 = vld [vmem:[%s579 + $0xf8] sm:$0xff]
        %v3505 = vadd.f32 %v3473, %v3305
        %v3506 = vadd.f32 %v3474, %v3307
        %v3507 = vadd.f32 %v3475, %v3310
        %v3508 = vadd.f32 %v3476, %v3312
        %v3509 = vadd.f32 %v3477, %v3315
        %v3510 = vadd.f32 %v3478, %v3317
        %v3511 = vadd.f32 %v3479, %v3320
        %v3512 = vadd.f32 %v3480, %v3322
        %v3513 = vadd.f32 %v3481, %v3325
        %v3514 = vadd.f32 %v3482, %v3327
        %v3515 = vadd.f32 %v3483, %v3330
        %v3516 = vadd.f32 %v3484, %v3332
        %v3517 = vadd.f32 %v3485, %v3335
        %v3518 = vadd.f32 %v3486, %v3337
        %v3519 = vadd.f32 %v3487, %v3340
        %v3520 = vadd.f32 %v3488, %v3342
        %v3521 = vadd.f32 %v3489, %v3345
        %v3522 = vadd.f32 %v3490, %v3347
        %v3523 = vadd.f32 %v3491, %v3350
        %v3524 = vadd.f32 %v3492, %v3352
        %v3525 = vadd.f32 %v3493, %v3355
        %v3526 = vadd.f32 %v3494, %v3357
        %v3527 = vadd.f32 %v3495, %v3360
        %v3528 = vadd.f32 %v3496, %v3362
        %v3529 = vadd.f32 %v3497, %v3365
        %v3530 = vadd.f32 %v3498, %v3367
        %v3531 = vadd.f32 %v3499, %v3370
        %v3532 = vadd.f32 %v3500, %v3372
        %v3533 = vadd.f32 %v3501, %v3375
        %v3534 = vadd.f32 %v3502, %v3377
        %v3535 = vadd.f32 %v3503, %v3380
        %v3536 = vadd.f32 %v3504, %v3382
        %v3537 = vperm.slane %v599, 5
        %v3538 = vadd.f32 %v3505, %v3537
        %v3539 = vadd.f32 %v3506, %v3537
        %v3540 = vadd.f32 %v3507, %v3537
        %v3541 = vadd.f32 %v3508, %v3537
        %v3542 = vadd.f32 %v3509, %v3537
        %v3543 = vadd.f32 %v3510, %v3537
        %v3544 = vadd.f32 %v3511, %v3537
        %v3545 = vadd.f32 %v3512, %v3537
        %v3546 = vadd.f32 %v3513, %v3537
        %v3547 = vadd.f32 %v3514, %v3537
        %v3548 = vadd.f32 %v3515, %v3537
        %v3549 = vadd.f32 %v3516, %v3537
        %v3550 = vadd.f32 %v3517, %v3537
        %v3551 = vadd.f32 %v3518, %v3537
        %v3552 = vadd.f32 %v3519, %v3537
        %v3553 = vadd.f32 %v3520, %v3537
        %v3554 = vadd.f32 %v3521, %v3537
        %v3555 = vadd.f32 %v3522, %v3537
        %v3556 = vadd.f32 %v3523, %v3537
        %v3557 = vadd.f32 %v3524, %v3537
        %v3558 = vadd.f32 %v3525, %v3537
        %v3559 = vadd.f32 %v3526, %v3537
        %v3560 = vadd.f32 %v3527, %v3537
        %v3561 = vadd.f32 %v3528, %v3537
        %v3562 = vadd.f32 %v3529, %v3537
        %v3563 = vadd.f32 %v3530, %v3537
        %v3564 = vadd.f32 %v3531, %v3537
        %v3565 = vadd.f32 %v3532, %v3537
        %v3566 = vadd.f32 %v3533, %v3537
        %v3567 = vadd.f32 %v3534, %v3537
        %v3568 = vadd.f32 %v3535, %v3537
        %v3569 = vadd.f32 %v3536, %v3537
        %v3570 = vmul.f32 %v3538, 0.70710677
        %v3571 = vmul.f32 %v3539, 0.70710677
        %v3572 = vmul.f32 %v3540, 0.70710677
        %v3573 = vmul.f32 %v3541, 0.70710677
        %v3574 = vmul.f32 %v3542, 0.70710677
        %v3575 = vmul.f32 %v3543, 0.70710677
        %v3576 = vmul.f32 %v3544, 0.70710677
        %v3577 = vmul.f32 %v3545, 0.70710677
        %v3578 = vmul.f32 %v3546, 0.70710677
        %v3579 = vmul.f32 %v3547, 0.70710677
        %v3580 = vmul.f32 %v3548, 0.70710677
        %v3581 = vmul.f32 %v3549, 0.70710677
        %v3582 = vmul.f32 %v3550, 0.70710677
        %v3583 = vmul.f32 %v3551, 0.70710677
        %v3584 = vmul.f32 %v3552, 0.70710677
        %v3585 = vmul.f32 %v3553, 0.70710677
        %v3586 = vmul.f32 %v3554, 0.70710677
        %v3587 = vmul.f32 %v3555, 0.70710677
        %v3588 = vmul.f32 %v3556, 0.70710677
        %v3589 = vmul.f32 %v3557, 0.70710677
        %v3590 = vmul.f32 %v3558, 0.70710677
        %v3591 = vmul.f32 %v3559, 0.70710677
        %v3592 = vmul.f32 %v3560, 0.70710677
        %v3593 = vmul.f32 %v3561, 0.70710677
        %v3594 = vmul.f32 %v3562, 0.70710677
        %v3595 = vmul.f32 %v3563, 0.70710677
        %v3596 = vmul.f32 %v3564, 0.70710677
        %v3597 = vmul.f32 %v3565, 0.70710677
        %v3598 = vmul.f32 %v3566, 0.70710677
        %v3599 = vmul.f32 %v3567, 0.70710677
        %v3600 = vmul.f32 %v3568, 0.70710677
        %v3601 = vmul.f32 %v3569, 0.70710677
        %v3602 = vpack.c.bf16 %v3570, %v3570
        %v3603 = vpack.c.bf16 %v3571, %v3571
        %v3604 = vpack.c.bf16 %v3572, %v3572
        %v3605 = vpack.c.bf16 %v3573, %v3573
        %v3606 = vpack.c.bf16 %v3574, %v3574
        %v3607 = vpack.c.bf16 %v3575, %v3575
        %v3608 = vpack.c.bf16 %v3576, %v3576
        %v3609 = vpack.c.bf16 %v3577, %v3577
        %v3610 = vpack.c.bf16 %v3578, %v3578
        %v3611 = vpack.c.bf16 %v3579, %v3579
        %v3612 = vpack.c.bf16 %v3580, %v3580
        %v3613 = vpack.c.bf16 %v3581, %v3581
        %v3614 = vpack.c.bf16 %v3582, %v3582
        %v3615 = vpack.c.bf16 %v3583, %v3583
        %v3616 = vpack.c.bf16 %v3584, %v3584
        %v3617 = vpack.c.bf16 %v3585, %v3585
        %v3618 = vpack.c.bf16 %v3586, %v3586
        %v3619 = vpack.c.bf16 %v3587, %v3587
        %v3620 = vpack.c.bf16 %v3588, %v3588
        %v3621 = vpack.c.bf16 %v3589, %v3589
        %v3622 = vpack.c.bf16 %v3590, %v3590
        %v3623 = vpack.c.bf16 %v3591, %v3591
        %v3624 = vpack.c.bf16 %v3592, %v3592
        %v3625 = vpack.c.bf16 %v3593, %v3593
        %v3626 = vpack.c.bf16 %v3594, %v3594
        %v3627 = vpack.c.bf16 %v3595, %v3595
        %v3628 = vpack.c.bf16 %v3596, %v3596
        %v3629 = vpack.c.bf16 %v3597, %v3597
        %v3630 = vpack.c.bf16 %v3598, %v3598
        %v3631 = vpack.c.bf16 %v3599, %v3599
        %v3632 = vpack.c.bf16 %v3600, %v3600
        %v3633 = vpack.c.bf16 %v3601, %v3601
        %3634 = vst [vmem:[%s563] sm:$0xf] %v3602
        %3635 = vst [vmem:[%s563 + $0x4] sm:$0xf] %v3603
        %3636 = vst [vmem:[%s563 + $0x8] sm:$0xf] %v3604
        %3637 = vst [vmem:[%s563 + $0xc] sm:$0xf] %v3605
        %3638 = vst [vmem:[%s563 + $0x10] sm:$0xf] %v3606
        %3639 = vst [vmem:[%s563 + $0x14] sm:$0xf] %v3607
        %3640 = vst [vmem:[%s563 + $0x18] sm:$0xf] %v3608
        %3641 = vst [vmem:[%s563 + $0x1c] sm:$0xf] %v3609
        %3642 = vst [vmem:[%s563 + $0x20] sm:$0xf] %v3610
        %3643 = vst [vmem:[%s563 + $0x24] sm:$0xf] %v3611
        %3644 = vst [vmem:[%s563 + $0x28] sm:$0xf] %v3612
        %3645 = vst [vmem:[%s563 + $0x2c] sm:$0xf] %v3613
        %3646 = vst [vmem:[%s563 + $0x30] sm:$0xf] %v3614
        %3647 = vst [vmem:[%s563 + $0x34] sm:$0xf] %v3615
        %3648 = vst [vmem:[%s563 + $0x38] sm:$0xf] %v3616
        %3649 = vst [vmem:[%s563 + $0x3c] sm:$0xf] %v3617
        %3650 = vst [vmem:[%s563 + $0x40] sm:$0xf] %v3618
        %3651 = vst [vmem:[%s563 + $0x44] sm:$0xf] %v3619
        %3652 = vst [vmem:[%s563 + $0x48] sm:$0xf] %v3620
        %3653 = vst [vmem:[%s563 + $0x4c] sm:$0xf] %v3621
        %3654 = vst [vmem:[%s563 + $0x50] sm:$0xf] %v3622
        %3655 = vst [vmem:[%s563 + $0x54] sm:$0xf] %v3623
        %3656 = vst [vmem:[%s563 + $0x58] sm:$0xf] %v3624
        %3657 = vst [vmem:[%s563 + $0x5c] sm:$0xf] %v3625
        %3658 = vst [vmem:[%s563 + $0x60] sm:$0xf] %v3626
        %3659 = vst [vmem:[%s563 + $0x64] sm:$0xf] %v3627
        %3660 = vst [vmem:[%s563 + $0x68] sm:$0xf] %v3628
        %3661 = vst [vmem:[%s563 + $0x6c] sm:$0xf] %v3629
        %3662 = vst [vmem:[%s563 + $0x70] sm:$0xf] %v3630
        %3663 = vst [vmem:[%s563 + $0x74] sm:$0xf] %v3631
        %3664 = vst [vmem:[%s563 + $0x78] sm:$0xf] %v3632
        %3665 = vst [vmem:[%s563 + $0x7c] sm:$0xf] %v3633
        %v3666 = vperm.slane %v599, 6
        %v3667 = vadd.f32 %v3394, %v3666
        %v3668 = vadd.f32 %v3396, %v3666
        %v3669 = vadd.f32 %v3399, %v3666
        %v3670 = vadd.f32 %v3401, %v3666
        %v3671 = vadd.f32 %v3404, %v3666
        %v3672 = vadd.f32 %v3406, %v3666
        %v3673 = vadd.f32 %v3409, %v3666
        %v3674 = vadd.f32 %v3411, %v3666
        %v3675 = vadd.f32 %v3414, %v3666
        %v3676 = vadd.f32 %v3416, %v3666
        %v3677 = vadd.f32 %v3419, %v3666
        %v3678 = vadd.f32 %v3421, %v3666
        %v3679 = vadd.f32 %v3424, %v3666
        %v3680 = vadd.f32 %v3426, %v3666
        %v3681 = vadd.f32 %v3429, %v3666
        %v3682 = vadd.f32 %v3431, %v3666
        %v3683 = vadd.f32 %v3434, %v3666
        %v3684 = vadd.f32 %v3436, %v3666
        %v3685 = vadd.f32 %v3439, %v3666
        %v3686 = vadd.f32 %v3441, %v3666
        %v3687 = vadd.f32 %v3444, %v3666
        %v3688 = vadd.f32 %v3446, %v3666
        %v3689 = vadd.f32 %v3449, %v3666
        %v3690 = vadd.f32 %v3451, %v3666
        %v3691 = vadd.f32 %v3454, %v3666
        %v3692 = vadd.f32 %v3456, %v3666
        %v3693 = vadd.f32 %v3459, %v3666
        %v3694 = vadd.f32 %v3461, %v3666
        %v3695 = vadd.f32 %v3464, %v3666
        %v3696 = vadd.f32 %v3466, %v3666
        %v3697 = vadd.f32 %v3469, %v3666
        %v3698 = vadd.f32 %v3471, %v3666
        %v3699 = vpack.c.bf16 %v3667, %v3667
        %v3700 = vpack.c.bf16 %v3668, %v3668
        %v3701 = vpack.c.bf16 %v3669, %v3669
        %v3702 = vpack.c.bf16 %v3670, %v3670
        %v3703 = vpack.c.bf16 %v3671, %v3671
        %v3704 = vpack.c.bf16 %v3672, %v3672
        %v3705 = vpack.c.bf16 %v3673, %v3673
        %v3706 = vpack.c.bf16 %v3674, %v3674
        %v3707 = vpack.c.bf16 %v3675, %v3675
        %v3708 = vpack.c.bf16 %v3676, %v3676
        %v3709 = vpack.c.bf16 %v3677, %v3677
        %v3710 = vpack.c.bf16 %v3678, %v3678
        %v3711 = vpack.c.bf16 %v3679, %v3679
        %v3712 = vpack.c.bf16 %v3680, %v3680
        %v3713 = vpack.c.bf16 %v3681, %v3681
        %v3714 = vpack.c.bf16 %v3682, %v3682
        %v3715 = vpack.c.bf16 %v3683, %v3683
        %v3716 = vpack.c.bf16 %v3684, %v3684
        %v3717 = vpack.c.bf16 %v3685, %v3685
        %v3718 = vpack.c.bf16 %v3686, %v3686
        %v3719 = vpack.c.bf16 %v3687, %v3687
        %v3720 = vpack.c.bf16 %v3688, %v3688
        %v3721 = vpack.c.bf16 %v3689, %v3689
        %v3722 = vpack.c.bf16 %v3690, %v3690
        %v3723 = vpack.c.bf16 %v3691, %v3691
        %v3724 = vpack.c.bf16 %v3692, %v3692
        %v3725 = vpack.c.bf16 %v3693, %v3693
        %v3726 = vpack.c.bf16 %v3694, %v3694
        %v3727 = vpack.c.bf16 %v3695, %v3695
        %v3728 = vpack.c.bf16 %v3696, %v3696
        %v3729 = vpack.c.bf16 %v3697, %v3697
        %v3730 = vpack.c.bf16 %v3698, %v3698
        %3731 = vst [vmem:[%s570] sm:$0xf] %v3699
        %3732 = vst [vmem:[%s570 + $0x4] sm:$0xf] %v3700
        %3733 = vst [vmem:[%s570 + $0x8] sm:$0xf] %v3701
        %3734 = vst [vmem:[%s570 + $0xc] sm:$0xf] %v3702
        %3735 = vst [vmem:[%s570 + $0x10] sm:$0xf] %v3703
        %3736 = vst [vmem:[%s570 + $0x14] sm:$0xf] %v3704
        %3737 = vst [vmem:[%s570 + $0x18] sm:$0xf] %v3705
        %3738 = vst [vmem:[%s570 + $0x1c] sm:$0xf] %v3706
        %3739 = vst [vmem:[%s570 + $0x20] sm:$0xf] %v3707
        %3740 = vst [vmem:[%s570 + $0x24] sm:$0xf] %v3708
        %3741 = vst [vmem:[%s570 + $0x28] sm:$0xf] %v3709
        %3742 = vst [vmem:[%s570 + $0x2c] sm:$0xf] %v3710
        %3743 = vst [vmem:[%s570 + $0x30] sm:$0xf] %v3711
        %3744 = vst [vmem:[%s570 + $0x34] sm:$0xf] %v3712
        %3745 = vst [vmem:[%s570 + $0x38] sm:$0xf] %v3713
        %3746 = vst [vmem:[%s570 + $0x3c] sm:$0xf] %v3714
        %3747 = vst [vmem:[%s570 + $0x40] sm:$0xf] %v3715
        %3748 = vst [vmem:[%s570 + $0x44] sm:$0xf] %v3716
        %3749 = vst [vmem:[%s570 + $0x48] sm:$0xf] %v3717
        %3750 = vst [vmem:[%s570 + $0x4c] sm:$0xf] %v3718
        %3751 = vst [vmem:[%s570 + $0x50] sm:$0xf] %v3719
        %3752 = vst [vmem:[%s570 + $0x54] sm:$0xf] %v3720
        %3753 = vst [vmem:[%s570 + $0x58] sm:$0xf] %v3721
        %3754 = vst [vmem:[%s570 + $0x5c] sm:$0xf] %v3722
        %3755 = vst [vmem:[%s570 + $0x60] sm:$0xf] %v3723
        %3756 = vst [vmem:[%s570 + $0x64] sm:$0xf] %v3724
        %3757 = vst [vmem:[%s570 + $0x68] sm:$0xf] %v3725
        %3758 = vst [vmem:[%s570 + $0x6c] sm:$0xf] %v3726
        %3759 = vst [vmem:[%s570 + $0x70] sm:$0xf] %v3727
        %3760 = vst [vmem:[%s570 + $0x74] sm:$0xf] %v3728
        %3761 = vst [vmem:[%s570 + $0x78] sm:$0xf] %v3729
        %3762 = vst [vmem:[%s570 + $0x7c] sm:$0xf] %v3730
        %s3763 = sand.u32 %s284, 1
        %s3764 = scalar_lea.sflag [#allocation5], %s3763
        %s3765 = sand.u32 %s284, 1
        %s3766 = smul.addr %s3765, 128
        %s3767 = scalar_lea.vmem [#allocation11], %s3766
        %s3768 = sand.u32 %s312, 1
        %s3769 = scalar_lea.sflag [#allocation13], %s3768
        %s3770 = sand.u32 %s312, 1
        %s3771 = smul.addr %s3770, 128
        %s3772 = scalar_lea.vmem [#allocation12], %s3771
        // Predicated region
        $region73: #{tpu_custom_call.1} parent=55 // pred_check
          %p3773 = pneg %p294
        $region74: #{tpu_custom_call.1} parent=55 // pred_check_branch
          %3775 = sbr.rel (%p3773) target = $region76
        $region75: #{tpu_custom_call.1} parent=55 // pred_region
          %s3776 = smul.u32 32, %s40
          %3778 = vsyncadd %s3764, 0
          %s3779 = smul.addr %s39, 64
          %s3780 = sadd.s32 %s3776, %s3779
          %s3781 = smul.addr %s3780, 4
          %s3782 = scalar_lea.hbm %s9, %s3781
          %s3783 = sshll.u32 %s3767, 4
          %s3784 = int_to_ptr.vmem [resolvable:$true] %s3783
          %s3785 = sshll.u32 %s3782, 4
          %s3786 = int_to_ptr.hbm [resolvable:$true] %s3785
          %3791 = dma.vmem_to_hbm [thread:$0]  %s3784, 2048, %s3786, %s3764, 64, 64, 4
        $region76: #{tpu_custom_call.1} parent=55 // pred_fallthru
          _
        // Predicated region
        $region77: #{tpu_custom_call.1} parent=55 // pred_check
          %p3792 = pneg %p322
        $region78: #{tpu_custom_call.1} parent=55 // pred_check_branch
          %3794 = sbr.rel (%p3792) target = $region80
        $region79: #{tpu_custom_call.1} parent=55 // pred_region
          %s3795 = smul.u32 32, %s40
          %3797 = vsyncadd %s3769, 0
          %s3798 = smul.addr %s39, 64
          %s3799 = sadd.s32 %s3795, %s3798
          %s3800 = smul.addr %s3799, 4
          %s3801 = scalar_lea.hbm %s10, %s3800
          %s3802 = sshll.u32 %s3772, 4
          %s3803 = int_to_ptr.vmem [resolvable:$true] %s3802
          %s3804 = sshll.u32 %s3801, 4
          %s3805 = int_to_ptr.hbm [resolvable:$true] %s3804
          %3810 = dma.vmem_to_hbm [thread:$0]  %s3803, 2048, %s3805, %s3769, 64, 64, 4
        $region80: #{tpu_custom_call.1} parent=55 // pred_fallthru
          _
      $region56: #{tpu_custom_call.1} parent=5 // pred_fallthru
        _
      %p3811 = scmp.le.s32.totalorder 2, %s30
      // Predicated region
      $region81: #{tpu_custom_call.1} parent=5 // pred_check
        %p3812 = pneg %p3811
      $region82: #{tpu_custom_call.1} parent=5 // pred_check_branch
        %3814 = sbr.rel (%p3812) target = $region84
      $region83: #{tpu_custom_call.1} parent=5 // pred_region
        %s3815 = ssub.s32 %s30, 2
        // Predicated region
        $region85: #{tpu_custom_call.1} parent=83 // pred_check
          %p3816 = pneg %p300
        $region86: #{tpu_custom_call.1} parent=83 // pred_check_branch
          %3818 = sbr.rel (%p3816) target = $region88
        $region87: #{tpu_custom_call.1} parent=83 // pred_region
          %s3819 = sand.u32 %s285, 1
          %s3820 = scalar_lea.sflag [#allocation5], %s3819
          %s3821 = sand.u32 %s285, 1
          %s3822 = smul.addr %s3821, 128
          %s3823 = scalar_lea.vmem [#allocation11], %s3822
          %3825 = dma.done %s3820, 2048
        $region88: #{tpu_custom_call.1} parent=83 // pred_fallthru
          _
        // Predicated region
        $region89: #{tpu_custom_call.1} parent=83 // pred_check
          %p3826 = pneg %p328
        $region90: #{tpu_custom_call.1} parent=83 // pred_check_branch
          %3828 = sbr.rel (%p3826) target = $region92
        $region91: #{tpu_custom_call.1} parent=83 // pred_region
          %s3829 = sand.u32 %s313, 1
          %s3830 = scalar_lea.sflag [#allocation13], %s3829
          %s3831 = sand.u32 %s313, 1
          %s3832 = smul.addr %s3831, 128
          %s3833 = scalar_lea.vmem [#allocation12], %s3832
          %3835 = dma.done %s3830, 2048
        $region92: #{tpu_custom_call.1} parent=83 // pred_fallthru
          _
      $region84: #{tpu_custom_call.1} parent=5 // pred_fallthru
        _
    $region6: #{tpu_custom_call.1} parent=1 // loop_footer
      %s34 = sadd.s32 1, %s30
    $region7: #{tpu_custom_call.1} parent=1 // loop_footer_branch
      %29 = sbr.rel target = $region3
    $region8: #{tpu_custom_call.1} parent=1 // loop_exit
      _
    %3836 = vsyncpa [#allocation4], 1
    %s3837 = scalar_lea.sflag [#allocation4], 1
    %3838 = vsyncpa %s3837, 1
    %3839 = vsyncpa [#allocation7], 1
    %s3840 = scalar_lea.sflag [#allocation7], 1
    %3841 = vsyncpa %s3840, 1
    %3842 = vsyncpa [#allocation10], 1
    %3843 = vsyncpa [#allocation5], 1
    %s3844 = scalar_lea.sflag [#allocation5], 1
    %3845 = vsyncpa %s3844, 1
    %3846 = vsyncpa [#allocation13], 1
    %s3847 = scalar_lea.sflag [#allocation13], 1
    %3848 = vsyncpa %s3847, 1

</llo_original>
